<compile_context>
chip_gen: v6e
topology: v6e:2x2x1
jax: 0.10.0
libtpu: 0.0.40
codegen_flags: <defaults>
</compile_context>

<pallas_src>
import functools

import jax
import jax.numpy as jnp
import numpy as np
from jax import lax
from jax.experimental import pallas as pl
from jax.experimental.pallas import tpu as pltpu


def _round_up(x, m):
    return (x + m - 1) // m * m


def _lane_roll(x, shift, size):
    """jnp.roll(x, shift, axis=-1) via pltpu.roll (which needs shift >= 0)."""
    s = shift % size
    if s == 0:
        return x
    return pltpu.roll(x, s, axis=1)


# ---------------------------------------------------------------------------
# Kernel: one fused "basic_op" repeat (its own BN normalize is deferred).
# One batch element per grid step.
# ---------------------------------------------------------------------------
def _conv_block_kernel(zin_ref, scale_ref, shift_ref, lmask_ref,
                       wspa_ref, wspe_ref, wpw_ref,
                       zout_ref, stats_ref, out1_ref,
                       *, kh, kw, kd, ph, pw, pd, Wp, C, D):
    Fp = zin_ref.shape[-1]
    RC = 8                                  # sublane chunk (one vreg row set)

    # The spectral conv's D-halo lives only in this scratch; keep its 2*pd halo
    # rows zero (they are never written by the tap loop, and must not be NaN).
    if pd:
        zrows = jnp.zeros((pd, Fp), jnp.float32)
        out1_ref[0:pd, :] = zrows
        out1_ref[pd + D:pd + D + pd, :] = zrows

    # ---- pass 1: prev-BN affine -> lane mask -> LeakyReLU -> (1,kh,kw) dw conv
    # Taps accumulate in vregs per <=8-row chunk; one scratch store per chunk.
    for r0 in range(0, D, RC):
        rc = min(RC, D - r0)
        a = (zin_ref[0, r0:r0 + rc, :] * scale_ref[...] + shift_ref[...]) \
            * lmask_ref[...]
        a = jnp.where(a > 0, a, jnp.float32(0.2) * a)   # leaky(0) == 0 padding
        acc = None
        for i in range(kh):
            for j in range(kw):
                off = ((i - ph) * Wp + (j - pw)) * C
                t = _lane_roll(a, -off, Fp)             # wrap lands on halo/pad
                contrib = t * wspa_ref[i * kw + j:i * kw + j + 1, :]
                acc = contrib if acc is None else acc + contrib
        out1_ref[pd + r0:pd + r0 + rc, :] = acc

    # ---- pass 2: (kd,1,1) dw conv -> 1x1x1 pointwise -> store + BN partials
    rs = jnp.zeros((1, Fp), jnp.float32)
    rq = jnp.zeros((1, Fp), jnp.float32)
    for r0 in range(0, D, RC):
        rc = min(RC, D - r0)
        # spectral depthwise conv: static sublane-shifted scratch reads
        out2 = out1_ref[r0:r0 + rc, :] * wspe_ref[0:1, :]
        for k in range(1, kd):
            out2 = out2 + out1_ref[r0 + k:r0 + k + rc, :] * wspe_ref[k:k + 1, :]
        # pointwise CxC mix as (2C-1) short lane rolls with per-lane delta
        # weights (stays lane-dense on the VPU; fine at small C).
        # TODO(synk): for C >= ~16, repack to a C-on-lanes tile and do this
        #             channel mix as an MXU jnp.dot instead of O(C) rolls.
        z = out2 * wpw_ref[C - 1:C, :]
        for delta in range(1, C):
            z = z + _lane_roll(out2, delta, Fp) * wpw_ref[C - 1 + delta:C + delta, :]
            z = z + _lane_roll(out2, -delta, Fp) * wpw_ref[C - 1 - delta:C - delta, :]
        zout_ref[0, r0:r0 + rc, :] = z
        # lane-dense BN partials; per-channel reduce finishes in the wrapper
        zm = z * lmask_ref[...]
        rs = rs + jnp.sum(zm, axis=0, keepdims=True)
        rq = rq + jnp.sum(z * zm, axis=0, keepdims=True)
    stats_ref[0] = jnp.concatenate([rs, rq], axis=0)


# ---------------------------------------------------------------------------
# pallas_call wrapper
# ---------------------------------------------------------------------------
def _conv_block(z, scale, shift, lane_mask, wspa, wspe, wpw, *,
                kh, kw, kd, ph, pw, pd, Wp, C, D):
    N, _, Fpad = z.shape
    Dp = D + 2 * pd
    kernel = functools.partial(_conv_block_kernel, kh=kh, kw=kw, kd=kd,
                               ph=ph, pw=pw, pd=pd, Wp=Wp, C=C, D=D)
    bc2 = lambda n: (0, 0)
    # TODO(synk): constant-index operands (scale/shift/mask/weights) could be
    #             single-buffered (pipeline_mode=pl.Buffered(1)) to save VMEM
    #             on v7x; left default for portability.
    # TODO(synk): for production D/H/W add a "parallel" D-tile grid axis (with
    #             a (kd-1) halo) so v7x's 2 TensorCores pipeline within a batch
    #             element and the activation block fits 64 MiB/TC VMEM.
    return pl.pallas_call(
        kernel,
        grid=(N,),
        in_specs=[
            pl.BlockSpec((1, D, Fpad), lambda n: (n, 0, 0)),     # zin
            pl.BlockSpec((1, Fpad), bc2),                        # prev BN scale
            pl.BlockSpec((1, Fpad), bc2),                        # prev BN shift
            pl.BlockSpec((1, Fpad), bc2),                        # H/W lane mask
            pl.BlockSpec((kh * kw, Fpad), bc2),                  # spatial dw w
            pl.BlockSpec((kd, Fpad), bc2),                       # spectral dw w
            pl.BlockSpec((2 * C - 1, Fpad), bc2),                # pointwise w
        ],
        out_specs=(
            pl.BlockSpec((1, D, Fpad), lambda n: (n, 0, 0)),     # raw conv out
            pl.BlockSpec((1, 2, Fpad), lambda n: (n, 0, 0)),     # BN partials
        ),
        out_shape=(
            jax.ShapeDtypeStruct((N, D, Fpad), jnp.float32),
            jax.ShapeDtypeStruct((N, 2, Fpad), jnp.float32),
        ),
        scratch_shapes=[pltpu.VMEM((Dp, Fpad), jnp.float32)],
        compiler_params=pltpu.CompilerParams(
            dimension_semantics=("parallel",),        # split batch over TCs
            vmem_limit_bytes=32 * 1024 * 1024),
    )(z, scale, shift, lane_mask, wspa, wspe, wpw)


# ---------------------------------------------------------------------------
# One-time host-side packing (hoisted OUT of the jit'd forward)
# ---------------------------------------------------------------------------
def _pack_input(x_ndhwc, ph, pw, Fpad):
    N, D, H, W, C = x_ndhwc.shape
    F = (H + 2 * ph) * (W + 2 * pw) * C
    xp = jnp.pad(x_ndhwc, ((0, 0), (0, 0), (ph, ph), (pw, pw), (0, 0)))
    z = xp.reshape(N, D, F).astype(jnp.float32)
    return jnp.pad(z, ((0, 0), (0, 0), (0, Fpad - F)))


def _build_lane_mask(H, W, C, ph, pw, Fpad):
    Hp, Wp = H + 2 * ph, W + 2 * pw
    F = Hp * Wp * C
    h_ok = (jnp.arange(Hp) >= ph) & (jnp.arange(Hp) < ph + H)
    w_ok = (jnp.arange(Wp) >= pw) & (jnp.arange(Wp) < pw + W)
    lane_ok = jnp.repeat((h_ok[:, None] & w_ok[None, :]).reshape(-1), C)
    lane_ok = jnp.pad(lane_ok, (0, Fpad - F))
    return lane_ok.astype(jnp.float32).reshape(1, Fpad)


def _flatten_weights(w_spa, w_spe, w_pw, Hp, Wp, C, Fpad):
    kh, kw = w_spa.shape[1], w_spa.shape[2]
    npix = Hp * Wp
    F = npix * C
    wspa = jnp.tile(w_spa.reshape(C, kh * kw).T, (1, npix))           # (kh*kw,F)
    wspa = jnp.pad(wspa, ((0, 0), (0, Fpad - F))).astype(jnp.float32)
    wspe = jnp.tile(w_spe.T, (1, npix))                               # (kd, F)
    wspe = jnp.pad(wspe, ((0, 0), (0, Fpad - F))).astype(jnp.float32)
    co = jnp.arange(C)
    rows = []
    for delta in range(-(C - 1), C):
        ci = co - delta
        valid = (ci >= 0) & (ci < C)
        rows.append(jnp.where(valid, w_pw[jnp.clip(ci, 0, C - 1), co], 0.0))
    wpw = jnp.tile(jnp.stack(rows), (1, npix))                        # (2C-1, F)
    wpw = jnp.pad(wpw, ((0, 0), (0, Fpad - F))).astype(jnp.float32)
    return wspa, wspe, wpw


def pack_params(params, *, H, W, C, spa_s, spe_s):
    """One-time layout plumbing (weights / masks) done once at init."""
    ph = pw = spa_s // 2
    Hp, Wp = H + 2 * ph, W + 2 * pw
    F = Hp * Wp * C
    Fpad = _round_up(F, 128)
    lane_mask = _build_lane_mask(H, W, C, ph, pw, Fpad)
    packed = []
    for p in params:
        wspa, wspe, wpw = _flatten_weights(p["w_spa"], p["w_spe"], p["w_pw"],
                                           Hp, Wp, C, Fpad)
        packed.append(dict(wspa=wspa, wspe=wspe, wpw=wpw,
                           gamma=p["gamma"].astype(jnp.float32),
                           beta=p["beta"].astype(jnp.float32)))
    return packed, lane_mask


# ---------------------------------------------------------------------------
# Full forward (all repeats)
# ---------------------------------------------------------------------------
def leaky_sep_conv_forward(x_ndhwc, packed, lane_mask, *, spa_s, spe_s,
                           eps=1e-5):
    N, D, H, W, C = x_ndhwc.shape
    kh = kw = spa_s
    kd = spe_s
    ph = pw = spa_s // 2
    pd = spe_s // 2
    Hp, Wp = H + 2 * ph, W + 2 * pw
    npix = Hp * Wp
    F = npix * C
    Fpad = _round_up(F, 128)

    # TODO(synk): on v6e/v7x activations/weights could be bf16 (stats in f32);
    #             kept f32 to hold the 5e-3 check and for v5e's f32-only VPU.
    z = _pack_input(x_ndhwc, ph, pw, Fpad)              # (N, D, Fpad)
    scale = jnp.ones((1, Fpad), jnp.float32)            # identity affine (rep0)
    shift = jnp.zeros((1, Fpad), jnp.float32)
    count = float(N * D * H * W)                        # per-channel count

    sc_c = sh_c = None
    for r, p in enumerate(packed):
        z, stats = _conv_block(z, scale, shift, lane_mask,
                               p["wspa"], p["wspe"], p["wpw"],
                               kh=kh, kw=kw, kd=kd, ph=ph, pw=pw, pd=pd,
                               Wp=Wp, C=C, D=D)
        # Finish BatchNorm on tiny lane-dense partials (training-mode batch
        # stats, biased var); fold gamma/beta into a per-channel affine that the
        # NEXT kernel (or the final XLA crop) applies.
        s = jnp.sum(stats[:, 0, :F].reshape(N, npix, C), axis=(0, 1))
        q = jnp.sum(stats[:, 1, :F].reshape(N, npix, C), axis=(0, 1))
        mean = s / count
        var = jnp.maximum(q / count - mean * mean, 0.0)   # guard cancellation
        sc_c = p["gamma"] * lax.rsqrt(var + eps)
        sh_c = p["beta"] - mean * sc_c
        if r + 1 < len(packed):
            scale = jnp.pad(jnp.tile(sc_c, npix), (0, Fpad - F)).reshape(1, Fpad)
            shift = jnp.pad(jnp.tile(sh_c, npix), (0, Fpad - F)).reshape(1, Fpad)

    # Last repeat's affine fuses with the crop/reshape in XLA (no extra pass).
    y = z[:, :, :F].reshape(N, D, Hp, Wp, C)[:, :, ph:ph + H, pw:pw + W, :]
    return y * sc_c[None, None, None, None, :] + sh_c[None, None, None, None, :]


def init_params(key, c_in, c_out, spa_s, spe_s, repeats=2, affine=True):
    """Deterministic synthetic parameters matching the PyTorch module shapes."""
    params = []
    for _ in range(repeats):
        key, k1, k2, k3, k4, k5 = jax.random.split(key, 6)
        w_spa = 0.3 * jax.random.normal(k1, (c_in, spa_s, spa_s), jnp.float32)
        w_spe = 0.3 * jax.random.normal(k2, (c_in, spe_s), jnp.float32)
        w_pw = 0.3 * jax.random.normal(k3, (c_in, c_out), jnp.float32)
        if affine:
            gamma = 1.0 + 0.1 * jax.random.normal(k4, (c_out,), jnp.float32)
            beta = 0.1 * jax.random.normal(k5, (c_out,), jnp.float32)
        else:
            gamma = jnp.ones((c_out,), jnp.float32)
            beta = jnp.zeros((c_out,), jnp.float32)
        params.append(dict(w_spa=w_spa, w_spe=w_spe, w_pw=w_pw,
                           gamma=gamma, beta=beta))
    return params


# ----------------------- pure-JAX reference (NCDHW, like PyTorch) -----------
def _ref_block(x_ncdhw, p, spa_s, spe_s, eps=1e-5):
    c = x_ncdhw.shape[1]
    dn = ("NCDHW", "OIDHW", "NCDHW")
    y = jnp.where(x_ncdhw > 0, x_ncdhw, 0.2 * x_ncdhw)
    w_spa = p["w_spa"][:, None, None, :, :]
    y = lax.conv_general_dilated(
        y, w_spa, (1, 1, 1),
        [(0, 0), (spa_s // 2, spa_s // 2), (spa_s // 2, spa_s // 2)],
        feature_group_count=c, dimension_numbers=dn,
        precision=lax.Precision.HIGHEST)
    w_spe = p["w_spe"][:, None, :, None, None]
    y = lax.conv_general_dilated(
        y, w_spe, (1, 1, 1),
        [(spe_s // 2, spe_s // 2), (0, 0), (0, 0)],
        feature_group_count=c, dimension_numbers=dn,
        precision=lax.Precision.HIGHEST)
    w_pw = p["w_pw"].T[:, :, None, None, None]
    y = lax.conv_general_dilated(
        y, w_pw, (1, 1, 1), [(0, 0), (0, 0), (0, 0)],
        dimension_numbers=dn, precision=lax.Precision.HIGHEST)
    mean = jnp.mean(y, axis=(0, 2, 3, 4), keepdims=True)
    var = jnp.mean((y - mean) ** 2, axis=(0, 2, 3, 4), keepdims=True)
    yn = (y - mean) * lax.rsqrt(var + eps)
    return (yn * p["gamma"][None, :, None, None, None]
            + p["beta"][None, :, None, None, None])


if __name__ == "__main__":
    # NCDHW = (2, 4, 8, 16, 16), spa_s = spe_s = 3, c_in == c_out, repeats = 2.
    N, C, D, H, W = 2, 4, 8, 16, 16
    spa_s, spe_s = 3, 3

    key = jax.random.PRNGKey(0)
    kx, kp = jax.random.split(key)
    x_ncdhw = jax.random.normal(kx, (N, C, D, H, W), jnp.float32)
    params = init_params(kp, C, C, spa_s, spe_s, repeats=2, affine=True)

    # One-time packing (outside jit) + Pallas path (channels-last internally).
    packed, lane_mask = pack_params(params, H=H, W=W, C=C,
                                    spa_s=spa_s, spe_s=spe_s)
    x_ndhwc = jnp.transpose(x_ncdhw, (0, 2, 3, 4, 1))
    fwd = jax.jit(functools.partial(leaky_sep_conv_forward,
                                    spa_s=spa_s, spe_s=spe_s))
    out = jax.block_until_ready(fwd(x_ndhwc, packed, lane_mask))
    assert out.shape == (N, D, H, W, C)
    assert bool(jnp.all(jnp.isfinite(out)))

    # Reference path (PyTorch NCDHW semantics).
    ref = x_ncdhw
    for p in params:
        ref = _ref_block(ref, p, spa_s, spe_s)
    ref_ndhwc = jnp.transpose(ref, (0, 2, 3, 4, 1))

    np.testing.assert_allclose(np.asarray(out), np.asarray(ref_ndhwc),
                               rtol=5e-3, atol=1e-3)
    print("KERNEL_OK")
</pallas_src>

<mosaic_0001>
module attributes {stable_mosaic.version = 11 : i64} {
  func.func @_conv_block_kernel(%arg0: i32, %arg1: memref<1x8x1408xf32, #tpu.memory_space<vmem>>, %arg2: memref<1x1408xf32, #tpu.memory_space<vmem>>, %arg3: memref<1x1408xf32, #tpu.memory_space<vmem>>, %arg4: memref<1x1408xf32, #tpu.memory_space<vmem>>, %arg5: memref<9x1408xf32, #tpu.memory_space<vmem>>, %arg6: memref<3x1408xf32, #tpu.memory_space<vmem>>, %arg7: memref<7x1408xf32, #tpu.memory_space<vmem>>, %arg8: memref<1x8x1408xf32, #tpu.memory_space<vmem>>, %arg9: memref<1x2x1408xf32, #tpu.memory_space<vmem>>, %arg10: memref<10x1408xf32, #tpu.memory_space<vmem>>) attributes {dimension_semantics = [#tpu.dimension_semantics<parallel>], iteration_bounds = array<i64: 2>, scalar_prefetch = 0 : i64, scratch_operands = 1 : i64, tpu.core_type = #tpu.core_type<tc>, window_params = [{transform_indices = @transform_0, window_bounds = array<i64: 1, 8, 1408>}, {pipeline_mode = #tpu.pipeline_mode<synchronous>, transform_indices = @transform_1, window_bounds = array<i64: 1, 1408>}, {pipeline_mode = #tpu.pipeline_mode<synchronous>, transform_indices = @transform_2, window_bounds = array<i64: 1, 1408>}, {pipeline_mode = #tpu.pipeline_mode<synchronous>, transform_indices = @transform_3, window_bounds = array<i64: 1, 1408>}, {pipeline_mode = #tpu.pipeline_mode<synchronous>, transform_indices = @transform_4, window_bounds = array<i64: 9, 1408>}, {pipeline_mode = #tpu.pipeline_mode<synchronous>, transform_indices = @transform_5, window_bounds = array<i64: 3, 1408>}, {pipeline_mode = #tpu.pipeline_mode<synchronous>, transform_indices = @transform_6, window_bounds = array<i64: 7, 1408>}, {transform_indices = @transform_7, window_bounds = array<i64: 1, 8, 1408>}, {transform_indices = @transform_8, window_bounds = array<i64: 1, 2, 1408>}]} {
    %cst = arith.constant 0.000000e+00 : f32
    %0 = vector.broadcast %cst : f32 to vector<1x1408xf32>
    %c0 = arith.constant 0 : index
    %c0_0 = arith.constant 0 : index
    %1 = vector.load %arg10[%c0, %c0_0] : memref<10x1408xf32, #tpu.memory_space<vmem>>, vector<1x1408xf32>
    tpu.vector_store %arg10[%c0, %c0_0], %0 {strides = array<i32>} : memref<10x1408xf32, #tpu.memory_space<vmem>>, vector<1x1408xf32>,
    %c9 = arith.constant 9 : index
    %c0_1 = arith.constant 0 : index
    %2 = vector.load %arg10[%c9, %c0_1] : memref<10x1408xf32, #tpu.memory_space<vmem>>, vector<1x1408xf32>
    tpu.vector_store %arg10[%c9, %c0_1], %0 {strides = array<i32>} : memref<10x1408xf32, #tpu.memory_space<vmem>>, vector<1x1408xf32>,
    %c0_2 = arith.constant 0 : index
    %c0_3 = arith.constant 0 : index
    %c0_4 = arith.constant 0 : index
    %3 = vector.load %arg1[%c0_2, %c0_3, %c0_4] : memref<1x8x1408xf32, #tpu.memory_space<vmem>>, vector<1x8x1408xf32>
    %4 = vector.shape_cast %3 : vector<1x8x1408xf32> to vector<8x1408xf32>
    %c0_5 = arith.constant 0 : index
    %c0_6 = arith.constant 0 : index
    %5 = vector.load %arg2[%c0_5, %c0_6] : memref<1x1408xf32, #tpu.memory_space<vmem>>, vector<1x1408xf32>
    %6 = vector.broadcast %5 : vector<1x1408xf32> to vector<8x1408xf32>
    %7 = arith.mulf %4, %6 : vector<8x1408xf32>
    %c0_7 = arith.constant 0 : index
    %c0_8 = arith.constant 0 : index
    %8 = vector.load %arg3[%c0_7, %c0_8] : memref<1x1408xf32, #tpu.memory_space<vmem>>, vector<1x1408xf32>
    %9 = vector.broadcast %8 : vector<1x1408xf32> to vector<8x1408xf32>
    %10 = arith.addf %7, %9 : vector<8x1408xf32>
    %c0_9 = arith.constant 0 : index
    %c0_10 = arith.constant 0 : index
    %11 = vector.load %arg4[%c0_9, %c0_10] : memref<1x1408xf32, #tpu.memory_space<vmem>>, vector<1x1408xf32>
    %12 = vector.broadcast %11 : vector<1x1408xf32> to vector<8x1408xf32>
    %13 = arith.mulf %10, %12 : vector<8x1408xf32>
    %cst_11 = arith.constant 0.000000e+00 : f32
    %14 = vector.broadcast %cst_11 : f32 to vector<8x1408xf32>
    %15 = arith.cmpf ogt, %13, %14 : vector<8x1408xf32>
    %cst_12 = arith.constant 2.000000e-01 : f32
    %16 = vector.broadcast %cst_12 : f32 to vector<8x1408xf32>
    %17 = arith.mulf %16, %13 : vector<8x1408xf32>
    %18 = arith.select %15, %13, %17 : vector<8x1408xi1>, vector<8x1408xf32>
    %c76_i32 = arith.constant 76 : i32
    %19 = tpu.dynamic_rotate %18 by %c76_i32 dim 1 : vector<8x1408xf32>, i32 -> vector<8x1408xf32>
    %c0_13 = arith.constant 0 : index
    %c0_14 = arith.constant 0 : index
    %20 = vector.load %arg5[%c0_13, %c0_14] : memref<9x1408xf32, #tpu.memory_space<vmem>>, vector<1x1408xf32>
    %21 = vector.broadcast %20 : vector<1x1408xf32> to vector<8x1408xf32>
    %22 = arith.mulf %19, %21 : vector<8x1408xf32>
    %c72_i32 = arith.constant 72 : i32
    %23 = tpu.dynamic_rotate %18 by %c72_i32 dim 1 : vector<8x1408xf32>, i32 -> vector<8x1408xf32>
    %c1 = arith.constant 1 : index
    %c0_15 = arith.constant 0 : index
    %24 = vector.load %arg5[%c1, %c0_15] : memref<9x1408xf32, #tpu.memory_space<vmem>>, vector<1x1408xf32>
    %25 = vector.broadcast %24 : vector<1x1408xf32> to vector<8x1408xf32>
    %26 = arith.mulf %23, %25 : vector<8x1408xf32>
    %27 = arith.addf %22, %26 : vector<8x1408xf32>
    %c68_i32 = arith.constant 68 : i32
    %28 = tpu.dynamic_rotate %18 by %c68_i32 dim 1 : vector<8x1408xf32>, i32 -> vector<8x1408xf32>
    %c2 = arith.constant 2 : index
    %c0_16 = arith.constant 0 : index
    %29 = vector.load %arg5[%c2, %c0_16] : memref<9x1408xf32, #tpu.memory_space<vmem>>, vector<1x1408xf32>
    %30 = vector.broadcast %29 : vector<1x1408xf32> to vector<8x1408xf32>
    %31 = arith.mulf %28, %30 : vector<8x1408xf32>
    %32 = arith.addf %27, %31 : vector<8x1408xf32>
    %c4_i32 = arith.constant 4 : i32
    %33 = tpu.dynamic_rotate %18 by %c4_i32 dim 1 : vector<8x1408xf32>, i32 -> vector<8x1408xf32>
    %c3 = arith.constant 3 : index
    %c0_17 = arith.constant 0 : index
    %34 = vector.load %arg5[%c3, %c0_17] : memref<9x1408xf32, #tpu.memory_space<vmem>>, vector<1x1408xf32>
    %35 = vector.broadcast %34 : vector<1x1408xf32> to vector<8x1408xf32>
    %36 = arith.mulf %33, %35 : vector<8x1408xf32>
    %37 = arith.addf %32, %36 : vector<8x1408xf32>
    %c4 = arith.constant 4 : index
    %c0_18 = arith.constant 0 : index
    %38 = vector.load %arg5[%c4, %c0_18] : memref<9x1408xf32, #tpu.memory_space<vmem>>, vector<1x1408xf32>
    %39 = vector.broadcast %38 : vector<1x1408xf32> to vector<8x1408xf32>
    %40 = arith.mulf %18, %39 : vector<8x1408xf32>
    %41 = arith.addf %37, %40 : vector<8x1408xf32>
    %c1404_i32 = arith.constant 1404 : i32
    %42 = tpu.dynamic_rotate %18 by %c1404_i32 dim 1 : vector<8x1408xf32>, i32 -> vector<8x1408xf32>
    %c5 = arith.constant 5 : index
    %c0_19 = arith.constant 0 : index
    %43 = vector.load %arg5[%c5, %c0_19] : memref<9x1408xf32, #tpu.memory_space<vmem>>, vector<1x1408xf32>
    %44 = vector.broadcast %43 : vector<1x1408xf32> to vector<8x1408xf32>
    %45 = arith.mulf %42, %44 : vector<8x1408xf32>
    %46 = arith.addf %41, %45 : vector<8x1408xf32>
    %c1340_i32 = arith.constant 1340 : i32
    %47 = tpu.dynamic_rotate %18 by %c1340_i32 dim 1 : vector<8x1408xf32>, i32 -> vector<8x1408xf32>
    %c6 = arith.constant 6 : index
    %c0_20 = arith.constant 0 : index
    %48 = vector.load %arg5[%c6, %c0_20] : memref<9x1408xf32, #tpu.memory_space<vmem>>, vector<1x1408xf32>
    %49 = vector.broadcast %48 : vector<1x1408xf32> to vector<8x1408xf32>
    %50 = arith.mulf %47, %49 : vector<8x1408xf32>
    %51 = arith.addf %46, %50 : vector<8x1408xf32>
    %c1336_i32 = arith.constant 1336 : i32
    %52 = tpu.dynamic_rotate %18 by %c1336_i32 dim 1 : vector<8x1408xf32>, i32 -> vector<8x1408xf32>
    %c7 = arith.constant 7 : index
    %c0_21 = arith.constant 0 : index
    %53 = vector.load %arg5[%c7, %c0_21] : memref<9x1408xf32, #tpu.memory_space<vmem>>, vector<1x1408xf32>
    %54 = vector.broadcast %53 : vector<1x1408xf32> to vector<8x1408xf32>
    %55 = arith.mulf %52, %54 : vector<8x1408xf32>
    %56 = arith.addf %51, %55 : vector<8x1408xf32>
    %c1332_i32 = arith.constant 1332 : i32
    %57 = tpu.dynamic_rotate %18 by %c1332_i32 dim 1 : vector<8x1408xf32>, i32 -> vector<8x1408xf32>
    %c8 = arith.constant 8 : index
    %c0_22 = arith.constant 0 : index
    %58 = vector.load %arg5[%c8, %c0_22] : memref<9x1408xf32, #tpu.memory_space<vmem>>, vector<1x1408xf32>
    %59 = vector.broadcast %58 : vector<1x1408xf32> to vector<8x1408xf32>
    %60 = arith.mulf %57, %59 : vector<8x1408xf32>
    %61 = arith.addf %56, %60 : vector<8x1408xf32>
    %c1_23 = arith.constant 1 : index
    %c0_24 = arith.constant 0 : index
    %62 = vector.load %arg10[%c1_23, %c0_24] : memref<10x1408xf32, #tpu.memory_space<vmem>>, vector<8x1408xf32>
    tpu.vector_store %arg10[%c1_23, %c0_24], %61 {strides = array<i32>} : memref<10x1408xf32, #tpu.memory_space<vmem>>, vector<8x1408xf32>,
    %cst_25 = arith.constant 0.000000e+00 : f32
    %63 = vector.broadcast %cst_25 : f32 to vector<1x1408xf32>
    %cst_26 = arith.constant 0.000000e+00 : f32
    %64 = vector.broadcast %cst_26 : f32 to vector<1x1408xf32>
    %c0_27 = arith.constant 0 : index
    %c0_28 = arith.constant 0 : index
    %65 = vector.load %arg10[%c0_27, %c0_28] : memref<10x1408xf32, #tpu.memory_space<vmem>>, vector<8x1408xf32>
    %c0_29 = arith.constant 0 : index
    %c0_30 = arith.constant 0 : index
    %66 = vector.load %arg6[%c0_29, %c0_30] : memref<3x1408xf32, #tpu.memory_space<vmem>>, vector<1x1408xf32>
    %67 = vector.broadcast %66 : vector<1x1408xf32> to vector<8x1408xf32>
    %68 = arith.mulf %65, %67 : vector<8x1408xf32>
    %c1_31 = arith.constant 1 : index
    %c0_32 = arith.constant 0 : index
    %69 = vector.load %arg10[%c1_31, %c0_32] : memref<10x1408xf32, #tpu.memory_space<vmem>>, vector<8x1408xf32>
    %c1_33 = arith.constant 1 : index
    %c0_34 = arith.constant 0 : index
    %70 = vector.load %arg6[%c1_33, %c0_34] : memref<3x1408xf32, #tpu.memory_space<vmem>>, vector<1x1408xf32>
    %71 = vector.broadcast %70 : vector<1x1408xf32> to vector<8x1408xf32>
    %72 = arith.mulf %69, %71 : vector<8x1408xf32>
    %73 = arith.addf %68, %72 : vector<8x1408xf32>
    %c2_35 = arith.constant 2 : index
    %c0_36 = arith.constant 0 : index
    %74 = vector.load %arg10[%c2_35, %c0_36] : memref<10x1408xf32, #tpu.memory_space<vmem>>, vector<8x1408xf32>
    %c2_37 = arith.constant 2 : index
    %c0_38 = arith.constant 0 : index
    %75 = vector.load %arg6[%c2_37, %c0_38] : memref<3x1408xf32, #tpu.memory_space<vmem>>, vector<1x1408xf32>
    %76 = vector.broadcast %75 : vector<1x1408xf32> to vector<8x1408xf32>
    %77 = arith.mulf %74, %76 : vector<8x1408xf32>
    %78 = arith.addf %73, %77 : vector<8x1408xf32>
    %c3_39 = arith.constant 3 : index
    %c0_40 = arith.constant 0 : index
    %79 = vector.load %arg7[%c3_39, %c0_40] : memref<7x1408xf32, #tpu.memory_space<vmem>>, vector<1x1408xf32>
    %80 = vector.broadcast %79 : vector<1x1408xf32> to vector<8x1408xf32>
    %81 = arith.mulf %78, %80 : vector<8x1408xf32>
    %c1_i32 = arith.constant 1 : i32
    %82 = tpu.dynamic_rotate %78 by %c1_i32 dim 1 : vector<8x1408xf32>, i32 -> vector<8x1408xf32>
    %c4_41 = arith.constant 4 : index
    %c0_42 = arith.constant 0 : index
    %83 = vector.load %arg7[%c4_41, %c0_42] : memref<7x1408xf32, #tpu.memory_space<vmem>>, vector<1x1408xf32>
    %84 = vector.broadcast %83 : vector<1x1408xf32> to vector<8x1408xf32>
    %85 = arith.mulf %82, %84 : vector<8x1408xf32>
    %86 = arith.addf %81, %85 : vector<8x1408xf32>
    %c1407_i32 = arith.constant 1407 : i32
    %87 = tpu.dynamic_rotate %78 by %c1407_i32 dim 1 : vector<8x1408xf32>, i32 -> vector<8x1408xf32>
    %c2_43 = arith.constant 2 : index
    %c0_44 = arith.constant 0 : index
    %88 = vector.load %arg7[%c2_43, %c0_44] : memref<7x1408xf32, #tpu.memory_space<vmem>>, vector<1x1408xf32>
    %89 = vector.broadcast %88 : vector<1x1408xf32> to vector<8x1408xf32>
    %90 = arith.mulf %87, %89 : vector<8x1408xf32>
    %91 = arith.addf %86, %90 : vector<8x1408xf32>
    %c2_i32 = arith.constant 2 : i32
    %92 = tpu.dynamic_rotate %78 by %c2_i32 dim 1 : vector<8x1408xf32>, i32 -> vector<8x1408xf32>
    %c5_45 = arith.constant 5 : index
    %c0_46 = arith.constant 0 : index
    %93 = vector.load %arg7[%c5_45, %c0_46] : memref<7x1408xf32, #tpu.memory_space<vmem>>, vector<1x1408xf32>
    %94 = vector.broadcast %93 : vector<1x1408xf32> to vector<8x1408xf32>
    %95 = arith.mulf %92, %94 : vector<8x1408xf32>
    %96 = arith.addf %91, %95 : vector<8x1408xf32>
    %c1406_i32 = arith.constant 1406 : i32
    %97 = tpu.dynamic_rotate %78 by %c1406_i32 dim 1 : vector<8x1408xf32>, i32 -> vector<8x1408xf32>
    %c1_47 = arith.constant 1 : index
    %c0_48 = arith.constant 0 : index
    %98 = vector.load %arg7[%c1_47, %c0_48] : memref<7x1408xf32, #tpu.memory_space<vmem>>, vector<1x1408xf32>
    %99 = vector.broadcast %98 : vector<1x1408xf32> to vector<8x1408xf32>
    %100 = arith.mulf %97, %99 : vector<8x1408xf32>
    %101 = arith.addf %96, %100 : vector<8x1408xf32>
    %c3_i32 = arith.constant 3 : i32
    %102 = tpu.dynamic_rotate %78 by %c3_i32 dim 1 : vector<8x1408xf32>, i32 -> vector<8x1408xf32>
    %c6_49 = arith.constant 6 : index
    %c0_50 = arith.constant 0 : index
    %103 = vector.load %arg7[%c6_49, %c0_50] : memref<7x1408xf32, #tpu.memory_space<vmem>>, vector<1x1408xf32>
    %104 = vector.broadcast %103 : vector<1x1408xf32> to vector<8x1408xf32>
    %105 = arith.mulf %102, %104 : vector<8x1408xf32>
    %106 = arith.addf %101, %105 : vector<8x1408xf32>
    %c1405_i32 = arith.constant 1405 : i32
    %107 = tpu.dynamic_rotate %78 by %c1405_i32 dim 1 : vector<8x1408xf32>, i32 -> vector<8x1408xf32>
    %c0_51 = arith.constant 0 : index
    %c0_52 = arith.constant 0 : index
    %108 = vector.load %arg7[%c0_51, %c0_52] : memref<7x1408xf32, #tpu.memory_space<vmem>>, vector<1x1408xf32>
    %109 = vector.broadcast %108 : vector<1x1408xf32> to vector<8x1408xf32>
    %110 = arith.mulf %107, %109 : vector<8x1408xf32>
    %111 = arith.addf %106, %110 : vector<8x1408xf32>
    %c0_53 = arith.constant 0 : index
    %c0_54 = arith.constant 0 : index
    %c0_55 = arith.constant 0 : index
    %112 = vector.load %arg8[%c0_53, %c0_54, %c0_55] : memref<1x8x1408xf32, #tpu.memory_space<vmem>>, vector<1x8x1408xf32>
    %113 = vector.shape_cast %112 : vector<1x8x1408xf32> to vector<8x1408xf32>
    %114 = vector.shape_cast %111 : vector<8x1408xf32> to vector<1x8x1408xf32>
    tpu.vector_store %arg8[%c0_53, %c0_54, %c0_55], %114 {strides = array<i32>} : memref<1x8x1408xf32, #tpu.memory_space<vmem>>, vector<1x8x1408xf32>,
    %c0_56 = arith.constant 0 : index
    %c0_57 = arith.constant 0 : index
    %115 = vector.load %arg4[%c0_56, %c0_57] : memref<1x1408xf32, #tpu.memory_space<vmem>>, vector<1x1408xf32>
    %116 = vector.broadcast %115 : vector<1x1408xf32> to vector<8x1408xf32>
    %117 = arith.mulf %111, %116 : vector<8x1408xf32>
    %cst_58 = arith.constant dense<0.000000e+00> : vector<1408xf32>
    %118 = vector.multi_reduction <add>, %117, %cst_58 [0] : vector<8x1408xf32> to vector<1408xf32>
    %119 = vector.shape_cast %118 : vector<1408xf32> to vector<1x1408xf32>
    %120 = arith.addf %63, %119 : vector<1x1408xf32>
    %121 = arith.mulf %111, %117 : vector<8x1408xf32>
    %cst_59 = arith.constant dense<0.000000e+00> : vector<1408xf32>
    %122 = vector.multi_reduction <add>, %121, %cst_59 [0] : vector<8x1408xf32> to vector<1408xf32>
    %123 = vector.shape_cast %122 : vector<1408xf32> to vector<1x1408xf32>
    %124 = arith.addf %64, %123 : vector<1x1408xf32>
    %125 = tpu.concatenate %120, %124 in 0 : vector<1x1408xf32>, vector<1x1408xf32> -> vector<2x1408xf32>
    %c0_60 = arith.constant 0 : index
    %c0_61 = arith.constant 0 : index
    %c0_62 = arith.constant 0 : index
    %126 = vector.load %arg9[%c0_60, %c0_61, %c0_62] : memref<1x2x1408xf32, #tpu.memory_space<vmem>>, vector<1x2x1408xf32>
    %127 = vector.shape_cast %126 : vector<1x2x1408xf32> to vector<2x1408xf32>
    %128 = vector.shape_cast %125 : vector<2x1408xf32> to vector<1x2x1408xf32>
    tpu.vector_store %arg9[%c0_60, %c0_61, %c0_62], %128 {strides = array<i32>} : memref<1x2x1408xf32, #tpu.memory_space<vmem>>, vector<1x2x1408xf32>,
    return
  }
  func.func @transform_0(%arg0: i32) -> (i32, i32, i32) {
    %c0_i32 = arith.constant 0 : i32
    %c0_i32_0 = arith.constant 0 : i32
    %c0_i32_1 = arith.constant 0 : i32
    return %arg0, %c0_i32, %c0_i32_0 : i32, i32, i32
  }
  func.func @transform_1(%arg0: i32) -> (i32, i32) {
    %c0_i32 = arith.constant 0 : i32
    %c0_i32_0 = arith.constant 0 : i32
    %c0_i32_1 = arith.constant 0 : i32
    return %c0_i32, %c0_i32_0 : i32, i32
  }
  func.func @transform_2(%arg0: i32) -> (i32, i32) {
    %c0_i32 = arith.constant 0 : i32
    %c0_i32_0 = arith.constant 0 : i32
    %c0_i32_1 = arith.constant 0 : i32
    return %c0_i32, %c0_i32_0 : i32, i32
  }
  func.func @transform_3(%arg0: i32) -> (i32, i32) {
    %c0_i32 = arith.constant 0 : i32
    %c0_i32_0 = arith.constant 0 : i32
    %c0_i32_1 = arith.constant 0 : i32
    return %c0_i32, %c0_i32_0 : i32, i32
  }
  func.func @transform_4(%arg0: i32) -> (i32, i32) {
    %c0_i32 = arith.constant 0 : i32
    %c0_i32_0 = arith.constant 0 : i32
    %c0_i32_1 = arith.constant 0 : i32
    return %c0_i32, %c0_i32_0 : i32, i32
  }
  func.func @transform_5(%arg0: i32) -> (i32, i32) {
    %c0_i32 = arith.constant 0 : i32
    %c0_i32_0 = arith.constant 0 : i32
    %c0_i32_1 = arith.constant 0 : i32
    return %c0_i32, %c0_i32_0 : i32, i32
  }
  func.func @transform_6(%arg0: i32) -> (i32, i32) {
    %c0_i32 = arith.constant 0 : i32
    %c0_i32_0 = arith.constant 0 : i32
    %c0_i32_1 = arith.constant 0 : i32
    return %c0_i32, %c0_i32_0 : i32, i32
  }
  func.func @transform_7(%arg0: i32) -> (i32, i32, i32) {
    %c0_i32 = arith.constant 0 : i32
    %c0_i32_0 = arith.constant 0 : i32
    %c0_i32_1 = arith.constant 0 : i32
    return %arg0, %c0_i32, %c0_i32_0 : i32, i32, i32
  }
  func.func @transform_8(%arg0: i32) -> (i32, i32, i32) {
    %c0_i32 = arith.constant 0 : i32
    %c0_i32_0 = arith.constant 0 : i32
    %c0_i32_1 = arith.constant 0 : i32
    return %arg0, %c0_i32, %c0_i32_0 : i32, i32, i32
  }
}

</mosaic_0001>

<llo_original>
// kernel: tile.13
$region0: #{tile.13}
  #allocation0 [shape = 's32[1]{0}', space=sflag, size = 0x4, scoped, tag = 'scoped memory for tile.13']
  %s0 = inlined_call_operand.vmem [shape: f32[4], index: 0, kind: input, shape index: {}]
  %s1 = inlined_call_operand.vmem [shape: f32[324,4], index: 1, kind: output, shape index: {}]
  // Predicated region
  $region2: #{tile.13} parent=0 // pred_check
    _
  $region3: #{tile.13} parent=0 // pred_check_branch
    %3 = sbr.rel (0) target = $region5
  $region4: #{tile.13} parent=0 // pred_region
    _
  $region5: #{tile.13} parent=0 // pred_fallthru
    _
  %v4 = vld [vmem:[%s0] ss:$0 sm:$0xff]
  %5 = vst [vmem:[%s1] sm:$0xff] %v4
  %s6 = scalar_lea.vmem %s1, 8
  %7 = vst [vmem:[%s6] sm:$0xff] %v4
  %s8 = scalar_lea.vmem %s1, 16
  %9 = vst [vmem:[%s8] sm:$0xff] %v4
  %s10 = scalar_lea.vmem %s1, 24
  %11 = vst [vmem:[%s10] sm:$0xff] %v4
  %s12 = scalar_lea.vmem %s1, 32
  %13 = vst [vmem:[%s12] sm:$0xff] %v4
  %s14 = scalar_lea.vmem %s1, 40
  %15 = vst [vmem:[%s14] sm:$0xff] %v4
  %s16 = scalar_lea.vmem %s1, 48
  %17 = vst [vmem:[%s16] sm:$0xff] %v4
  %s18 = scalar_lea.vmem %s1, 56
  %19 = vst [vmem:[%s18] sm:$0xff] %v4
  %s20 = scalar_lea.vmem %s1, 64
  %21 = vst [vmem:[%s20] sm:$0xff] %v4
  %s22 = scalar_lea.vmem %s1, 72
  %23 = vst [vmem:[%s22] sm:$0xff] %v4
  %s24 = scalar_lea.vmem %s1, 80
  %25 = vst [vmem:[%s24] sm:$0xff] %v4
  %s26 = scalar_lea.vmem %s1, 88
  %27 = vst [vmem:[%s26] sm:$0xff] %v4
  %s28 = scalar_lea.vmem %s1, 96
  %29 = vst [vmem:[%s28] sm:$0xff] %v4
  %s30 = scalar_lea.vmem %s1, 104
  %31 = vst [vmem:[%s30] sm:$0xff] %v4
  %s32 = scalar_lea.vmem %s1, 112
  %33 = vst [vmem:[%s32] sm:$0xff] %v4
  %s34 = scalar_lea.vmem %s1, 120
  %35 = vst [vmem:[%s34] sm:$0xff] %v4
  %s36 = scalar_lea.vmem %s1, 128
  %37 = vst [vmem:[%s36] sm:$0xff] %v4
  %s38 = scalar_lea.vmem %s1, 136
  %39 = vst [vmem:[%s38] sm:$0xff] %v4
  %s40 = scalar_lea.vmem %s1, 144
  %41 = vst [vmem:[%s40] sm:$0xff] %v4
  %s42 = scalar_lea.vmem %s1, 152
  %43 = vst [vmem:[%s42] sm:$0xff] %v4
  %s44 = scalar_lea.vmem %s1, 160
  %45 = vst [vmem:[%s44] sm:$0xff] %v4
  %s46 = scalar_lea.vmem %s1, 168
  %47 = vst [vmem:[%s46] sm:$0xff] %v4
  %s48 = scalar_lea.vmem %s1, 176
  %49 = vst [vmem:[%s48] sm:$0xff] %v4
  %s50 = scalar_lea.vmem %s1, 184
  %51 = vst [vmem:[%s50] sm:$0xff] %v4
  %s52 = scalar_lea.vmem %s1, 192
  %53 = vst [vmem:[%s52] sm:$0xff] %v4
  %s54 = scalar_lea.vmem %s1, 200
  %55 = vst [vmem:[%s54] sm:$0xff] %v4
  %s56 = scalar_lea.vmem %s1, 208
  %57 = vst [vmem:[%s56] sm:$0xff] %v4
  %s58 = scalar_lea.vmem %s1, 216
  %59 = vst [vmem:[%s58] sm:$0xff] %v4
  %s60 = scalar_lea.vmem %s1, 224
  %61 = vst [vmem:[%s60] sm:$0xff] %v4
  %s62 = scalar_lea.vmem %s1, 232
  %63 = vst [vmem:[%s62] sm:$0xff] %v4
  %s64 = scalar_lea.vmem %s1, 240
  %65 = vst [vmem:[%s64] sm:$0xff] %v4
  %s66 = scalar_lea.vmem %s1, 248
  %67 = vst [vmem:[%s66] sm:$0xff] %v4
  %s68 = scalar_lea.vmem %s1, 256
  %69 = vst [vmem:[%s68] sm:$0xff] %v4
  %s70 = scalar_lea.vmem %s1, 264
  %71 = vst [vmem:[%s70] sm:$0xff] %v4
  %s72 = scalar_lea.vmem %s1, 272
  %73 = vst [vmem:[%s72] sm:$0xff] %v4
  %s74 = scalar_lea.vmem %s1, 280
  %75 = vst [vmem:[%s74] sm:$0xff] %v4
  %s76 = scalar_lea.vmem %s1, 288
  %77 = vst [vmem:[%s76] sm:$0xff] %v4
  %s78 = scalar_lea.vmem %s1, 296
  %79 = vst [vmem:[%s78] sm:$0xff] %v4
  %s80 = scalar_lea.vmem %s1, 304
  %81 = vst [vmem:[%s80] sm:$0xff] %v4
  %s82 = scalar_lea.vmem %s1, 312
  %83 = vst [vmem:[%s82] sm:$0xff] %v4
  %s84 = scalar_lea.vmem %s1, 320
  %85 = vst [vmem:[%s84] sm:$0xff] %v4

// kernel: tile.14
$region0: #{tile.14}
  %s0 = inlined_call_operand.vmem [shape: f32[324,4], index: 0, kind: input, shape index: {}]
  %s1 = inlined_call_operand.vmem [shape: f32[1296], index: 1, kind: output, shape index: {}]
  %v2 = vld [vmem:[%s0] sm:$0x1]
  %s3 = scalar_lea.vmem %s0, 31
  %v4 = vld [vmem:[%s3] sm:$0x2]
  %vm5 = vcmask 1041409
  %v6 = vsel %vm5, %v4, %v2
  %s7 = scalar_lea.vmem %s0, 62
  %v8 = vld [vmem:[%s7] sm:$0x4]
  %vm9 = vcmask 1042434
  %v10 = vsel %vm9, %v8, %v6
  %s11 = scalar_lea.vmem %s0, 93
  %v12 = vld [vmem:[%s11] sm:$0x8]
  %vm13 = vcmask 1043459
  %v14 = vsel %vm13, %v12, %v10
  %s15 = scalar_lea.vmem %s0, 124
  %v16 = vld [vmem:[%s15] sm:$0x10]
  %vm17 = vcmask 1044484
  %v18 = vsel %vm17, %v16, %v14
  %s19 = scalar_lea.vmem %s0, 155
  %v20 = vld [vmem:[%s19] sm:$0x20]
  %vm21 = vcmask 1045509
  %v22 = vsel %vm21, %v20, %v18
  %s23 = scalar_lea.vmem %s0, 186
  %v24 = vld [vmem:[%s23] sm:$0x40]
  %vm25 = vcmask 1046534
  %v26 = vsel %vm25, %v24, %v22
  %s27 = scalar_lea.vmem %s0, 217
  %v28 = vld [vmem:[%s27] sm:$0x80]
  %vm29 = vcmask 1047559
  %v30 = vsel %vm29, %v28, %v26
  %vm31 = vcmask 31744
  %32 = vst.msk [vmem:[%s1] sm:$0xff] %vm31, %v30
  %s33 = scalar_lea.vmem %s0, 256
  %v34 = vld [vmem:[%s33] sm:$0x1]
  %s35 = scalar_lea.vmem %s0, 287
  %v36 = vld [vmem:[%s35] sm:$0x2]
  %vm37 = vcmask 1041409
  %v38 = vsel %vm37, %v36, %v34
  %s39 = scalar_lea.vmem %s0, 318
  %v40 = vld [vmem:[%s39] sm:$0x4]
  %vm41 = vcmask 1042434
  %v42 = vsel %vm41, %v40, %v38
  %vm43 = vcmask 31744
  %s44 = scalar_lea.vmem %s1, 8
  %45 = vst.msk [vmem:[%s44] sm:$0x7] %vm43, %v42
  %s46 = scalar_lea.vmem %s0, 31
  %v47 = vld [vmem:[%s46] sm:$0x1]
  %s48 = scalar_lea.vmem %s0, 62
  %v49 = vld [vmem:[%s48] sm:$0x2]
  %vm50 = vcmask 1041409
  %v51 = vsel %vm50, %v49, %v47
  %s52 = scalar_lea.vmem %s0, 93
  %v53 = vld [vmem:[%s52] sm:$0x4]
  %vm54 = vcmask 1042434
  %v55 = vsel %vm54, %v53, %v51
  %s56 = scalar_lea.vmem %s0, 124
  %v57 = vld [vmem:[%s56] sm:$0x8]
  %vm58 = vcmask 1043459
  %v59 = vsel %vm58, %v57, %v55
  %s60 = scalar_lea.vmem %s0, 155
  %v61 = vld [vmem:[%s60] sm:$0x10]
  %vm62 = vcmask 1044484
  %v63 = vsel %vm62, %v61, %v59
  %s64 = scalar_lea.vmem %s0, 186
  %v65 = vld [vmem:[%s64] sm:$0x20]
  %vm66 = vcmask 1045509
  %v67 = vsel %vm66, %v65, %v63
  %s68 = scalar_lea.vmem %s0, 217
  %v69 = vld [vmem:[%s68] sm:$0x40]
  %vm70 = vcmask 1046534
  %v71 = vsel %vm70, %v69, %v67
  %s72 = scalar_lea.vmem %s0, 248
  %v73 = vld [vmem:[%s72] sm:$0x80]
  %vm74 = vcmask 1047559
  %v75 = vsel %vm74, %v73, %v71
  %76 = vrot.lane.b32.xlu0 %v75, 124
  %v77 = vpop.permute.xlu0 %76
  %vm78 = vcmask 1048544
  %79 = vst.msk [vmem:[%s1] sm:$0xff] %vm78, %v77
  %s80 = scalar_lea.vmem %s0, 287
  %v81 = vld [vmem:[%s80] sm:$0x1]
  %s82 = scalar_lea.vmem %s0, 318
  %v83 = vld [vmem:[%s82] sm:$0x2]
  %vm84 = vcmask 1041409
  %v85 = vsel %vm84, %v83, %v81
  %86 = vrot.lane.b32.xlu0 %v85, 124
  %v87 = vpop.permute.xlu0 %86
  %vm88 = vcmask 1048544
  %s89 = scalar_lea.vmem %s1, 8
  %90 = vst.msk [vmem:[%s89] sm:$0x3] %vm88, %v87
  %s91 = scalar_lea.vmem %s0, 30
  %v92 = vld [vmem:[%s91] sm:$0x1]
  %s93 = scalar_lea.vmem %s0, 61
  %v94 = vld [vmem:[%s93] sm:$0x2]
  %vm95 = vcmask 1041409
  %v96 = vsel %vm95, %v94, %v92
  %s97 = scalar_lea.vmem %s0, 92
  %v98 = vld [vmem:[%s97] sm:$0x4]
  %vm99 = vcmask 1042434
  %v100 = vsel %vm99, %v98, %v96
  %s101 = scalar_lea.vmem %s0, 123
  %v102 = vld [vmem:[%s101] sm:$0x8]
  %vm103 = vcmask 1043459
  %v104 = vsel %vm103, %v102, %v100
  %s105 = scalar_lea.vmem %s0, 154
  %v106 = vld [vmem:[%s105] sm:$0x10]
  %vm107 = vcmask 1044484
  %v108 = vsel %vm107, %v106, %v104
  %s109 = scalar_lea.vmem %s0, 185
  %v110 = vld [vmem:[%s109] sm:$0x20]
  %vm111 = vcmask 1045509
  %v112 = vsel %vm111, %v110, %v108
  %s113 = scalar_lea.vmem %s0, 216
  %v114 = vld [vmem:[%s113] sm:$0x40]
  %vm115 = vcmask 1046534
  %v116 = vsel %vm115, %v114, %v112
  %s117 = scalar_lea.vmem %s0, 247
  %v118 = vld [vmem:[%s117] sm:$0x80]
  %vm119 = vcmask 1047559
  %v120 = vsel %vm119, %v118, %v116
  %121 = vrot.lane.b32.xlu0 %v120, 120
  %v122 = vpop.permute.xlu0 %121
  %vm123 = vcmask 1015744
  %124 = vst.msk [vmem:[%s1] sm:$0xff] %vm123, %v122
  %s125 = scalar_lea.vmem %s0, 286
  %v126 = vld [vmem:[%s125] sm:$0x1]
  %s127 = scalar_lea.vmem %s0, 317
  %v128 = vld [vmem:[%s127] sm:$0x2]
  %vm129 = vcmask 1041409
  %v130 = vsel %vm129, %v128, %v126
  %131 = vrot.lane.b32.xlu0 %v130, 120
  %v132 = vpop.permute.xlu0 %131
  %vm133 = vcmask 1015744
  %s134 = scalar_lea.vmem %s1, 8
  %135 = vst.msk [vmem:[%s134] sm:$0x3] %vm133, %v132
  %s136 = scalar_lea.vmem %s0, 29
  %v137 = vld [vmem:[%s136] sm:$0x1]
  %s138 = scalar_lea.vmem %s0, 60
  %v139 = vld [vmem:[%s138] sm:$0x2]
  %vm140 = vcmask 1041409
  %v141 = vsel %vm140, %v139, %v137
  %s142 = scalar_lea.vmem %s0, 91
  %v143 = vld [vmem:[%s142] sm:$0x4]
  %vm144 = vcmask 1042434
  %v145 = vsel %vm144, %v143, %v141
  %s146 = scalar_lea.vmem %s0, 122
  %v147 = vld [vmem:[%s146] sm:$0x8]
  %vm148 = vcmask 1043459
  %v149 = vsel %vm148, %v147, %v145
  %s150 = scalar_lea.vmem %s0, 153
  %v151 = vld [vmem:[%s150] sm:$0x10]
  %vm152 = vcmask 1044484
  %v153 = vsel %vm152, %v151, %v149
  %s154 = scalar_lea.vmem %s0, 184
  %v155 = vld [vmem:[%s154] sm:$0x20]
  %vm156 = vcmask 1045509
  %v157 = vsel %vm156, %v155, %v153
  %s158 = scalar_lea.vmem %s0, 215
  %v159 = vld [vmem:[%s158] sm:$0x40]
  %vm160 = vcmask 1046534
  %v161 = vsel %vm160, %v159, %v157
  %s162 = scalar_lea.vmem %s0, 246
  %v163 = vld [vmem:[%s162] sm:$0x80]
  %vm164 = vcmask 1047559
  %v165 = vsel %vm164, %v163, %v161
  %166 = vrot.lane.b32.xlu0 %v165, 116
  %v167 = vpop.permute.xlu0 %166
  %vm168 = vcmask 982944
  %169 = vst.msk [vmem:[%s1] sm:$0xff] %vm168, %v167
  %s170 = scalar_lea.vmem %s0, 285
  %v171 = vld [vmem:[%s170] sm:$0x1]
  %s172 = scalar_lea.vmem %s0, 316
  %v173 = vld [vmem:[%s172] sm:$0x2]
  %vm174 = vcmask 1041409
  %v175 = vsel %vm174, %v173, %v171
  %176 = vrot.lane.b32.xlu0 %v175, 116
  %v177 = vpop.permute.xlu0 %176
  %vm178 = vcmask 982944
  %s179 = scalar_lea.vmem %s1, 8
  %180 = vst.msk [vmem:[%s179] sm:$0x3] %vm178, %v177
  %s181 = scalar_lea.vmem %s0, 28
  %v182 = vld [vmem:[%s181] sm:$0x1]
  %s183 = scalar_lea.vmem %s0, 59
  %v184 = vld [vmem:[%s183] sm:$0x2]
  %vm185 = vcmask 1041409
  %v186 = vsel %vm185, %v184, %v182
  %s187 = scalar_lea.vmem %s0, 90
  %v188 = vld [vmem:[%s187] sm:$0x4]
  %vm189 = vcmask 1042434
  %v190 = vsel %vm189, %v188, %v186
  %s191 = scalar_lea.vmem %s0, 121
  %v192 = vld [vmem:[%s191] sm:$0x8]
  %vm193 = vcmask 1043459
  %v194 = vsel %vm193, %v192, %v190
  %s195 = scalar_lea.vmem %s0, 152
  %v196 = vld [vmem:[%s195] sm:$0x10]
  %vm197 = vcmask 1044484
  %v198 = vsel %vm197, %v196, %v194
  %s199 = scalar_lea.vmem %s0, 183
  %v200 = vld [vmem:[%s199] sm:$0x20]
  %vm201 = vcmask 1045509
  %v202 = vsel %vm201, %v200, %v198
  %s203 = scalar_lea.vmem %s0, 214
  %v204 = vld [vmem:[%s203] sm:$0x40]
  %vm205 = vcmask 1046534
  %v206 = vsel %vm205, %v204, %v202
  %s207 = scalar_lea.vmem %s0, 245
  %v208 = vld [vmem:[%s207] sm:$0x80]
  %vm209 = vcmask 1047559
  %v210 = vsel %vm209, %v208, %v206
  %211 = vrot.lane.b32.xlu0 %v210, 112
  %v212 = vpop.permute.xlu0 %211
  %vm213 = vcmask 950144
  %214 = vst.msk [vmem:[%s1] sm:$0xff] %vm213, %v212
  %s215 = scalar_lea.vmem %s0, 284
  %v216 = vld [vmem:[%s215] sm:$0x1]
  %s217 = scalar_lea.vmem %s0, 315
  %v218 = vld [vmem:[%s217] sm:$0x2]
  %vm219 = vcmask 1041409
  %v220 = vsel %vm219, %v218, %v216
  %221 = vrot.lane.b32.xlu0 %v220, 112
  %v222 = vpop.permute.xlu0 %221
  %vm223 = vcmask 950144
  %s224 = scalar_lea.vmem %s1, 8
  %225 = vst.msk [vmem:[%s224] sm:$0x3] %vm223, %v222
  %s226 = scalar_lea.vmem %s0, 27
  %v227 = vld [vmem:[%s226] sm:$0x1]
  %s228 = scalar_lea.vmem %s0, 58
  %v229 = vld [vmem:[%s228] sm:$0x2]
  %vm230 = vcmask 1041409
  %v231 = vsel %vm230, %v229, %v227
  %s232 = scalar_lea.vmem %s0, 89
  %v233 = vld [vmem:[%s232] sm:$0x4]
  %vm234 = vcmask 1042434
  %v235 = vsel %vm234, %v233, %v231
  %s236 = scalar_lea.vmem %s0, 120
  %v237 = vld [vmem:[%s236] sm:$0x8]
  %vm238 = vcmask 1043459
  %v239 = vsel %vm238, %v237, %v235
  %s240 = scalar_lea.vmem %s0, 151
  %v241 = vld [vmem:[%s240] sm:$0x10]
  %vm242 = vcmask 1044484
  %v243 = vsel %vm242, %v241, %v239
  %s244 = scalar_lea.vmem %s0, 182
  %v245 = vld [vmem:[%s244] sm:$0x20]
  %vm246 = vcmask 1045509
  %v247 = vsel %vm246, %v245, %v243
  %s248 = scalar_lea.vmem %s0, 213
  %v249 = vld [vmem:[%s248] sm:$0x40]
  %vm250 = vcmask 1046534
  %v251 = vsel %vm250, %v249, %v247
  %s252 = scalar_lea.vmem %s0, 244
  %v253 = vld [vmem:[%s252] sm:$0x80]
  %vm254 = vcmask 1047559
  %v255 = vsel %vm254, %v253, %v251
  %256 = vrot.lane.b32.xlu0 %v255, 108
  %v257 = vpop.permute.xlu0 %256
  %vm258 = vcmask 917344
  %259 = vst.msk [vmem:[%s1] sm:$0xff] %vm258, %v257
  %s260 = scalar_lea.vmem %s0, 283
  %v261 = vld [vmem:[%s260] sm:$0x1]
  %s262 = scalar_lea.vmem %s0, 314
  %v263 = vld [vmem:[%s262] sm:$0x2]
  %vm264 = vcmask 1041409
  %v265 = vsel %vm264, %v263, %v261
  %266 = vrot.lane.b32.xlu0 %v265, 108
  %v267 = vpop.permute.xlu0 %266
  %vm268 = vcmask 917344
  %s269 = scalar_lea.vmem %s1, 8
  %270 = vst.msk [vmem:[%s269] sm:$0x3] %vm268, %v267
  %s271 = scalar_lea.vmem %s0, 26
  %v272 = vld [vmem:[%s271] sm:$0x1]
  %s273 = scalar_lea.vmem %s0, 57
  %v274 = vld [vmem:[%s273] sm:$0x2]
  %vm275 = vcmask 1041409
  %v276 = vsel %vm275, %v274, %v272
  %s277 = scalar_lea.vmem %s0, 88
  %v278 = vld [vmem:[%s277] sm:$0x4]
  %vm279 = vcmask 1042434
  %v280 = vsel %vm279, %v278, %v276
  %s281 = scalar_lea.vmem %s0, 119
  %v282 = vld [vmem:[%s281] sm:$0x8]
  %vm283 = vcmask 1043459
  %v284 = vsel %vm283, %v282, %v280
  %s285 = scalar_lea.vmem %s0, 150
  %v286 = vld [vmem:[%s285] sm:$0x10]
  %vm287 = vcmask 1044484
  %v288 = vsel %vm287, %v286, %v284
  %s289 = scalar_lea.vmem %s0, 181
  %v290 = vld [vmem:[%s289] sm:$0x20]
  %vm291 = vcmask 1045509
  %v292 = vsel %vm291, %v290, %v288
  %s293 = scalar_lea.vmem %s0, 212
  %v294 = vld [vmem:[%s293] sm:$0x40]
  %vm295 = vcmask 1046534
  %v296 = vsel %vm295, %v294, %v292
  %s297 = scalar_lea.vmem %s0, 243
  %v298 = vld [vmem:[%s297] sm:$0x80]
  %vm299 = vcmask 1047559
  %v300 = vsel %vm299, %v298, %v296
  %301 = vrot.lane.b32.xlu0 %v300, 104
  %v302 = vpop.permute.xlu0 %301
  %vm303 = vcmask 884544
  %304 = vst.msk [vmem:[%s1] sm:$0xff] %vm303, %v302
  %s305 = scalar_lea.vmem %s0, 282
  %v306 = vld [vmem:[%s305] sm:$0x1]
  %s307 = scalar_lea.vmem %s0, 313
  %v308 = vld [vmem:[%s307] sm:$0x2]
  %vm309 = vcmask 1041409
  %v310 = vsel %vm309, %v308, %v306
  %311 = vrot.lane.b32.xlu0 %v310, 104
  %v312 = vpop.permute.xlu0 %311
  %vm313 = vcmask 884544
  %s314 = scalar_lea.vmem %s1, 8
  %315 = vst.msk [vmem:[%s314] sm:$0x3] %vm313, %v312
  %s316 = scalar_lea.vmem %s0, 25
  %v317 = vld [vmem:[%s316] sm:$0x1]
  %s318 = scalar_lea.vmem %s0, 56
  %v319 = vld [vmem:[%s318] sm:$0x2]
  %vm320 = vcmask 1041409
  %v321 = vsel %vm320, %v319, %v317
  %s322 = scalar_lea.vmem %s0, 87
  %v323 = vld [vmem:[%s322] sm:$0x4]
  %vm324 = vcmask 1042434
  %v325 = vsel %vm324, %v323, %v321
  %s326 = scalar_lea.vmem %s0, 118
  %v327 = vld [vmem:[%s326] sm:$0x8]
  %vm328 = vcmask 1043459
  %v329 = vsel %vm328, %v327, %v325
  %s330 = scalar_lea.vmem %s0, 149
  %v331 = vld [vmem:[%s330] sm:$0x10]
  %vm332 = vcmask 1044484
  %v333 = vsel %vm332, %v331, %v329
  %s334 = scalar_lea.vmem %s0, 180
  %v335 = vld [vmem:[%s334] sm:$0x20]
  %vm336 = vcmask 1045509
  %v337 = vsel %vm336, %v335, %v333
  %s338 = scalar_lea.vmem %s0, 211
  %v339 = vld [vmem:[%s338] sm:$0x40]
  %vm340 = vcmask 1046534
  %v341 = vsel %vm340, %v339, %v337
  %s342 = scalar_lea.vmem %s0, 242
  %v343 = vld [vmem:[%s342] sm:$0x80]
  %vm344 = vcmask 1047559
  %v345 = vsel %vm344, %v343, %v341
  %346 = vrot.lane.b32.xlu0 %v345, 100
  %v347 = vpop.permute.xlu0 %346
  %vm348 = vcmask 851744
  %349 = vst.msk [vmem:[%s1] sm:$0xff] %vm348, %v347
  %s350 = scalar_lea.vmem %s0, 281
  %v351 = vld [vmem:[%s350] sm:$0x1]
  %s352 = scalar_lea.vmem %s0, 312
  %v353 = vld [vmem:[%s352] sm:$0x2]
  %vm354 = vcmask 1041409
  %v355 = vsel %vm354, %v353, %v351
  %356 = vrot.lane.b32.xlu0 %v355, 100
  %v357 = vpop.permute.xlu0 %356
  %vm358 = vcmask 851744
  %s359 = scalar_lea.vmem %s1, 8
  %360 = vst.msk [vmem:[%s359] sm:$0x3] %vm358, %v357
  %s361 = scalar_lea.vmem %s0, 24
  %v362 = vld [vmem:[%s361] sm:$0x1]
  %s363 = scalar_lea.vmem %s0, 55
  %v364 = vld [vmem:[%s363] sm:$0x2]
  %vm365 = vcmask 1041409
  %v366 = vsel %vm365, %v364, %v362
  %s367 = scalar_lea.vmem %s0, 86
  %v368 = vld [vmem:[%s367] sm:$0x4]
  %vm369 = vcmask 1042434
  %v370 = vsel %vm369, %v368, %v366
  %s371 = scalar_lea.vmem %s0, 117
  %v372 = vld [vmem:[%s371] sm:$0x8]
  %vm373 = vcmask 1043459
  %v374 = vsel %vm373, %v372, %v370
  %s375 = scalar_lea.vmem %s0, 148
  %v376 = vld [vmem:[%s375] sm:$0x10]
  %vm377 = vcmask 1044484
  %v378 = vsel %vm377, %v376, %v374
  %s379 = scalar_lea.vmem %s0, 179
  %v380 = vld [vmem:[%s379] sm:$0x20]
  %vm381 = vcmask 1045509
  %v382 = vsel %vm381, %v380, %v378
  %s383 = scalar_lea.vmem %s0, 210
  %v384 = vld [vmem:[%s383] sm:$0x40]
  %vm385 = vcmask 1046534
  %v386 = vsel %vm385, %v384, %v382
  %s387 = scalar_lea.vmem %s0, 241
  %v388 = vld [vmem:[%s387] sm:$0x80]
  %vm389 = vcmask 1047559
  %v390 = vsel %vm389, %v388, %v386
  %391 = vrot.lane.b32.xlu0 %v390, 96
  %v392 = vpop.permute.xlu0 %391
  %vm393 = vcmask 818944
  %394 = vst.msk [vmem:[%s1] sm:$0xff] %vm393, %v392
  %s395 = scalar_lea.vmem %s0, 280
  %v396 = vld [vmem:[%s395] sm:$0x1]
  %s397 = scalar_lea.vmem %s0, 311
  %v398 = vld [vmem:[%s397] sm:$0x2]
  %vm399 = vcmask 1041409
  %v400 = vsel %vm399, %v398, %v396
  %401 = vrot.lane.b32.xlu0 %v400, 96
  %v402 = vpop.permute.xlu0 %401
  %vm403 = vcmask 818944
  %s404 = scalar_lea.vmem %s1, 8
  %405 = vst.msk [vmem:[%s404] sm:$0x3] %vm403, %v402
  %s406 = scalar_lea.vmem %s0, 23
  %v407 = vld [vmem:[%s406] sm:$0x1]
  %s408 = scalar_lea.vmem %s0, 54
  %v409 = vld [vmem:[%s408] sm:$0x2]
  %vm410 = vcmask 1041409
  %v411 = vsel %vm410, %v409, %v407
  %s412 = scalar_lea.vmem %s0, 85
  %v413 = vld [vmem:[%s412] sm:$0x4]
  %vm414 = vcmask 1042434
  %v415 = vsel %vm414, %v413, %v411
  %s416 = scalar_lea.vmem %s0, 116
  %v417 = vld [vmem:[%s416] sm:$0x8]
  %vm418 = vcmask 1043459
  %v419 = vsel %vm418, %v417, %v415
  %s420 = scalar_lea.vmem %s0, 147
  %v421 = vld [vmem:[%s420] sm:$0x10]
  %vm422 = vcmask 1044484
  %v423 = vsel %vm422, %v421, %v419
  %s424 = scalar_lea.vmem %s0, 178
  %v425 = vld [vmem:[%s424] sm:$0x20]
  %vm426 = vcmask 1045509
  %v427 = vsel %vm426, %v425, %v423
  %s428 = scalar_lea.vmem %s0, 209
  %v429 = vld [vmem:[%s428] sm:$0x40]
  %vm430 = vcmask 1046534
  %v431 = vsel %vm430, %v429, %v427
  %s432 = scalar_lea.vmem %s0, 240
  %v433 = vld [vmem:[%s432] sm:$0x80]
  %vm434 = vcmask 1047559
  %v435 = vsel %vm434, %v433, %v431
  %436 = vrot.lane.b32.xlu0 %v435, 92
  %v437 = vpop.permute.xlu0 %436
  %vm438 = vcmask 786144
  %439 = vst.msk [vmem:[%s1] sm:$0xff] %vm438, %v437
  %s440 = scalar_lea.vmem %s0, 279
  %v441 = vld [vmem:[%s440] sm:$0x1]
  %s442 = scalar_lea.vmem %s0, 310
  %v443 = vld [vmem:[%s442] sm:$0x2]
  %vm444 = vcmask 1041409
  %v445 = vsel %vm444, %v443, %v441
  %446 = vrot.lane.b32.xlu0 %v445, 92
  %v447 = vpop.permute.xlu0 %446
  %vm448 = vcmask 786144
  %s449 = scalar_lea.vmem %s1, 8
  %450 = vst.msk [vmem:[%s449] sm:$0x3] %vm448, %v447
  %s451 = scalar_lea.vmem %s0, 22
  %v452 = vld [vmem:[%s451] sm:$0x1]
  %s453 = scalar_lea.vmem %s0, 53
  %v454 = vld [vmem:[%s453] sm:$0x2]
  %vm455 = vcmask 1041409
  %v456 = vsel %vm455, %v454, %v452
  %s457 = scalar_lea.vmem %s0, 84
  %v458 = vld [vmem:[%s457] sm:$0x4]
  %vm459 = vcmask 1042434
  %v460 = vsel %vm459, %v458, %v456
  %s461 = scalar_lea.vmem %s0, 115
  %v462 = vld [vmem:[%s461] sm:$0x8]
  %vm463 = vcmask 1043459
  %v464 = vsel %vm463, %v462, %v460
  %s465 = scalar_lea.vmem %s0, 146
  %v466 = vld [vmem:[%s465] sm:$0x10]
  %vm467 = vcmask 1044484
  %v468 = vsel %vm467, %v466, %v464
  %s469 = scalar_lea.vmem %s0, 177
  %v470 = vld [vmem:[%s469] sm:$0x20]
  %vm471 = vcmask 1045509
  %v472 = vsel %vm471, %v470, %v468
  %s473 = scalar_lea.vmem %s0, 208
  %v474 = vld [vmem:[%s473] sm:$0x40]
  %vm475 = vcmask 1046534
  %v476 = vsel %vm475, %v474, %v472
  %s477 = scalar_lea.vmem %s0, 239
  %v478 = vld [vmem:[%s477] sm:$0x80]
  %vm479 = vcmask 1047559
  %v480 = vsel %vm479, %v478, %v476
  %481 = vrot.lane.b32.xlu0 %v480, 88
  %v482 = vpop.permute.xlu0 %481
  %vm483 = vcmask 753344
  %484 = vst.msk [vmem:[%s1] sm:$0xff] %vm483, %v482
  %s485 = scalar_lea.vmem %s0, 278
  %v486 = vld [vmem:[%s485] sm:$0x1]
  %s487 = scalar_lea.vmem %s0, 309
  %v488 = vld [vmem:[%s487] sm:$0x2]
  %vm489 = vcmask 1041409
  %v490 = vsel %vm489, %v488, %v486
  %491 = vrot.lane.b32.xlu0 %v490, 88
  %v492 = vpop.permute.xlu0 %491
  %vm493 = vcmask 753344
  %s494 = scalar_lea.vmem %s1, 8
  %495 = vst.msk [vmem:[%s494] sm:$0x3] %vm493, %v492
  %s496 = scalar_lea.vmem %s0, 21
  %v497 = vld [vmem:[%s496] sm:$0x1]
  %s498 = scalar_lea.vmem %s0, 52
  %v499 = vld [vmem:[%s498] sm:$0x2]
  %vm500 = vcmask 1041409
  %v501 = vsel %vm500, %v499, %v497
  %s502 = scalar_lea.vmem %s0, 83
  %v503 = vld [vmem:[%s502] sm:$0x4]
  %vm504 = vcmask 1042434
  %v505 = vsel %vm504, %v503, %v501
  %s506 = scalar_lea.vmem %s0, 114
  %v507 = vld [vmem:[%s506] sm:$0x8]
  %vm508 = vcmask 1043459
  %v509 = vsel %vm508, %v507, %v505
  %s510 = scalar_lea.vmem %s0, 145
  %v511 = vld [vmem:[%s510] sm:$0x10]
  %vm512 = vcmask 1044484
  %v513 = vsel %vm512, %v511, %v509
  %s514 = scalar_lea.vmem %s0, 176
  %v515 = vld [vmem:[%s514] sm:$0x20]
  %vm516 = vcmask 1045509
  %v517 = vsel %vm516, %v515, %v513
  %s518 = scalar_lea.vmem %s0, 207
  %v519 = vld [vmem:[%s518] sm:$0x40]
  %vm520 = vcmask 1046534
  %v521 = vsel %vm520, %v519, %v517
  %s522 = scalar_lea.vmem %s0, 238
  %v523 = vld [vmem:[%s522] sm:$0x80]
  %vm524 = vcmask 1047559
  %v525 = vsel %vm524, %v523, %v521
  %526 = vrot.lane.b32.xlu0 %v525, 84
  %v527 = vpop.permute.xlu0 %526
  %vm528 = vcmask 720544
  %529 = vst.msk [vmem:[%s1] sm:$0xff] %vm528, %v527
  %s530 = scalar_lea.vmem %s0, 277
  %v531 = vld [vmem:[%s530] sm:$0x1]
  %s532 = scalar_lea.vmem %s0, 308
  %v533 = vld [vmem:[%s532] sm:$0x2]
  %vm534 = vcmask 1041409
  %v535 = vsel %vm534, %v533, %v531
  %536 = vrot.lane.b32.xlu0 %v535, 84
  %v537 = vpop.permute.xlu0 %536
  %vm538 = vcmask 720544
  %s539 = scalar_lea.vmem %s1, 8
  %540 = vst.msk [vmem:[%s539] sm:$0x3] %vm538, %v537
  %s541 = scalar_lea.vmem %s0, 20
  %v542 = vld [vmem:[%s541] sm:$0x1]
  %s543 = scalar_lea.vmem %s0, 51
  %v544 = vld [vmem:[%s543] sm:$0x2]
  %vm545 = vcmask 1041409
  %v546 = vsel %vm545, %v544, %v542
  %s547 = scalar_lea.vmem %s0, 82
  %v548 = vld [vmem:[%s547] sm:$0x4]
  %vm549 = vcmask 1042434
  %v550 = vsel %vm549, %v548, %v546
  %s551 = scalar_lea.vmem %s0, 113
  %v552 = vld [vmem:[%s551] sm:$0x8]
  %vm553 = vcmask 1043459
  %v554 = vsel %vm553, %v552, %v550
  %s555 = scalar_lea.vmem %s0, 144
  %v556 = vld [vmem:[%s555] sm:$0x10]
  %vm557 = vcmask 1044484
  %v558 = vsel %vm557, %v556, %v554
  %s559 = scalar_lea.vmem %s0, 175
  %v560 = vld [vmem:[%s559] sm:$0x20]
  %vm561 = vcmask 1045509
  %v562 = vsel %vm561, %v560, %v558
  %s563 = scalar_lea.vmem %s0, 206
  %v564 = vld [vmem:[%s563] sm:$0x40]
  %vm565 = vcmask 1046534
  %v566 = vsel %vm565, %v564, %v562
  %s567 = scalar_lea.vmem %s0, 237
  %v568 = vld [vmem:[%s567] sm:$0x80]
  %vm569 = vcmask 1047559
  %v570 = vsel %vm569, %v568, %v566
  %571 = vrot.lane.b32.xlu0 %v570, 80
  %v572 = vpop.permute.xlu0 %571
  %vm573 = vcmask 687744
  %574 = vst.msk [vmem:[%s1] sm:$0xff] %vm573, %v572
  %s575 = scalar_lea.vmem %s0, 276
  %v576 = vld [vmem:[%s575] sm:$0x1]
  %s577 = scalar_lea.vmem %s0, 307
  %v578 = vld [vmem:[%s577] sm:$0x2]
  %vm579 = vcmask 1041409
  %v580 = vsel %vm579, %v578, %v576
  %581 = vrot.lane.b32.xlu0 %v580, 80
  %v582 = vpop.permute.xlu0 %581
  %vm583 = vcmask 687744
  %s584 = scalar_lea.vmem %s1, 8
  %585 = vst.msk [vmem:[%s584] sm:$0x3] %vm583, %v582
  %s586 = scalar_lea.vmem %s0, 19
  %v587 = vld [vmem:[%s586] sm:$0x1]
  %s588 = scalar_lea.vmem %s0, 50
  %v589 = vld [vmem:[%s588] sm:$0x2]
  %vm590 = vcmask 1041409
  %v591 = vsel %vm590, %v589, %v587
  %s592 = scalar_lea.vmem %s0, 81
  %v593 = vld [vmem:[%s592] sm:$0x4]
  %vm594 = vcmask 1042434
  %v595 = vsel %vm594, %v593, %v591
  %s596 = scalar_lea.vmem %s0, 112
  %v597 = vld [vmem:[%s596] sm:$0x8]
  %vm598 = vcmask 1043459
  %v599 = vsel %vm598, %v597, %v595
  %s600 = scalar_lea.vmem %s0, 143
  %v601 = vld [vmem:[%s600] sm:$0x10]
  %vm602 = vcmask 1044484
  %v603 = vsel %vm602, %v601, %v599
  %s604 = scalar_lea.vmem %s0, 174
  %v605 = vld [vmem:[%s604] sm:$0x20]
  %vm606 = vcmask 1045509
  %v607 = vsel %vm606, %v605, %v603
  %s608 = scalar_lea.vmem %s0, 205
  %v609 = vld [vmem:[%s608] sm:$0x40]
  %vm610 = vcmask 1046534
  %v611 = vsel %vm610, %v609, %v607
  %s612 = scalar_lea.vmem %s0, 236
  %v613 = vld [vmem:[%s612] sm:$0x80]
  %vm614 = vcmask 1047559
  %v615 = vsel %vm614, %v613, %v611
  %616 = vrot.lane.b32.xlu0 %v615, 76
  %v617 = vpop.permute.xlu0 %616
  %vm618 = vcmask 654944
  %619 = vst.msk [vmem:[%s1] sm:$0xff] %vm618, %v617
  %s620 = scalar_lea.vmem %s0, 275
  %v621 = vld [vmem:[%s620] sm:$0x1]
  %s622 = scalar_lea.vmem %s0, 306
  %v623 = vld [vmem:[%s622] sm:$0x2]
  %vm624 = vcmask 1041409
  %v625 = vsel %vm624, %v623, %v621
  %626 = vrot.lane.b32.xlu0 %v625, 76
  %v627 = vpop.permute.xlu0 %626
  %vm628 = vcmask 654944
  %s629 = scalar_lea.vmem %s1, 8
  %630 = vst.msk [vmem:[%s629] sm:$0x3] %vm628, %v627
  %s631 = scalar_lea.vmem %s0, 18
  %v632 = vld [vmem:[%s631] sm:$0x1]
  %s633 = scalar_lea.vmem %s0, 49
  %v634 = vld [vmem:[%s633] sm:$0x2]
  %vm635 = vcmask 1041409
  %v636 = vsel %vm635, %v634, %v632
  %s637 = scalar_lea.vmem %s0, 80
  %v638 = vld [vmem:[%s637] sm:$0x4]
  %vm639 = vcmask 1042434
  %v640 = vsel %vm639, %v638, %v636
  %s641 = scalar_lea.vmem %s0, 111
  %v642 = vld [vmem:[%s641] sm:$0x8]
  %vm643 = vcmask 1043459
  %v644 = vsel %vm643, %v642, %v640
  %s645 = scalar_lea.vmem %s0, 142
  %v646 = vld [vmem:[%s645] sm:$0x10]
  %vm647 = vcmask 1044484
  %v648 = vsel %vm647, %v646, %v644
  %s649 = scalar_lea.vmem %s0, 173
  %v650 = vld [vmem:[%s649] sm:$0x20]
  %vm651 = vcmask 1045509
  %v652 = vsel %vm651, %v650, %v648
  %s653 = scalar_lea.vmem %s0, 204
  %v654 = vld [vmem:[%s653] sm:$0x40]
  %vm655 = vcmask 1046534
  %v656 = vsel %vm655, %v654, %v652
  %s657 = scalar_lea.vmem %s0, 235
  %v658 = vld [vmem:[%s657] sm:$0x80]
  %vm659 = vcmask 1047559
  %v660 = vsel %vm659, %v658, %v656
  %661 = vrot.lane.b32.xlu0 %v660, 72
  %v662 = vpop.permute.xlu0 %661
  %vm663 = vcmask 622144
  %664 = vst.msk [vmem:[%s1] sm:$0xff] %vm663, %v662
  %s665 = scalar_lea.vmem %s0, 274
  %v666 = vld [vmem:[%s665] sm:$0x1]
  %s667 = scalar_lea.vmem %s0, 305
  %v668 = vld [vmem:[%s667] sm:$0x2]
  %vm669 = vcmask 1041409
  %v670 = vsel %vm669, %v668, %v666
  %671 = vrot.lane.b32.xlu0 %v670, 72
  %v672 = vpop.permute.xlu0 %671
  %vm673 = vcmask 622144
  %s674 = scalar_lea.vmem %s1, 8
  %675 = vst.msk [vmem:[%s674] sm:$0x3] %vm673, %v672
  %s676 = scalar_lea.vmem %s0, 17
  %v677 = vld [vmem:[%s676] sm:$0x1]
  %s678 = scalar_lea.vmem %s0, 48
  %v679 = vld [vmem:[%s678] sm:$0x2]
  %vm680 = vcmask 1041409
  %v681 = vsel %vm680, %v679, %v677
  %s682 = scalar_lea.vmem %s0, 79
  %v683 = vld [vmem:[%s682] sm:$0x4]
  %vm684 = vcmask 1042434
  %v685 = vsel %vm684, %v683, %v681
  %s686 = scalar_lea.vmem %s0, 110
  %v687 = vld [vmem:[%s686] sm:$0x8]
  %vm688 = vcmask 1043459
  %v689 = vsel %vm688, %v687, %v685
  %s690 = scalar_lea.vmem %s0, 141
  %v691 = vld [vmem:[%s690] sm:$0x10]
  %vm692 = vcmask 1044484
  %v693 = vsel %vm692, %v691, %v689
  %s694 = scalar_lea.vmem %s0, 172
  %v695 = vld [vmem:[%s694] sm:$0x20]
  %vm696 = vcmask 1045509
  %v697 = vsel %vm696, %v695, %v693
  %s698 = scalar_lea.vmem %s0, 203
  %v699 = vld [vmem:[%s698] sm:$0x40]
  %vm700 = vcmask 1046534
  %v701 = vsel %vm700, %v699, %v697
  %s702 = scalar_lea.vmem %s0, 234
  %v703 = vld [vmem:[%s702] sm:$0x80]
  %vm704 = vcmask 1047559
  %v705 = vsel %vm704, %v703, %v701
  %706 = vrot.lane.b32.xlu0 %v705, 68
  %v707 = vpop.permute.xlu0 %706
  %vm708 = vcmask 589344
  %709 = vst.msk [vmem:[%s1] sm:$0xff] %vm708, %v707
  %s710 = scalar_lea.vmem %s0, 273
  %v711 = vld [vmem:[%s710] sm:$0x1]
  %s712 = scalar_lea.vmem %s0, 304
  %v713 = vld [vmem:[%s712] sm:$0x2]
  %vm714 = vcmask 1041409
  %v715 = vsel %vm714, %v713, %v711
  %716 = vrot.lane.b32.xlu0 %v715, 68
  %v717 = vpop.permute.xlu0 %716
  %vm718 = vcmask 589344
  %s719 = scalar_lea.vmem %s1, 8
  %720 = vst.msk [vmem:[%s719] sm:$0x3] %vm718, %v717
  %s721 = scalar_lea.vmem %s0, 16
  %v722 = vld [vmem:[%s721] sm:$0x1]
  %s723 = scalar_lea.vmem %s0, 47
  %v724 = vld [vmem:[%s723] sm:$0x2]
  %vm725 = vcmask 1041409
  %v726 = vsel %vm725, %v724, %v722
  %s727 = scalar_lea.vmem %s0, 78
  %v728 = vld [vmem:[%s727] sm:$0x4]
  %vm729 = vcmask 1042434
  %v730 = vsel %vm729, %v728, %v726
  %s731 = scalar_lea.vmem %s0, 109
  %v732 = vld [vmem:[%s731] sm:$0x8]
  %vm733 = vcmask 1043459
  %v734 = vsel %vm733, %v732, %v730
  %s735 = scalar_lea.vmem %s0, 140
  %v736 = vld [vmem:[%s735] sm:$0x10]
  %vm737 = vcmask 1044484
  %v738 = vsel %vm737, %v736, %v734
  %s739 = scalar_lea.vmem %s0, 171
  %v740 = vld [vmem:[%s739] sm:$0x20]
  %vm741 = vcmask 1045509
  %v742 = vsel %vm741, %v740, %v738
  %s743 = scalar_lea.vmem %s0, 202
  %v744 = vld [vmem:[%s743] sm:$0x40]
  %vm745 = vcmask 1046534
  %v746 = vsel %vm745, %v744, %v742
  %s747 = scalar_lea.vmem %s0, 233
  %v748 = vld [vmem:[%s747] sm:$0x80]
  %vm749 = vcmask 1047559
  %v750 = vsel %vm749, %v748, %v746
  %751 = vrot.lane.b32.xlu0 %v750, 64
  %v752 = vpop.permute.xlu0 %751
  %vm753 = vcmask 556544
  %754 = vst.msk [vmem:[%s1] sm:$0xff] %vm753, %v752
  %s755 = scalar_lea.vmem %s0, 272
  %v756 = vld [vmem:[%s755] sm:$0x1]
  %s757 = scalar_lea.vmem %s0, 303
  %v758 = vld [vmem:[%s757] sm:$0x2]
  %vm759 = vcmask 1041409
  %v760 = vsel %vm759, %v758, %v756
  %761 = vrot.lane.b32.xlu0 %v760, 64
  %v762 = vpop.permute.xlu0 %761
  %vm763 = vcmask 556544
  %s764 = scalar_lea.vmem %s1, 8
  %765 = vst.msk [vmem:[%s764] sm:$0x3] %vm763, %v762
  %s766 = scalar_lea.vmem %s0, 15
  %v767 = vld [vmem:[%s766] sm:$0x1]
  %s768 = scalar_lea.vmem %s0, 46
  %v769 = vld [vmem:[%s768] sm:$0x2]
  %vm770 = vcmask 1041409
  %v771 = vsel %vm770, %v769, %v767
  %s772 = scalar_lea.vmem %s0, 77
  %v773 = vld [vmem:[%s772] sm:$0x4]
  %vm774 = vcmask 1042434
  %v775 = vsel %vm774, %v773, %v771
  %s776 = scalar_lea.vmem %s0, 108
  %v777 = vld [vmem:[%s776] sm:$0x8]
  %vm778 = vcmask 1043459
  %v779 = vsel %vm778, %v777, %v775
  %s780 = scalar_lea.vmem %s0, 139
  %v781 = vld [vmem:[%s780] sm:$0x10]
  %vm782 = vcmask 1044484
  %v783 = vsel %vm782, %v781, %v779
  %s784 = scalar_lea.vmem %s0, 170
  %v785 = vld [vmem:[%s784] sm:$0x20]
  %vm786 = vcmask 1045509
  %v787 = vsel %vm786, %v785, %v783
  %s788 = scalar_lea.vmem %s0, 201
  %v789 = vld [vmem:[%s788] sm:$0x40]
  %vm790 = vcmask 1046534
  %v791 = vsel %vm790, %v789, %v787
  %s792 = scalar_lea.vmem %s0, 232
  %v793 = vld [vmem:[%s792] sm:$0x80]
  %vm794 = vcmask 1047559
  %v795 = vsel %vm794, %v793, %v791
  %796 = vrot.lane.b32.xlu0 %v795, 60
  %v797 = vpop.permute.xlu0 %796
  %vm798 = vcmask 523744
  %799 = vst.msk [vmem:[%s1] sm:$0xff] %vm798, %v797
  %s800 = scalar_lea.vmem %s0, 271
  %v801 = vld [vmem:[%s800] sm:$0x1]
  %s802 = scalar_lea.vmem %s0, 302
  %v803 = vld [vmem:[%s802] sm:$0x2]
  %vm804 = vcmask 1041409
  %v805 = vsel %vm804, %v803, %v801
  %806 = vrot.lane.b32.xlu0 %v805, 60
  %v807 = vpop.permute.xlu0 %806
  %vm808 = vcmask 523744
  %s809 = scalar_lea.vmem %s1, 8
  %810 = vst.msk [vmem:[%s809] sm:$0x3] %vm808, %v807
  %s811 = scalar_lea.vmem %s0, 14
  %v812 = vld [vmem:[%s811] sm:$0x1]
  %s813 = scalar_lea.vmem %s0, 45
  %v814 = vld [vmem:[%s813] sm:$0x2]
  %vm815 = vcmask 1041409
  %v816 = vsel %vm815, %v814, %v812
  %s817 = scalar_lea.vmem %s0, 76
  %v818 = vld [vmem:[%s817] sm:$0x4]
  %vm819 = vcmask 1042434
  %v820 = vsel %vm819, %v818, %v816
  %s821 = scalar_lea.vmem %s0, 107
  %v822 = vld [vmem:[%s821] sm:$0x8]
  %vm823 = vcmask 1043459
  %v824 = vsel %vm823, %v822, %v820
  %s825 = scalar_lea.vmem %s0, 138
  %v826 = vld [vmem:[%s825] sm:$0x10]
  %vm827 = vcmask 1044484
  %v828 = vsel %vm827, %v826, %v824
  %s829 = scalar_lea.vmem %s0, 169
  %v830 = vld [vmem:[%s829] sm:$0x20]
  %vm831 = vcmask 1045509
  %v832 = vsel %vm831, %v830, %v828
  %s833 = scalar_lea.vmem %s0, 200
  %v834 = vld [vmem:[%s833] sm:$0x40]
  %vm835 = vcmask 1046534
  %v836 = vsel %vm835, %v834, %v832
  %s837 = scalar_lea.vmem %s0, 231
  %v838 = vld [vmem:[%s837] sm:$0x80]
  %vm839 = vcmask 1047559
  %v840 = vsel %vm839, %v838, %v836
  %841 = vrot.lane.b32.xlu0 %v840, 56
  %v842 = vpop.permute.xlu0 %841
  %vm843 = vcmask 490944
  %844 = vst.msk [vmem:[%s1] sm:$0xff] %vm843, %v842
  %s845 = scalar_lea.vmem %s0, 270
  %v846 = vld [vmem:[%s845] sm:$0x1]
  %s847 = scalar_lea.vmem %s0, 301
  %v848 = vld [vmem:[%s847] sm:$0x2]
  %vm849 = vcmask 1041409
  %v850 = vsel %vm849, %v848, %v846
  %851 = vrot.lane.b32.xlu0 %v850, 56
  %v852 = vpop.permute.xlu0 %851
  %vm853 = vcmask 490944
  %s854 = scalar_lea.vmem %s1, 8
  %855 = vst.msk [vmem:[%s854] sm:$0x3] %vm853, %v852
  %s856 = scalar_lea.vmem %s0, 13
  %v857 = vld [vmem:[%s856] sm:$0x1]
  %s858 = scalar_lea.vmem %s0, 44
  %v859 = vld [vmem:[%s858] sm:$0x2]
  %vm860 = vcmask 1041409
  %v861 = vsel %vm860, %v859, %v857
  %s862 = scalar_lea.vmem %s0, 75
  %v863 = vld [vmem:[%s862] sm:$0x4]
  %vm864 = vcmask 1042434
  %v865 = vsel %vm864, %v863, %v861
  %s866 = scalar_lea.vmem %s0, 106
  %v867 = vld [vmem:[%s866] sm:$0x8]
  %vm868 = vcmask 1043459
  %v869 = vsel %vm868, %v867, %v865
  %s870 = scalar_lea.vmem %s0, 137
  %v871 = vld [vmem:[%s870] sm:$0x10]
  %vm872 = vcmask 1044484
  %v873 = vsel %vm872, %v871, %v869
  %s874 = scalar_lea.vmem %s0, 168
  %v875 = vld [vmem:[%s874] sm:$0x20]
  %vm876 = vcmask 1045509
  %v877 = vsel %vm876, %v875, %v873
  %s878 = scalar_lea.vmem %s0, 199
  %v879 = vld [vmem:[%s878] sm:$0x40]
  %vm880 = vcmask 1046534
  %v881 = vsel %vm880, %v879, %v877
  %s882 = scalar_lea.vmem %s0, 230
  %v883 = vld [vmem:[%s882] sm:$0x80]
  %vm884 = vcmask 1047559
  %v885 = vsel %vm884, %v883, %v881
  %886 = vrot.lane.b32.xlu0 %v885, 52
  %v887 = vpop.permute.xlu0 %886
  %vm888 = vcmask 458144
  %889 = vst.msk [vmem:[%s1] sm:$0xff] %vm888, %v887
  %s890 = scalar_lea.vmem %s0, 269
  %v891 = vld [vmem:[%s890] sm:$0x1]
  %s892 = scalar_lea.vmem %s0, 300
  %v893 = vld [vmem:[%s892] sm:$0x2]
  %vm894 = vcmask 1041409
  %v895 = vsel %vm894, %v893, %v891
  %896 = vrot.lane.b32.xlu0 %v895, 52
  %v897 = vpop.permute.xlu0 %896
  %vm898 = vcmask 458144
  %s899 = scalar_lea.vmem %s1, 8
  %900 = vst.msk [vmem:[%s899] sm:$0x3] %vm898, %v897
  %s901 = scalar_lea.vmem %s0, 12
  %v902 = vld [vmem:[%s901] sm:$0x1]
  %s903 = scalar_lea.vmem %s0, 43
  %v904 = vld [vmem:[%s903] sm:$0x2]
  %vm905 = vcmask 1041409
  %v906 = vsel %vm905, %v904, %v902
  %s907 = scalar_lea.vmem %s0, 74
  %v908 = vld [vmem:[%s907] sm:$0x4]
  %vm909 = vcmask 1042434
  %v910 = vsel %vm909, %v908, %v906
  %s911 = scalar_lea.vmem %s0, 105
  %v912 = vld [vmem:[%s911] sm:$0x8]
  %vm913 = vcmask 1043459
  %v914 = vsel %vm913, %v912, %v910
  %s915 = scalar_lea.vmem %s0, 136
  %v916 = vld [vmem:[%s915] sm:$0x10]
  %vm917 = vcmask 1044484
  %v918 = vsel %vm917, %v916, %v914
  %s919 = scalar_lea.vmem %s0, 167
  %v920 = vld [vmem:[%s919] sm:$0x20]
  %vm921 = vcmask 1045509
  %v922 = vsel %vm921, %v920, %v918
  %s923 = scalar_lea.vmem %s0, 198
  %v924 = vld [vmem:[%s923] sm:$0x40]
  %vm925 = vcmask 1046534
  %v926 = vsel %vm925, %v924, %v922
  %s927 = scalar_lea.vmem %s0, 229
  %v928 = vld [vmem:[%s927] sm:$0x80]
  %vm929 = vcmask 1047559
  %v930 = vsel %vm929, %v928, %v926
  %931 = vrot.lane.b32.xlu0 %v930, 48
  %v932 = vpop.permute.xlu0 %931
  %vm933 = vcmask 425344
  %934 = vst.msk [vmem:[%s1] sm:$0xff] %vm933, %v932
  %s935 = scalar_lea.vmem %s0, 268
  %v936 = vld [vmem:[%s935] sm:$0x1]
  %s937 = scalar_lea.vmem %s0, 299
  %v938 = vld [vmem:[%s937] sm:$0x2]
  %vm939 = vcmask 1041409
  %v940 = vsel %vm939, %v938, %v936
  %941 = vrot.lane.b32.xlu0 %v940, 48
  %v942 = vpop.permute.xlu0 %941
  %vm943 = vcmask 425344
  %s944 = scalar_lea.vmem %s1, 8
  %945 = vst.msk [vmem:[%s944] sm:$0x3] %vm943, %v942
  %s946 = scalar_lea.vmem %s0, 11
  %v947 = vld [vmem:[%s946] sm:$0x1]
  %s948 = scalar_lea.vmem %s0, 42
  %v949 = vld [vmem:[%s948] sm:$0x2]
  %vm950 = vcmask 1041409
  %v951 = vsel %vm950, %v949, %v947
  %s952 = scalar_lea.vmem %s0, 73
  %v953 = vld [vmem:[%s952] sm:$0x4]
  %vm954 = vcmask 1042434
  %v955 = vsel %vm954, %v953, %v951
  %s956 = scalar_lea.vmem %s0, 104
  %v957 = vld [vmem:[%s956] sm:$0x8]
  %vm958 = vcmask 1043459
  %v959 = vsel %vm958, %v957, %v955
  %s960 = scalar_lea.vmem %s0, 135
  %v961 = vld [vmem:[%s960] sm:$0x10]
  %vm962 = vcmask 1044484
  %v963 = vsel %vm962, %v961, %v959
  %s964 = scalar_lea.vmem %s0, 166
  %v965 = vld [vmem:[%s964] sm:$0x20]
  %vm966 = vcmask 1045509
  %v967 = vsel %vm966, %v965, %v963
  %s968 = scalar_lea.vmem %s0, 197
  %v969 = vld [vmem:[%s968] sm:$0x40]
  %vm970 = vcmask 1046534
  %v971 = vsel %vm970, %v969, %v967
  %s972 = scalar_lea.vmem %s0, 228
  %v973 = vld [vmem:[%s972] sm:$0x80]
  %vm974 = vcmask 1047559
  %v975 = vsel %vm974, %v973, %v971
  %976 = vrot.lane.b32.xlu0 %v975, 44
  %v977 = vpop.permute.xlu0 %976
  %vm978 = vcmask 392544
  %979 = vst.msk [vmem:[%s1] sm:$0xff] %vm978, %v977
  %s980 = scalar_lea.vmem %s0, 267
  %v981 = vld [vmem:[%s980] sm:$0x1]
  %s982 = scalar_lea.vmem %s0, 298
  %v983 = vld [vmem:[%s982] sm:$0x2]
  %vm984 = vcmask 1041409
  %v985 = vsel %vm984, %v983, %v981
  %986 = vrot.lane.b32.xlu0 %v985, 44
  %v987 = vpop.permute.xlu0 %986
  %vm988 = vcmask 392544
  %s989 = scalar_lea.vmem %s1, 8
  %990 = vst.msk [vmem:[%s989] sm:$0x3] %vm988, %v987
  %s991 = scalar_lea.vmem %s0, 10
  %v992 = vld [vmem:[%s991] sm:$0x1]
  %s993 = scalar_lea.vmem %s0, 41
  %v994 = vld [vmem:[%s993] sm:$0x2]
  %vm995 = vcmask 1041409
  %v996 = vsel %vm995, %v994, %v992
  %s997 = scalar_lea.vmem %s0, 72
  %v998 = vld [vmem:[%s997] sm:$0x4]
  %vm999 = vcmask 1042434
  %v1000 = vsel %vm999, %v998, %v996
  %s1001 = scalar_lea.vmem %s0, 103
  %v1002 = vld [vmem:[%s1001] sm:$0x8]
  %vm1003 = vcmask 1043459
  %v1004 = vsel %vm1003, %v1002, %v1000
  %s1005 = scalar_lea.vmem %s0, 134
  %v1006 = vld [vmem:[%s1005] sm:$0x10]
  %vm1007 = vcmask 1044484
  %v1008 = vsel %vm1007, %v1006, %v1004
  %s1009 = scalar_lea.vmem %s0, 165
  %v1010 = vld [vmem:[%s1009] sm:$0x20]
  %vm1011 = vcmask 1045509
  %v1012 = vsel %vm1011, %v1010, %v1008
  %s1013 = scalar_lea.vmem %s0, 196
  %v1014 = vld [vmem:[%s1013] sm:$0x40]
  %vm1015 = vcmask 1046534
  %v1016 = vsel %vm1015, %v1014, %v1012
  %s1017 = scalar_lea.vmem %s0, 227
  %v1018 = vld [vmem:[%s1017] sm:$0x80]
  %vm1019 = vcmask 1047559
  %v1020 = vsel %vm1019, %v1018, %v1016
  %1021 = vrot.lane.b32.xlu0 %v1020, 40
  %v1022 = vpop.permute.xlu0 %1021
  %vm1023 = vcmask 359744
  %1024 = vst.msk [vmem:[%s1] sm:$0xff] %vm1023, %v1022
  %s1025 = scalar_lea.vmem %s0, 266
  %v1026 = vld [vmem:[%s1025] sm:$0x1]
  %s1027 = scalar_lea.vmem %s0, 297
  %v1028 = vld [vmem:[%s1027] sm:$0x2]
  %vm1029 = vcmask 1041409
  %v1030 = vsel %vm1029, %v1028, %v1026
  %1031 = vrot.lane.b32.xlu0 %v1030, 40
  %v1032 = vpop.permute.xlu0 %1031
  %vm1033 = vcmask 359744
  %s1034 = scalar_lea.vmem %s1, 8
  %1035 = vst.msk [vmem:[%s1034] sm:$0x3] %vm1033, %v1032
  %s1036 = scalar_lea.vmem %s0, 9
  %v1037 = vld [vmem:[%s1036] sm:$0x1]
  %s1038 = scalar_lea.vmem %s0, 40
  %v1039 = vld [vmem:[%s1038] sm:$0x2]
  %vm1040 = vcmask 1041409
  %v1041 = vsel %vm1040, %v1039, %v1037
  %s1042 = scalar_lea.vmem %s0, 71
  %v1043 = vld [vmem:[%s1042] sm:$0x4]
  %vm1044 = vcmask 1042434
  %v1045 = vsel %vm1044, %v1043, %v1041
  %s1046 = scalar_lea.vmem %s0, 102
  %v1047 = vld [vmem:[%s1046] sm:$0x8]
  %vm1048 = vcmask 1043459
  %v1049 = vsel %vm1048, %v1047, %v1045
  %s1050 = scalar_lea.vmem %s0, 133
  %v1051 = vld [vmem:[%s1050] sm:$0x10]
  %vm1052 = vcmask 1044484
  %v1053 = vsel %vm1052, %v1051, %v1049
  %s1054 = scalar_lea.vmem %s0, 164
  %v1055 = vld [vmem:[%s1054] sm:$0x20]
  %vm1056 = vcmask 1045509
  %v1057 = vsel %vm1056, %v1055, %v1053
  %s1058 = scalar_lea.vmem %s0, 195
  %v1059 = vld [vmem:[%s1058] sm:$0x40]
  %vm1060 = vcmask 1046534
  %v1061 = vsel %vm1060, %v1059, %v1057
  %s1062 = scalar_lea.vmem %s0, 226
  %v1063 = vld [vmem:[%s1062] sm:$0x80]
  %vm1064 = vcmask 1047559
  %v1065 = vsel %vm1064, %v1063, %v1061
  %1066 = vrot.lane.b32.xlu0 %v1065, 36
  %v1067 = vpop.permute.xlu0 %1066
  %vm1068 = vcmask 326944
  %1069 = vst.msk [vmem:[%s1] sm:$0xff] %vm1068, %v1067
  %s1070 = scalar_lea.vmem %s0, 265
  %v1071 = vld [vmem:[%s1070] sm:$0x1]
  %s1072 = scalar_lea.vmem %s0, 296
  %v1073 = vld [vmem:[%s1072] sm:$0x2]
  %vm1074 = vcmask 1041409
  %v1075 = vsel %vm1074, %v1073, %v1071
  %1076 = vrot.lane.b32.xlu0 %v1075, 36
  %v1077 = vpop.permute.xlu0 %1076
  %vm1078 = vcmask 326944
  %s1079 = scalar_lea.vmem %s1, 8
  %1080 = vst.msk [vmem:[%s1079] sm:$0x3] %vm1078, %v1077
  %s1081 = scalar_lea.vmem %s0, 8
  %v1082 = vld [vmem:[%s1081] sm:$0x1]
  %s1083 = scalar_lea.vmem %s0, 39
  %v1084 = vld [vmem:[%s1083] sm:$0x2]
  %vm1085 = vcmask 1041409
  %v1086 = vsel %vm1085, %v1084, %v1082
  %s1087 = scalar_lea.vmem %s0, 70
  %v1088 = vld [vmem:[%s1087] sm:$0x4]
  %vm1089 = vcmask 1042434
  %v1090 = vsel %vm1089, %v1088, %v1086
  %s1091 = scalar_lea.vmem %s0, 101
  %v1092 = vld [vmem:[%s1091] sm:$0x8]
  %vm1093 = vcmask 1043459
  %v1094 = vsel %vm1093, %v1092, %v1090
  %s1095 = scalar_lea.vmem %s0, 132
  %v1096 = vld [vmem:[%s1095] sm:$0x10]
  %vm1097 = vcmask 1044484
  %v1098 = vsel %vm1097, %v1096, %v1094
  %s1099 = scalar_lea.vmem %s0, 163
  %v1100 = vld [vmem:[%s1099] sm:$0x20]
  %vm1101 = vcmask 1045509
  %v1102 = vsel %vm1101, %v1100, %v1098
  %s1103 = scalar_lea.vmem %s0, 194
  %v1104 = vld [vmem:[%s1103] sm:$0x40]
  %vm1105 = vcmask 1046534
  %v1106 = vsel %vm1105, %v1104, %v1102
  %s1107 = scalar_lea.vmem %s0, 225
  %v1108 = vld [vmem:[%s1107] sm:$0x80]
  %vm1109 = vcmask 1047559
  %v1110 = vsel %vm1109, %v1108, %v1106
  %1111 = vrot.lane.b32.xlu0 %v1110, 32
  %v1112 = vpop.permute.xlu0 %1111
  %vm1113 = vcmask 294144
  %1114 = vst.msk [vmem:[%s1] sm:$0xff] %vm1113, %v1112
  %s1115 = scalar_lea.vmem %s0, 264
  %v1116 = vld [vmem:[%s1115] sm:$0x1]
  %s1117 = scalar_lea.vmem %s0, 295
  %v1118 = vld [vmem:[%s1117] sm:$0x2]
  %vm1119 = vcmask 1041409
  %v1120 = vsel %vm1119, %v1118, %v1116
  %1121 = vrot.lane.b32.xlu0 %v1120, 32
  %v1122 = vpop.permute.xlu0 %1121
  %vm1123 = vcmask 294144
  %s1124 = scalar_lea.vmem %s1, 8
  %1125 = vst.msk [vmem:[%s1124] sm:$0x3] %vm1123, %v1122
  %s1126 = scalar_lea.vmem %s0, 7
  %v1127 = vld [vmem:[%s1126] sm:$0x1]
  %s1128 = scalar_lea.vmem %s0, 38
  %v1129 = vld [vmem:[%s1128] sm:$0x2]
  %vm1130 = vcmask 1041409
  %v1131 = vsel %vm1130, %v1129, %v1127
  %s1132 = scalar_lea.vmem %s0, 69
  %v1133 = vld [vmem:[%s1132] sm:$0x4]
  %vm1134 = vcmask 1042434
  %v1135 = vsel %vm1134, %v1133, %v1131
  %s1136 = scalar_lea.vmem %s0, 100
  %v1137 = vld [vmem:[%s1136] sm:$0x8]
  %vm1138 = vcmask 1043459
  %v1139 = vsel %vm1138, %v1137, %v1135
  %s1140 = scalar_lea.vmem %s0, 131
  %v1141 = vld [vmem:[%s1140] sm:$0x10]
  %vm1142 = vcmask 1044484
  %v1143 = vsel %vm1142, %v1141, %v1139
  %s1144 = scalar_lea.vmem %s0, 162
  %v1145 = vld [vmem:[%s1144] sm:$0x20]
  %vm1146 = vcmask 1045509
  %v1147 = vsel %vm1146, %v1145, %v1143
  %s1148 = scalar_lea.vmem %s0, 193
  %v1149 = vld [vmem:[%s1148] sm:$0x40]
  %vm1150 = vcmask 1046534
  %v1151 = vsel %vm1150, %v1149, %v1147
  %s1152 = scalar_lea.vmem %s0, 224
  %v1153 = vld [vmem:[%s1152] sm:$0x80]
  %vm1154 = vcmask 1047559
  %v1155 = vsel %vm1154, %v1153, %v1151
  %1156 = vrot.lane.b32.xlu0 %v1155, 28
  %v1157 = vpop.permute.xlu0 %1156
  %vm1158 = vcmask 261344
  %1159 = vst.msk [vmem:[%s1] sm:$0xff] %vm1158, %v1157
  %s1160 = scalar_lea.vmem %s0, 263
  %v1161 = vld [vmem:[%s1160] sm:$0x1]
  %s1162 = scalar_lea.vmem %s0, 294
  %v1163 = vld [vmem:[%s1162] sm:$0x2]
  %vm1164 = vcmask 1041409
  %v1165 = vsel %vm1164, %v1163, %v1161
  %1166 = vrot.lane.b32.xlu0 %v1165, 28
  %v1167 = vpop.permute.xlu0 %1166
  %vm1168 = vcmask 261344
  %s1169 = scalar_lea.vmem %s1, 8
  %1170 = vst.msk [vmem:[%s1169] sm:$0x3] %vm1168, %v1167
  %s1171 = scalar_lea.vmem %s0, 6
  %v1172 = vld [vmem:[%s1171] sm:$0x1]
  %s1173 = scalar_lea.vmem %s0, 37
  %v1174 = vld [vmem:[%s1173] sm:$0x2]
  %vm1175 = vcmask 1041409
  %v1176 = vsel %vm1175, %v1174, %v1172
  %s1177 = scalar_lea.vmem %s0, 68
  %v1178 = vld [vmem:[%s1177] sm:$0x4]
  %vm1179 = vcmask 1042434
  %v1180 = vsel %vm1179, %v1178, %v1176
  %s1181 = scalar_lea.vmem %s0, 99
  %v1182 = vld [vmem:[%s1181] sm:$0x8]
  %vm1183 = vcmask 1043459
  %v1184 = vsel %vm1183, %v1182, %v1180
  %s1185 = scalar_lea.vmem %s0, 130
  %v1186 = vld [vmem:[%s1185] sm:$0x10]
  %vm1187 = vcmask 1044484
  %v1188 = vsel %vm1187, %v1186, %v1184
  %s1189 = scalar_lea.vmem %s0, 161
  %v1190 = vld [vmem:[%s1189] sm:$0x20]
  %vm1191 = vcmask 1045509
  %v1192 = vsel %vm1191, %v1190, %v1188
  %s1193 = scalar_lea.vmem %s0, 192
  %v1194 = vld [vmem:[%s1193] sm:$0x40]
  %vm1195 = vcmask 1046534
  %v1196 = vsel %vm1195, %v1194, %v1192
  %s1197 = scalar_lea.vmem %s0, 223
  %v1198 = vld [vmem:[%s1197] sm:$0x80]
  %vm1199 = vcmask 1047559
  %v1200 = vsel %vm1199, %v1198, %v1196
  %1201 = vrot.lane.b32.xlu0 %v1200, 24
  %v1202 = vpop.permute.xlu0 %1201
  %vm1203 = vcmask 228544
  %1204 = vst.msk [vmem:[%s1] sm:$0xff] %vm1203, %v1202
  %s1205 = scalar_lea.vmem %s0, 262
  %v1206 = vld [vmem:[%s1205] sm:$0x1]
  %s1207 = scalar_lea.vmem %s0, 293
  %v1208 = vld [vmem:[%s1207] sm:$0x2]
  %vm1209 = vcmask 1041409
  %v1210 = vsel %vm1209, %v1208, %v1206
  %1211 = vrot.lane.b32.xlu0 %v1210, 24
  %v1212 = vpop.permute.xlu0 %1211
  %vm1213 = vcmask 228544
  %s1214 = scalar_lea.vmem %s1, 8
  %1215 = vst.msk [vmem:[%s1214] sm:$0x3] %vm1213, %v1212
  %s1216 = scalar_lea.vmem %s0, 5
  %v1217 = vld [vmem:[%s1216] sm:$0x1]
  %s1218 = scalar_lea.vmem %s0, 36
  %v1219 = vld [vmem:[%s1218] sm:$0x2]
  %vm1220 = vcmask 1041409
  %v1221 = vsel %vm1220, %v1219, %v1217
  %s1222 = scalar_lea.vmem %s0, 67
  %v1223 = vld [vmem:[%s1222] sm:$0x4]
  %vm1224 = vcmask 1042434
  %v1225 = vsel %vm1224, %v1223, %v1221
  %s1226 = scalar_lea.vmem %s0, 98
  %v1227 = vld [vmem:[%s1226] sm:$0x8]
  %vm1228 = vcmask 1043459
  %v1229 = vsel %vm1228, %v1227, %v1225
  %s1230 = scalar_lea.vmem %s0, 129
  %v1231 = vld [vmem:[%s1230] sm:$0x10]
  %vm1232 = vcmask 1044484
  %v1233 = vsel %vm1232, %v1231, %v1229
  %s1234 = scalar_lea.vmem %s0, 160
  %v1235 = vld [vmem:[%s1234] sm:$0x20]
  %vm1236 = vcmask 1045509
  %v1237 = vsel %vm1236, %v1235, %v1233
  %s1238 = scalar_lea.vmem %s0, 191
  %v1239 = vld [vmem:[%s1238] sm:$0x40]
  %vm1240 = vcmask 1046534
  %v1241 = vsel %vm1240, %v1239, %v1237
  %s1242 = scalar_lea.vmem %s0, 222
  %v1243 = vld [vmem:[%s1242] sm:$0x80]
  %vm1244 = vcmask 1047559
  %v1245 = vsel %vm1244, %v1243, %v1241
  %1246 = vrot.lane.b32.xlu0 %v1245, 20
  %v1247 = vpop.permute.xlu0 %1246
  %vm1248 = vcmask 195744
  %1249 = vst.msk [vmem:[%s1] sm:$0xff] %vm1248, %v1247
  %s1250 = scalar_lea.vmem %s0, 261
  %v1251 = vld [vmem:[%s1250] sm:$0x1]
  %s1252 = scalar_lea.vmem %s0, 292
  %v1253 = vld [vmem:[%s1252] sm:$0x2]
  %vm1254 = vcmask 1041409
  %v1255 = vsel %vm1254, %v1253, %v1251
  %1256 = vrot.lane.b32.xlu0 %v1255, 20
  %v1257 = vpop.permute.xlu0 %1256
  %vm1258 = vcmask 195744
  %s1259 = scalar_lea.vmem %s1, 8
  %1260 = vst.msk [vmem:[%s1259] sm:$0x3] %vm1258, %v1257
  %s1261 = scalar_lea.vmem %s0, 4
  %v1262 = vld [vmem:[%s1261] sm:$0x1]
  %s1263 = scalar_lea.vmem %s0, 35
  %v1264 = vld [vmem:[%s1263] sm:$0x2]
  %vm1265 = vcmask 1041409
  %v1266 = vsel %vm1265, %v1264, %v1262
  %s1267 = scalar_lea.vmem %s0, 66
  %v1268 = vld [vmem:[%s1267] sm:$0x4]
  %vm1269 = vcmask 1042434
  %v1270 = vsel %vm1269, %v1268, %v1266
  %s1271 = scalar_lea.vmem %s0, 97
  %v1272 = vld [vmem:[%s1271] sm:$0x8]
  %vm1273 = vcmask 1043459
  %v1274 = vsel %vm1273, %v1272, %v1270
  %s1275 = scalar_lea.vmem %s0, 128
  %v1276 = vld [vmem:[%s1275] sm:$0x10]
  %vm1277 = vcmask 1044484
  %v1278 = vsel %vm1277, %v1276, %v1274
  %s1279 = scalar_lea.vmem %s0, 159
  %v1280 = vld [vmem:[%s1279] sm:$0x20]
  %vm1281 = vcmask 1045509
  %v1282 = vsel %vm1281, %v1280, %v1278
  %s1283 = scalar_lea.vmem %s0, 190
  %v1284 = vld [vmem:[%s1283] sm:$0x40]
  %vm1285 = vcmask 1046534
  %v1286 = vsel %vm1285, %v1284, %v1282
  %s1287 = scalar_lea.vmem %s0, 221
  %v1288 = vld [vmem:[%s1287] sm:$0x80]
  %vm1289 = vcmask 1047559
  %v1290 = vsel %vm1289, %v1288, %v1286
  %1291 = vrot.lane.b32.xlu0 %v1290, 16
  %v1292 = vpop.permute.xlu0 %1291
  %vm1293 = vcmask 162944
  %1294 = vst.msk [vmem:[%s1] sm:$0xff] %vm1293, %v1292
  %s1295 = scalar_lea.vmem %s0, 260
  %v1296 = vld [vmem:[%s1295] sm:$0x1]
  %s1297 = scalar_lea.vmem %s0, 291
  %v1298 = vld [vmem:[%s1297] sm:$0x2]
  %vm1299 = vcmask 1041409
  %v1300 = vsel %vm1299, %v1298, %v1296
  %1301 = vrot.lane.b32.xlu0 %v1300, 16
  %v1302 = vpop.permute.xlu0 %1301
  %vm1303 = vcmask 162944
  %s1304 = scalar_lea.vmem %s1, 8
  %1305 = vst.msk [vmem:[%s1304] sm:$0x3] %vm1303, %v1302
  %s1306 = scalar_lea.vmem %s0, 3
  %v1307 = vld [vmem:[%s1306] sm:$0x1]
  %s1308 = scalar_lea.vmem %s0, 34
  %v1309 = vld [vmem:[%s1308] sm:$0x2]
  %vm1310 = vcmask 1041409
  %v1311 = vsel %vm1310, %v1309, %v1307
  %s1312 = scalar_lea.vmem %s0, 65
  %v1313 = vld [vmem:[%s1312] sm:$0x4]
  %vm1314 = vcmask 1042434
  %v1315 = vsel %vm1314, %v1313, %v1311
  %s1316 = scalar_lea.vmem %s0, 96
  %v1317 = vld [vmem:[%s1316] sm:$0x8]
  %vm1318 = vcmask 1043459
  %v1319 = vsel %vm1318, %v1317, %v1315
  %s1320 = scalar_lea.vmem %s0, 127
  %v1321 = vld [vmem:[%s1320] sm:$0x10]
  %vm1322 = vcmask 1044484
  %v1323 = vsel %vm1322, %v1321, %v1319
  %s1324 = scalar_lea.vmem %s0, 158
  %v1325 = vld [vmem:[%s1324] sm:$0x20]
  %vm1326 = vcmask 1045509
  %v1327 = vsel %vm1326, %v1325, %v1323
  %s1328 = scalar_lea.vmem %s0, 189
  %v1329 = vld [vmem:[%s1328] sm:$0x40]
  %vm1330 = vcmask 1046534
  %v1331 = vsel %vm1330, %v1329, %v1327
  %s1332 = scalar_lea.vmem %s0, 220
  %v1333 = vld [vmem:[%s1332] sm:$0x80]
  %vm1334 = vcmask 1047559
  %v1335 = vsel %vm1334, %v1333, %v1331
  %1336 = vrot.lane.b32.xlu0 %v1335, 12
  %v1337 = vpop.permute.xlu0 %1336
  %vm1338 = vcmask 130144
  %1339 = vst.msk [vmem:[%s1] sm:$0xff] %vm1338, %v1337
  %s1340 = scalar_lea.vmem %s0, 259
  %v1341 = vld [vmem:[%s1340] sm:$0x1]
  %s1342 = scalar_lea.vmem %s0, 290
  %v1343 = vld [vmem:[%s1342] sm:$0x2]
  %vm1344 = vcmask 1041409
  %v1345 = vsel %vm1344, %v1343, %v1341
  %s1346 = scalar_lea.vmem %s0, 321
  %v1347 = vld [vmem:[%s1346] sm:$0x4]
  %vm1348 = vcmask 1042434
  %v1349 = vsel %vm1348, %v1347, %v1345
  %1350 = vrot.lane.b32.xlu0 %v1349, 12
  %v1351 = vpop.permute.xlu0 %1350
  %vm1352 = vcmask 130144
  %s1353 = scalar_lea.vmem %s1, 8
  %1354 = vst.msk [vmem:[%s1353] sm:$0x7] %vm1352, %v1351
  %s1355 = scalar_lea.vmem %s0, 2
  %v1356 = vld [vmem:[%s1355] sm:$0x1]
  %s1357 = scalar_lea.vmem %s0, 33
  %v1358 = vld [vmem:[%s1357] sm:$0x2]
  %vm1359 = vcmask 1041409
  %v1360 = vsel %vm1359, %v1358, %v1356
  %s1361 = scalar_lea.vmem %s0, 64
  %v1362 = vld [vmem:[%s1361] sm:$0x4]
  %vm1363 = vcmask 1042434
  %v1364 = vsel %vm1363, %v1362, %v1360
  %s1365 = scalar_lea.vmem %s0, 95
  %v1366 = vld [vmem:[%s1365] sm:$0x8]
  %vm1367 = vcmask 1043459
  %v1368 = vsel %vm1367, %v1366, %v1364
  %s1369 = scalar_lea.vmem %s0, 126
  %v1370 = vld [vmem:[%s1369] sm:$0x10]
  %vm1371 = vcmask 1044484
  %v1372 = vsel %vm1371, %v1370, %v1368
  %s1373 = scalar_lea.vmem %s0, 157
  %v1374 = vld [vmem:[%s1373] sm:$0x20]
  %vm1375 = vcmask 1045509
  %v1376 = vsel %vm1375, %v1374, %v1372
  %s1377 = scalar_lea.vmem %s0, 188
  %v1378 = vld [vmem:[%s1377] sm:$0x40]
  %vm1379 = vcmask 1046534
  %v1380 = vsel %vm1379, %v1378, %v1376
  %s1381 = scalar_lea.vmem %s0, 219
  %v1382 = vld [vmem:[%s1381] sm:$0x80]
  %vm1383 = vcmask 1047559
  %v1384 = vsel %vm1383, %v1382, %v1380
  %1385 = vrot.lane.b32.xlu0 %v1384, 8
  %v1386 = vpop.permute.xlu0 %1385
  %vm1387 = vcmask 97344
  %1388 = vst.msk [vmem:[%s1] sm:$0xff] %vm1387, %v1386
  %s1389 = scalar_lea.vmem %s0, 258
  %v1390 = vld [vmem:[%s1389] sm:$0x1]
  %s1391 = scalar_lea.vmem %s0, 289
  %v1392 = vld [vmem:[%s1391] sm:$0x2]
  %vm1393 = vcmask 1041409
  %v1394 = vsel %vm1393, %v1392, %v1390
  %s1395 = scalar_lea.vmem %s0, 320
  %v1396 = vld [vmem:[%s1395] sm:$0x4]
  %vm1397 = vcmask 1042434
  %v1398 = vsel %vm1397, %v1396, %v1394
  %1399 = vrot.lane.b32.xlu0 %v1398, 8
  %v1400 = vpop.permute.xlu0 %1399
  %vm1401 = vcmask 97344
  %s1402 = scalar_lea.vmem %s1, 8
  %1403 = vst.msk [vmem:[%s1402] sm:$0x7] %vm1401, %v1400
  %s1404 = scalar_lea.vmem %s0, 1
  %v1405 = vld [vmem:[%s1404] sm:$0x1]
  %s1406 = scalar_lea.vmem %s0, 32
  %v1407 = vld [vmem:[%s1406] sm:$0x2]
  %vm1408 = vcmask 1041409
  %v1409 = vsel %vm1408, %v1407, %v1405
  %s1410 = scalar_lea.vmem %s0, 63
  %v1411 = vld [vmem:[%s1410] sm:$0x4]
  %vm1412 = vcmask 1042434
  %v1413 = vsel %vm1412, %v1411, %v1409
  %s1414 = scalar_lea.vmem %s0, 94
  %v1415 = vld [vmem:[%s1414] sm:$0x8]
  %vm1416 = vcmask 1043459
  %v1417 = vsel %vm1416, %v1415, %v1413
  %s1418 = scalar_lea.vmem %s0, 125
  %v1419 = vld [vmem:[%s1418] sm:$0x10]
  %vm1420 = vcmask 1044484
  %v1421 = vsel %vm1420, %v1419, %v1417
  %s1422 = scalar_lea.vmem %s0, 156
  %v1423 = vld [vmem:[%s1422] sm:$0x20]
  %vm1424 = vcmask 1045509
  %v1425 = vsel %vm1424, %v1423, %v1421
  %s1426 = scalar_lea.vmem %s0, 187
  %v1427 = vld [vmem:[%s1426] sm:$0x40]
  %vm1428 = vcmask 1046534
  %v1429 = vsel %vm1428, %v1427, %v1425
  %s1430 = scalar_lea.vmem %s0, 218
  %v1431 = vld [vmem:[%s1430] sm:$0x80]
  %vm1432 = vcmask 1047559
  %v1433 = vsel %vm1432, %v1431, %v1429
  %1434 = vrot.lane.b32.xlu0 %v1433, 4
  %v1435 = vpop.permute.xlu0 %1434
  %vm1436 = vcmask 64544
  %1437 = vst.msk [vmem:[%s1] sm:$0xff] %vm1436, %v1435
  %s1438 = scalar_lea.vmem %s0, 257
  %v1439 = vld [vmem:[%s1438] sm:$0x1]
  %s1440 = scalar_lea.vmem %s0, 288
  %v1441 = vld [vmem:[%s1440] sm:$0x2]
  %vm1442 = vcmask 1041409
  %v1443 = vsel %vm1442, %v1441, %v1439
  %s1444 = scalar_lea.vmem %s0, 319
  %v1445 = vld [vmem:[%s1444] sm:$0x4]
  %vm1446 = vcmask 1042434
  %v1447 = vsel %vm1446, %v1445, %v1443
  %1448 = vrot.lane.b32.xlu0 %v1447, 4
  %v1449 = vpop.permute.xlu0 %1448
  %vm1450 = vcmask 64544
  %s1451 = scalar_lea.vmem %s1, 8
  %1452 = vst.msk [vmem:[%s1451] sm:$0x7] %vm1450, %v1449

// kernel: leaky_sep_conv_forward.2
$region0: #{leaky_sep_conv_forward.2}
  #allocation0 [shape = 'u32[]', space=smem, size = 0x4, offset = 0x4, fixed_abs, tag = 'smem constant byte address 0x4 - core index']
  #allocation1 [shape = 'u32[144,128]{1,0:T(1,128)}', space=vmem, size = 0x12000, scoped, tag = 'internal scratch']
  #allocation2 [shape = 'f32[10,1408]{1,0:T(8,128)}', space=vmem, size = 0x16000, scoped, tag = 'scratch operand']
  %s0 = inlined_call_operand.vmem [shape: f32[2,8,1408], index: 0, kind: input, shape index: {}]
  %s1 = inlined_call_operand.vmem [shape: f32[1,1408], index: 1, kind: input, shape index: {}]
  %s2 = inlined_call_operand.vmem [shape: f32[1,1408], index: 2, kind: input, shape index: {}]
  %s3 = inlined_call_operand.vmem [shape: f32[1,1408], index: 3, kind: input, shape index: {}]
  %s4 = inlined_call_operand.vmem [shape: f32[9,1408], index: 4, kind: input, shape index: {}]
  %s5 = inlined_call_operand.vmem [shape: f32[3,1408], index: 5, kind: input, shape index: {}]
  %s6 = inlined_call_operand.vmem [shape: f32[7,1408], index: 6, kind: input, shape index: {}]
  %s7 = inlined_call_operand.vmem [shape: f32[2,8,1408], index: 7, kind: output, shape index: {0}]
  %s8 = inlined_call_operand.vmem [shape: f32[2,2,1408], index: 8, kind: output, shape index: {1}]
  %9 = xla_tuple %s7, %s8
  %s10 = sld [smem:[#allocation0]]
  $region69: #{leaky_sep_conv_forward.2} parent=0
    _
  %s12 = ssub.s32 1, %s10
  %s13 = scalar_select 0, %s12, %s10
  loop: start=0, step=1, limit=4
  $region2: #{leaky_sep_conv_forward.2} parent=0 // loop_pre_header
    _
  $region3: #{leaky_sep_conv_forward.2} parent=0 // loop_header
    %s15 = sphi 0, %s19
    %p16 = scmp.ge.s32.totalorder %s15, 4
    %s25 = sphi 0, %s27
    %s28 = sphi 0, %s25
    %s29 = sphi 0, %s28
    %s45 = sphi 0, %s29
    %s49 = sphi 0, %s49
    %s51 = sphi 0, %s49
    %s52 = sphi 0, %s51
    %s66 = sphi 0, %s52
    %s70 = sphi 0, %s70
    %s72 = sphi 0, %s70
    %s73 = sphi 0, %s72
    %s87 = sphi 0, %s73
    %s91 = sphi 0, %s91
    %s93 = sphi 0, %s91
    %s94 = sphi 0, %s93
    %s108 = sphi 0, %s94
    %s112 = sphi 0, %s112
    %s114 = sphi 0, %s112
    %s115 = sphi 0, %s114
    %s129 = sphi 0, %s115
    %s133 = sphi 0, %s133
    %s135 = sphi 0, %s133
    %s136 = sphi 0, %s135
    %s150 = sphi 0, %s136
    %s154 = sphi 0, %s154
    %s156 = sphi 0, %s154
    %s157 = sphi 0, %s156
    %s171 = sphi 0, %s157
    %s177 = sphi 0, %s179
    %s180 = sphi 0, %s177
    %s181 = sphi 0, %s180
    %s197 = sphi 0, %s181
    %s203 = sphi 0, %s205
    %s206 = sphi 0, %s203
    %s207 = sphi 0, %s206
    %s223 = sphi 0, %s207
  $region4: #{leaky_sep_conv_forward.2} parent=0 // loop_header_branch
    %18 = sbr.rel (%p16) target = $region8
  $region5: #{leaky_sep_conv_forward.2} parent=0 // loop_body
    %s20 = ssub.s32 %s15, 1
    %s21 = ssub.s32 %s15, 2
    %s22 = sadd.s32 %s15, 1
    %s23 = ssub.s32 %s15, %s22
    %p24 = scmp.eq.s32.totalorder %s23, 0
    %s26 = sadd.s32 %s25, 1
    %s27 = scalar_select %p24, %s25, %s26
    %p30 = pneg %p24
    %p31 = scmp.eq.s32.totalorder %s15, 1
    %p32 = por %p30, %p31
    %p33 = scmp.ne.s32.totalorder %s25, %s28
    %p34 = scmp.eq.s32.totalorder %s15, 0
    %p35 = por %p33, %p34
    %p36 = scmp.ne.s32.totalorder %s25, %s28
    %p37 = scmp.eq.s32.totalorder %s20, 1
    %p38 = por %p36, %p37
    %p39 = scmp.ne.s32.totalorder %s28, %s29
    %p40 = scmp.eq.s32.totalorder %s20, 0
    %p41 = por %p39, %p40
    %p42 = scmp.ne.s32.totalorder %s28, %s29
    %p43 = scmp.eq.s32.totalorder %s21, 1
    %p44 = por %p42, %p43
    %p46 = scmp.ne.s32.totalorder %s29, %s45
    %p47 = scmp.eq.s32.totalorder %s21, 0
    %p48 = por %p46, %p47
    %s50 = sadd.s32 %s49, 1
    %p53 = scmp.eq.s32.totalorder %s15, 1
    %p54 = scmp.ne.s32.totalorder %s49, %s51
    %p55 = scmp.eq.s32.totalorder %s15, 0
    %p56 = por %p54, %p55
    %p57 = scmp.ne.s32.totalorder %s49, %s51
    %p58 = scmp.eq.s32.totalorder %s20, 1
    %p59 = por %p57, %p58
    %p60 = scmp.ne.s32.totalorder %s51, %s52
    %p61 = scmp.eq.s32.totalorder %s20, 0
    %p62 = por %p60, %p61
    %p63 = scmp.ne.s32.totalorder %s51, %s52
    %p64 = scmp.eq.s32.totalorder %s21, 1
    %p65 = por %p63, %p64
    %p67 = scmp.ne.s32.totalorder %s52, %s66
    %p68 = scmp.eq.s32.totalorder %s21, 0
    %p69 = por %p67, %p68
    %s71 = sadd.s32 %s70, 1
    %p74 = scmp.eq.s32.totalorder %s15, 1
    %p75 = scmp.ne.s32.totalorder %s70, %s72
    %p76 = scmp.eq.s32.totalorder %s15, 0
    %p77 = por %p75, %p76
    %p78 = scmp.ne.s32.totalorder %s70, %s72
    %p79 = scmp.eq.s32.totalorder %s20, 1
    %p80 = por %p78, %p79
    %p81 = scmp.ne.s32.totalorder %s72, %s73
    %p82 = scmp.eq.s32.totalorder %s20, 0
    %p83 = por %p81, %p82
    %p84 = scmp.ne.s32.totalorder %s72, %s73
    %p85 = scmp.eq.s32.totalorder %s21, 1
    %p86 = por %p84, %p85
    %p88 = scmp.ne.s32.totalorder %s73, %s87
    %p89 = scmp.eq.s32.totalorder %s21, 0
    %p90 = por %p88, %p89
    %s92 = sadd.s32 %s91, 1
    %p95 = scmp.eq.s32.totalorder %s15, 1
    %p96 = scmp.ne.s32.totalorder %s91, %s93
    %p97 = scmp.eq.s32.totalorder %s15, 0
    %p98 = por %p96, %p97
    %p99 = scmp.ne.s32.totalorder %s91, %s93
    %p100 = scmp.eq.s32.totalorder %s20, 1
    %p101 = por %p99, %p100
    %p102 = scmp.ne.s32.totalorder %s93, %s94
    %p103 = scmp.eq.s32.totalorder %s20, 0
    %p104 = por %p102, %p103
    %p105 = scmp.ne.s32.totalorder %s93, %s94
    %p106 = scmp.eq.s32.totalorder %s21, 1
    %p107 = por %p105, %p106
    %p109 = scmp.ne.s32.totalorder %s94, %s108
    %p110 = scmp.eq.s32.totalorder %s21, 0
    %p111 = por %p109, %p110
    %s113 = sadd.s32 %s112, 1
    %p116 = scmp.eq.s32.totalorder %s15, 1
    %p117 = scmp.ne.s32.totalorder %s112, %s114
    %p118 = scmp.eq.s32.totalorder %s15, 0
    %p119 = por %p117, %p118
    %p120 = scmp.ne.s32.totalorder %s112, %s114
    %p121 = scmp.eq.s32.totalorder %s20, 1
    %p122 = por %p120, %p121
    %p123 = scmp.ne.s32.totalorder %s114, %s115
    %p124 = scmp.eq.s32.totalorder %s20, 0
    %p125 = por %p123, %p124
    %p126 = scmp.ne.s32.totalorder %s114, %s115
    %p127 = scmp.eq.s32.totalorder %s21, 1
    %p128 = por %p126, %p127
    %p130 = scmp.ne.s32.totalorder %s115, %s129
    %p131 = scmp.eq.s32.totalorder %s21, 0
    %p132 = por %p130, %p131
    %s134 = sadd.s32 %s133, 1
    %p137 = scmp.eq.s32.totalorder %s15, 1
    %p138 = scmp.ne.s32.totalorder %s133, %s135
    %p139 = scmp.eq.s32.totalorder %s15, 0
    %p140 = por %p138, %p139
    %p141 = scmp.ne.s32.totalorder %s133, %s135
    %p142 = scmp.eq.s32.totalorder %s20, 1
    %p143 = por %p141, %p142
    %p144 = scmp.ne.s32.totalorder %s135, %s136
    %p145 = scmp.eq.s32.totalorder %s20, 0
    %p146 = por %p144, %p145
    %p147 = scmp.ne.s32.totalorder %s135, %s136
    %p148 = scmp.eq.s32.totalorder %s21, 1
    %p149 = por %p147, %p148
    %p151 = scmp.ne.s32.totalorder %s136, %s150
    %p152 = scmp.eq.s32.totalorder %s21, 0
    %p153 = por %p151, %p152
    %s155 = sadd.s32 %s154, 1
    %p158 = scmp.eq.s32.totalorder %s15, 1
    %p159 = scmp.ne.s32.totalorder %s154, %s156
    %p160 = scmp.eq.s32.totalorder %s15, 0
    %p161 = por %p159, %p160
    %p162 = scmp.ne.s32.totalorder %s154, %s156
    %p163 = scmp.eq.s32.totalorder %s20, 1
    %p164 = por %p162, %p163
    %p165 = scmp.ne.s32.totalorder %s156, %s157
    %p166 = scmp.eq.s32.totalorder %s20, 0
    %p167 = por %p165, %p166
    %p168 = scmp.ne.s32.totalorder %s156, %s157
    %p169 = scmp.eq.s32.totalorder %s21, 1
    %p170 = por %p168, %p169
    %p172 = scmp.ne.s32.totalorder %s157, %s171
    %p173 = scmp.eq.s32.totalorder %s21, 0
    %p174 = por %p172, %p173
    %s175 = ssub.s32 %s15, %s22
    %p176 = scmp.eq.s32.totalorder %s175, 0
    %s178 = sadd.s32 %s177, 1
    %s179 = scalar_select %p176, %s177, %s178
    %p182 = pneg %p176
    %p183 = scmp.eq.s32.totalorder %s15, 1
    %p184 = por %p182, %p183
    %p185 = scmp.ne.s32.totalorder %s177, %s180
    %p186 = scmp.eq.s32.totalorder %s15, 0
    %p187 = por %p185, %p186
    %p188 = scmp.ne.s32.totalorder %s177, %s180
    %p189 = scmp.eq.s32.totalorder %s20, 1
    %p190 = por %p188, %p189
    %p191 = scmp.ne.s32.totalorder %s180, %s181
    %p192 = scmp.eq.s32.totalorder %s20, 0
    %p193 = por %p191, %p192
    %p194 = scmp.ne.s32.totalorder %s180, %s181
    %p195 = scmp.eq.s32.totalorder %s21, 1
    %p196 = por %p194, %p195
    %p198 = scmp.ne.s32.totalorder %s181, %s197
    %p199 = scmp.eq.s32.totalorder %s21, 0
    %p200 = por %p198, %p199
    %s201 = ssub.s32 %s15, %s22
    %p202 = scmp.eq.s32.totalorder %s201, 0
    %s204 = sadd.s32 %s203, 1
    %s205 = scalar_select %p202, %s203, %s204
    %p208 = pneg %p202
    %p209 = scmp.eq.s32.totalorder %s15, 1
    %p210 = por %p208, %p209
    %p211 = scmp.ne.s32.totalorder %s203, %s206
    %p212 = scmp.eq.s32.totalorder %s15, 0
    %p213 = por %p211, %p212
    %p214 = scmp.ne.s32.totalorder %s203, %s206
    %p215 = scmp.eq.s32.totalorder %s20, 1
    %p216 = por %p214, %p215
    %p217 = scmp.ne.s32.totalorder %s206, %s207
    %p218 = scmp.eq.s32.totalorder %s20, 0
    %p219 = por %p217, %p218
    %p220 = scmp.ne.s32.totalorder %s206, %s207
    %p221 = scmp.eq.s32.totalorder %s21, 1
    %p222 = por %p220, %p221
    %p224 = scmp.ne.s32.totalorder %s207, %s223
    %p225 = scmp.eq.s32.totalorder %s21, 0
    %p226 = por %p224, %p225
    %p227 = scmp.le.s32.totalorder 1, %s15
    %p228 = scmp.lt.s32.totalorder %s15, 3
    %p229 = pnand %p227, %p228
    %p230 = pneg %p229
    // Predicated region
    $region9: #{leaky_sep_conv_forward.2} parent=5 // pred_check
      _
    $region10: #{leaky_sep_conv_forward.2} parent=5 // pred_check_branch
      %232 = sbr.rel (%p229) target = $region12
    $region11: #{leaky_sep_conv_forward.2} parent=5 // pred_region
      %s233 = ssub.s32 %s15, 1
      // Predicated region
      $region13: #{leaky_sep_conv_forward.2} parent=11 // pred_check
        %p234 = pneg %p62
      $region14: #{leaky_sep_conv_forward.2} parent=11 // pred_check_branch
        %236 = sbr.rel (%p234) target = $region16
      $region15: #{leaky_sep_conv_forward.2} parent=11 // pred_region
        _
      $region16: #{leaky_sep_conv_forward.2} parent=11 // pred_fallthru
        _
      // Predicated region
      $region17: #{leaky_sep_conv_forward.2} parent=11 // pred_check
        %p237 = pneg %p83
      $region18: #{leaky_sep_conv_forward.2} parent=11 // pred_check_branch
        %239 = sbr.rel (%p237) target = $region20
      $region19: #{leaky_sep_conv_forward.2} parent=11 // pred_region
        _
      $region20: #{leaky_sep_conv_forward.2} parent=11 // pred_fallthru
        _
      // Predicated region
      $region21: #{leaky_sep_conv_forward.2} parent=11 // pred_check
        %p240 = pneg %p104
      $region22: #{leaky_sep_conv_forward.2} parent=11 // pred_check_branch
        %242 = sbr.rel (%p240) target = $region24
      $region23: #{leaky_sep_conv_forward.2} parent=11 // pred_region
        _
      $region24: #{leaky_sep_conv_forward.2} parent=11 // pred_fallthru
        _
      // Predicated region
      $region25: #{leaky_sep_conv_forward.2} parent=11 // pred_check
        %p243 = pneg %p125
      $region26: #{leaky_sep_conv_forward.2} parent=11 // pred_check_branch
        %245 = sbr.rel (%p243) target = $region28
      $region27: #{leaky_sep_conv_forward.2} parent=11 // pred_region
        _
      $region28: #{leaky_sep_conv_forward.2} parent=11 // pred_fallthru
        _
      // Predicated region
      $region29: #{leaky_sep_conv_forward.2} parent=11 // pred_check
        %p246 = pneg %p146
      $region30: #{leaky_sep_conv_forward.2} parent=11 // pred_check_branch
        %248 = sbr.rel (%p246) target = $region32
      $region31: #{leaky_sep_conv_forward.2} parent=11 // pred_region
        _
      $region32: #{leaky_sep_conv_forward.2} parent=11 // pred_fallthru
        _
      // Predicated region
      $region33: #{leaky_sep_conv_forward.2} parent=11 // pred_check
        %p249 = pneg %p167
      $region34: #{leaky_sep_conv_forward.2} parent=11 // pred_check_branch
        %251 = sbr.rel (%p249) target = $region36
      $region35: #{leaky_sep_conv_forward.2} parent=11 // pred_region
        _
      $region36: #{leaky_sep_conv_forward.2} parent=11 // pred_fallthru
        _
    $region12: #{leaky_sep_conv_forward.2} parent=5 // pred_fallthru
      _
    %p252 = scmp.lt.s32.totalorder %s15, 2
    // Predicated region
    $region37: #{leaky_sep_conv_forward.2} parent=5 // pred_check
      %p253 = pneg %p252
    $region38: #{leaky_sep_conv_forward.2} parent=5 // pred_check_branch
      %255 = sbr.rel (%p253) target = $region40
    $region39: #{leaky_sep_conv_forward.2} parent=5 // pred_region
      // Predicated region
      $region41: #{leaky_sep_conv_forward.2} parent=39 // pred_check
        %p256 = pneg %p35
      $region42: #{leaky_sep_conv_forward.2} parent=39 // pred_check_branch
        %258 = sbr.rel (%p256) target = $region44
      $region43: #{leaky_sep_conv_forward.2} parent=39 // pred_region
        %p259 = scmp.lt.s32.totalorder %s15, 1
        %s260 = scalar_select %p259, %s15, 1
        %s261 = smul.addr %s260, 11
        %s262 = smul.addr %s261, 8
        %s263 = scalar_lea.vmem %s0, %s262
      $region44: #{leaky_sep_conv_forward.2} parent=39 // pred_fallthru
        _
    $region40: #{leaky_sep_conv_forward.2} parent=5 // pred_fallthru
      _
    %p264 = scmp.le.s32.totalorder 1, %s15
    %p265 = scmp.lt.s32.totalorder %s15, 3
    %p266 = pnand %p264, %p265
    %p267 = pneg %p266
    // Predicated region
    $region45: #{leaky_sep_conv_forward.2} parent=5 // pred_check
      _
    $region46: #{leaky_sep_conv_forward.2} parent=5 // pred_check_branch
      %269 = sbr.rel (%p266) target = $region48
    $region47: #{leaky_sep_conv_forward.2} parent=5 // pred_region
      %s270 = ssub.s32 %s15, 1
      %p271 = scmp.lt.s32.totalorder %s20, 1
      %s272 = scalar_select %p271, %s20, 1
      %s273 = smul.addr %s272, 11
      %s274 = smul.addr %s273, 8
      %s275 = scalar_lea.vmem %s0, %s274
      %p276 = pneg %p41
      %p277 = pneg %p38
      %p278 = pneg %p62
      %p279 = pneg %p59
      %p280 = pneg %p83
      %p281 = pneg %p80
      %p282 = pneg %p104
      %p283 = pneg %p101
      %p284 = pneg %p125
      %p285 = pneg %p122
      %p286 = pneg %p146
      %p287 = pneg %p143
      %p288 = pneg %p167
      %p289 = pneg %p164
      %p290 = pneg %p193
      %p291 = pneg %p190
      %p292 = scmp.lt.s32.totalorder %s20, 1
      %s293 = scalar_select %p292, %s20, 1
      %s294 = smul.addr %s293, 11
      %s295 = smul.addr %s294, 8
      %s296 = scalar_lea.vmem %s7, %s295
      %p297 = pneg %p219
      %p298 = pneg %p216
      %p299 = scmp.lt.s32.totalorder %s20, 1
      %s300 = scalar_select %p299, %s20, 1
      %s301 = smul.addr %s300, 11
      %s302 = smul.addr %s301, 2
      %s303 = scalar_lea.vmem %s8, %s302
      %p304 = scmp.lt.s32.totalorder %s20, 1
      %s305 = scalar_select %p304, %s20, 1
      %s306 = smul.addr %s305, 11
      %s307 = smul.addr %s306, 8
      %s308 = scalar_lea.vmem %s0, %s307
      %p309 = scmp.lt.s32.totalorder %s20, 1
      %s310 = scalar_select %p309, %s20, 1
      %s311 = smul.addr %s310, 11
      %s312 = smul.addr %s311, 8
      %s313 = scalar_lea.vmem %s7, %s312
      %p314 = scmp.lt.s32.totalorder %s20, 1
      %s315 = scalar_select %p314, %s20, 1
      %s316 = smul.addr %s315, 11
      %s317 = smul.addr %s316, 2
      %s318 = scalar_lea.vmem %s8, %s317
      %319 = vst [vmem:[#allocation2] ss:$8 sm:$0xf] 0.0
      %320 = vst [vmem:[#allocation2] ss:$8 sm:$0xf0] 0.0
      %v321 = vlaneseq
      %vm322 = vcmp.ge.s32.totalorder %v321, 0
      %vm323 = vcmp.lt.s32.totalorder %v321, 384
      %vm324 = vmand %vm322, %vm323
      %s325 = scalar_lea.vmem [#allocation2], 64
      %326 = vst.msk [vmem:[%s325] ss:$8 sm:$0x7] %vm324, 0.0
      %327 = vst.msk [vmem:[%s325] ss:$8 sm:$0x0] %vm324, 0.0
      %s328 = scalar_lea.vmem [#allocation2], 89
      %329 = vst [vmem:[%s328] ss:$8 sm:$0xf] 0.0
      %330 = vst [vmem:[%s328] ss:$8 sm:$0xf0] 0.0
      %s331 = scalar_lea.vmem [#allocation2], 153
      %332 = vst.msk [vmem:[%s331] ss:$8 sm:$0x7] %vm324, 0.0
      %333 = vst.msk [vmem:[%s331] ss:$8 sm:$0x0] %vm324, 0.0
      %v334 = vld [vmem:[%s308] sm:$0xff]
      %v335 = vld [vmem:[%s308 + $0x8] sm:$0xff]
      %v336 = vld [vmem:[%s308 + $0x10] sm:$0xff]
      %v337 = vld [vmem:[%s308 + $0x18] sm:$0xff]
      %v338 = vld [vmem:[%s308 + $0x20] sm:$0xff]
      %v339 = vld [vmem:[%s308 + $0x28] sm:$0xff]
      %v340 = vld [vmem:[%s308 + $0x30] sm:$0xff]
      %v341 = vld [vmem:[%s308 + $0x38] sm:$0xff]
      %v342 = vld [vmem:[%s308 + $0x40] sm:$0xff]
      %v343 = vld [vmem:[%s308 + $0x48] sm:$0xff]
      %v344 = vld [vmem:[%s308 + $0x50] sm:$0xff]
      %v345 = vld [vmem:[%s1] sm:$0xff]
      %v346 = vld [vmem:[%s1 + $0x8] sm:$0x7]
      %v349 = vlaneseq
      %v350 = vshrl.u32 %v349, 7
      %v351 = vsub.s32 0, %v350
      %v352 = vrot.slane %v345, %v351
      %v353 = vlaneseq
      %v354 = vshrl.u32 %v353, 7
      %v355 = vsub.s32 1, %v354
      %v356 = vrot.slane %v345, %v355
      %v357 = vlaneseq
      %v358 = vshrl.u32 %v357, 7
      %v359 = vsub.s32 2, %v358
      %v360 = vrot.slane %v345, %v359
      %v361 = vlaneseq
      %v362 = vshrl.u32 %v361, 7
      %v363 = vsub.s32 3, %v362
      %v364 = vrot.slane %v345, %v363
      %v365 = vlaneseq
      %v366 = vshrl.u32 %v365, 7
      %v367 = vsub.s32 4, %v366
      %v368 = vrot.slane %v345, %v367
      %v369 = vlaneseq
      %v370 = vshrl.u32 %v369, 7
      %v371 = vsub.s32 5, %v370
      %v372 = vrot.slane %v345, %v371
      %v373 = vlaneseq
      %v374 = vshrl.u32 %v373, 7
      %v375 = vsub.s32 6, %v374
      %v376 = vrot.slane %v345, %v375
      %v377 = vlaneseq
      %v378 = vshrl.u32 %v377, 7
      %v379 = vsub.s32 7, %v378
      %v380 = vrot.slane %v345, %v379
      %v381 = vlaneseq
      %v382 = vshrl.u32 %v381, 7
      %v383 = vsub.s32 0, %v382
      %v384 = vrot.slane %v346, %v383
      %v385 = vlaneseq
      %v386 = vshrl.u32 %v385, 7
      %v387 = vsub.s32 1, %v386
      %v388 = vrot.slane %v346, %v387
      %v389 = vlaneseq
      %v390 = vshrl.u32 %v389, 7
      %v391 = vsub.s32 2, %v390
      %v392 = vrot.slane %v346, %v391
      %v404 = vmul.f32 %v334, %v352
      %v405 = vmul.f32 %v335, %v356
      %v406 = vmul.f32 %v336, %v360
      %v407 = vmul.f32 %v337, %v364
      %v408 = vmul.f32 %v338, %v368
      %v409 = vmul.f32 %v339, %v372
      %v410 = vmul.f32 %v340, %v376
      %v411 = vmul.f32 %v341, %v380
      %v412 = vmul.f32 %v342, %v384
      %v413 = vmul.f32 %v343, %v388
      %v414 = vmul.f32 %v344, %v392
      %v415 = vld [vmem:[%s2] sm:$0xff]
      %v416 = vld [vmem:[%s2 + $0x8] sm:$0x7]
      %v419 = vlaneseq
      %v420 = vshrl.u32 %v419, 7
      %v421 = vsub.s32 0, %v420
      %v422 = vrot.slane %v415, %v421
      %v423 = vlaneseq
      %v424 = vshrl.u32 %v423, 7
      %v425 = vsub.s32 1, %v424
      %v426 = vrot.slane %v415, %v425
      %v427 = vlaneseq
      %v428 = vshrl.u32 %v427, 7
      %v429 = vsub.s32 2, %v428
      %v430 = vrot.slane %v415, %v429
      %v431 = vlaneseq
      %v432 = vshrl.u32 %v431, 7
      %v433 = vsub.s32 3, %v432
      %v434 = vrot.slane %v415, %v433
      %v435 = vlaneseq
      %v436 = vshrl.u32 %v435, 7
      %v437 = vsub.s32 4, %v436
      %v438 = vrot.slane %v415, %v437
      %v439 = vlaneseq
      %v440 = vshrl.u32 %v439, 7
      %v441 = vsub.s32 5, %v440
      %v442 = vrot.slane %v415, %v441
      %v443 = vlaneseq
      %v444 = vshrl.u32 %v443, 7
      %v445 = vsub.s32 6, %v444
      %v446 = vrot.slane %v415, %v445
      %v447 = vlaneseq
      %v448 = vshrl.u32 %v447, 7
      %v449 = vsub.s32 7, %v448
      %v450 = vrot.slane %v415, %v449
      %v451 = vlaneseq
      %v452 = vshrl.u32 %v451, 7
      %v453 = vsub.s32 0, %v452
      %v454 = vrot.slane %v416, %v453
      %v455 = vlaneseq
      %v456 = vshrl.u32 %v455, 7
      %v457 = vsub.s32 1, %v456
      %v458 = vrot.slane %v416, %v457
      %v459 = vlaneseq
      %v460 = vshrl.u32 %v459, 7
      %v461 = vsub.s32 2, %v460
      %v462 = vrot.slane %v416, %v461
      %v474 = vadd.f32 %v404, %v422
      %v475 = vadd.f32 %v405, %v426
      %v476 = vadd.f32 %v406, %v430
      %v477 = vadd.f32 %v407, %v434
      %v478 = vadd.f32 %v408, %v438
      %v479 = vadd.f32 %v409, %v442
      %v480 = vadd.f32 %v410, %v446
      %v481 = vadd.f32 %v411, %v450
      %v482 = vadd.f32 %v412, %v454
      %v483 = vadd.f32 %v413, %v458
      %v484 = vadd.f32 %v414, %v462
      %v485 = vld [vmem:[%s3] sm:$0xff]
      %v486 = vld [vmem:[%s3 + $0x8] sm:$0x7]
      %v489 = vlaneseq
      %v490 = vshrl.u32 %v489, 7
      %v491 = vsub.s32 0, %v490
      %v492 = vrot.slane %v485, %v491
      %v493 = vlaneseq
      %v494 = vshrl.u32 %v493, 7
      %v495 = vsub.s32 1, %v494
      %v496 = vrot.slane %v485, %v495
      %v497 = vlaneseq
      %v498 = vshrl.u32 %v497, 7
      %v499 = vsub.s32 2, %v498
      %v500 = vrot.slane %v485, %v499
      %v501 = vlaneseq
      %v502 = vshrl.u32 %v501, 7
      %v503 = vsub.s32 3, %v502
      %v504 = vrot.slane %v485, %v503
      %v505 = vlaneseq
      %v506 = vshrl.u32 %v505, 7
      %v507 = vsub.s32 4, %v506
      %v508 = vrot.slane %v485, %v507
      %v509 = vlaneseq
      %v510 = vshrl.u32 %v509, 7
      %v511 = vsub.s32 5, %v510
      %v512 = vrot.slane %v485, %v511
      %v513 = vlaneseq
      %v514 = vshrl.u32 %v513, 7
      %v515 = vsub.s32 6, %v514
      %v516 = vrot.slane %v485, %v515
      %v517 = vlaneseq
      %v518 = vshrl.u32 %v517, 7
      %v519 = vsub.s32 7, %v518
      %v520 = vrot.slane %v485, %v519
      %v521 = vlaneseq
      %v522 = vshrl.u32 %v521, 7
      %v523 = vsub.s32 0, %v522
      %v524 = vrot.slane %v486, %v523
      %v525 = vlaneseq
      %v526 = vshrl.u32 %v525, 7
      %v527 = vsub.s32 1, %v526
      %v528 = vrot.slane %v486, %v527
      %v529 = vlaneseq
      %v530 = vshrl.u32 %v529, 7
      %v531 = vsub.s32 2, %v530
      %v532 = vrot.slane %v486, %v531
      %v544 = vmul.f32 %v474, %v492
      %v545 = vmul.f32 %v475, %v496
      %v546 = vmul.f32 %v476, %v500
      %v547 = vmul.f32 %v477, %v504
      %v548 = vmul.f32 %v478, %v508
      %v549 = vmul.f32 %v479, %v512
      %v550 = vmul.f32 %v480, %v516
      %v551 = vmul.f32 %v481, %v520
      %v552 = vmul.f32 %v482, %v524
      %v553 = vmul.f32 %v483, %v528
      %v554 = vmul.f32 %v484, %v532
      %vm555 = vcmp.gt.f32.partialorder %v544, 0.0
      %vm556 = vcmp.gt.f32.partialorder %v545, 0.0
      %vm557 = vcmp.gt.f32.partialorder %v546, 0.0
      %vm558 = vcmp.gt.f32.partialorder %v547, 0.0
      %vm559 = vcmp.gt.f32.partialorder %v548, 0.0
      %vm560 = vcmp.gt.f32.partialorder %v549, 0.0
      %vm561 = vcmp.gt.f32.partialorder %v550, 0.0
      %vm562 = vcmp.gt.f32.partialorder %v551, 0.0
      %vm563 = vcmp.gt.f32.partialorder %v552, 0.0
      %vm564 = vcmp.gt.f32.partialorder %v553, 0.0
      %vm565 = vcmp.gt.f32.partialorder %v554, 0.0
      %v566 = vmul.f32 %v544, 0.2
      %v567 = vmul.f32 %v545, 0.2
      %v568 = vmul.f32 %v546, 0.2
      %v569 = vmul.f32 %v547, 0.2
      %v570 = vmul.f32 %v548, 0.2
      %v571 = vmul.f32 %v549, 0.2
      %v572 = vmul.f32 %v550, 0.2
      %v573 = vmul.f32 %v551, 0.2
      %v574 = vmul.f32 %v552, 0.2
      %v575 = vmul.f32 %v553, 0.2
      %v576 = vmul.f32 %v554, 0.2
      %v577 = vsel %vm555, %v544, %v566
      %v578 = vsel %vm556, %v545, %v567
      %v579 = vsel %vm557, %v546, %v568
      %v580 = vsel %vm558, %v547, %v569
      %v581 = vsel %vm559, %v548, %v570
      %v582 = vsel %vm560, %v549, %v571
      %v583 = vsel %vm561, %v550, %v572
      %v584 = vsel %vm562, %v551, %v573
      %v585 = vsel %vm563, %v552, %v574
      %v586 = vsel %vm564, %v553, %v575
      %v587 = vsel %vm565, %v554, %v576
      %588 = vrot.lane.b32.xlu0 %v577, 76
      %v589 = vpop.permute.xlu0 %588
      %590 = vrot.lane.b32.xlu0 %v578, 76
      %v591 = vpop.permute.xlu0 %590
      %592 = vrot.lane.b32.xlu0 %v579, 76
      %v593 = vpop.permute.xlu0 %592
      %594 = vrot.lane.b32.xlu0 %v580, 76
      %v595 = vpop.permute.xlu0 %594
      %596 = vrot.lane.b32.xlu0 %v581, 76
      %v597 = vpop.permute.xlu0 %596
      %598 = vrot.lane.b32.xlu0 %v582, 76
      %v599 = vpop.permute.xlu0 %598
      %600 = vrot.lane.b32.xlu0 %v583, 76
      %v601 = vpop.permute.xlu0 %600
      %602 = vrot.lane.b32.xlu0 %v584, 76
      %v603 = vpop.permute.xlu0 %602
      %604 = vrot.lane.b32.xlu0 %v585, 76
      %v605 = vpop.permute.xlu0 %604
      %606 = vrot.lane.b32.xlu0 %v586, 76
      %v607 = vpop.permute.xlu0 %606
      %608 = vrot.lane.b32.xlu0 %v587, 76
      %v609 = vpop.permute.xlu0 %608
      %v610 = vlaneseq
      %v611 = vand.u32 %v610, 127
      %vm612 = vcmp.lt.s32.totalorder %v611, 76
      %v613 = vsel %vm612, %v607, %v609
      %v614 = vsel %vm612, %v605, %v607
      %v615 = vsel %vm612, %v603, %v605
      %v616 = vsel %vm612, %v601, %v603
      %v617 = vsel %vm612, %v599, %v601
      %v618 = vsel %vm612, %v597, %v599
      %v619 = vsel %vm612, %v595, %v597
      %v620 = vsel %vm612, %v593, %v595
      %v621 = vsel %vm612, %v591, %v593
      %v622 = vsel %vm612, %v589, %v591
      %v623 = vsel %vm612, %v609, %v589
      %v624 = vld [vmem:[%s4] ss:$8 sm:$0xf]
      %v625 = vld [vmem:[%s4] ss:$8 sm:$0xf0]
      %v626 = vor.u32 %v624, %v625
      %s627 = scalar_lea.vmem %s4, 64
      %v628 = vld [vmem:[%s627] ss:$8 sm:$0x7]
      %v631 = vlaneseq
      %v632 = vshrl.u32 %v631, 7
      %v633 = vsub.s32 0, %v632
      %v634 = vrot.slane %v626, %v633
      %v635 = vlaneseq
      %v636 = vshrl.u32 %v635, 7
      %v637 = vsub.s32 1, %v636
      %v638 = vrot.slane %v626, %v637
      %v639 = vlaneseq
      %v640 = vshrl.u32 %v639, 7
      %v641 = vsub.s32 2, %v640
      %v642 = vrot.slane %v626, %v641
      %v643 = vlaneseq
      %v644 = vshrl.u32 %v643, 7
      %v645 = vsub.s32 3, %v644
      %v646 = vrot.slane %v626, %v645
      %v647 = vlaneseq
      %v648 = vshrl.u32 %v647, 7
      %v649 = vsub.s32 4, %v648
      %v650 = vrot.slane %v626, %v649
      %v651 = vlaneseq
      %v652 = vshrl.u32 %v651, 7
      %v653 = vsub.s32 5, %v652
      %v654 = vrot.slane %v626, %v653
      %v655 = vlaneseq
      %v656 = vshrl.u32 %v655, 7
      %v657 = vsub.s32 6, %v656
      %v658 = vrot.slane %v626, %v657
      %v659 = vlaneseq
      %v660 = vshrl.u32 %v659, 7
      %v661 = vsub.s32 7, %v660
      %v662 = vrot.slane %v626, %v661
      %v663 = vlaneseq
      %v664 = vshrl.u32 %v663, 7
      %v665 = vsub.s32 0, %v664
      %v666 = vrot.slane %v628, %v665
      %v667 = vlaneseq
      %v668 = vshrl.u32 %v667, 7
      %v669 = vsub.s32 1, %v668
      %v670 = vrot.slane %v628, %v669
      %v671 = vlaneseq
      %v672 = vshrl.u32 %v671, 7
      %v673 = vsub.s32 2, %v672
      %v674 = vrot.slane %v628, %v673
      %v686 = vmul.f32 %v623, %v634
      %v687 = vmul.f32 %v622, %v638
      %v688 = vmul.f32 %v621, %v642
      %v689 = vmul.f32 %v620, %v646
      %v690 = vmul.f32 %v619, %v650
      %v691 = vmul.f32 %v618, %v654
      %v692 = vmul.f32 %v617, %v658
      %v693 = vmul.f32 %v616, %v662
      %v694 = vmul.f32 %v615, %v666
      %v695 = vmul.f32 %v614, %v670
      %v696 = vmul.f32 %v613, %v674
      %697 = vrot.lane.b32.xlu0 %v577, 72
      %v698 = vpop.permute.xlu0 %697
      %699 = vrot.lane.b32.xlu0 %v578, 72
      %v700 = vpop.permute.xlu0 %699
      %701 = vrot.lane.b32.xlu0 %v579, 72
      %v702 = vpop.permute.xlu0 %701
      %703 = vrot.lane.b32.xlu0 %v580, 72
      %v704 = vpop.permute.xlu0 %703
      %705 = vrot.lane.b32.xlu0 %v581, 72
      %v706 = vpop.permute.xlu0 %705
      %707 = vrot.lane.b32.xlu0 %v582, 72
      %v708 = vpop.permute.xlu0 %707
      %709 = vrot.lane.b32.xlu0 %v583, 72
      %v710 = vpop.permute.xlu0 %709
      %711 = vrot.lane.b32.xlu0 %v584, 72
      %v712 = vpop.permute.xlu0 %711
      %713 = vrot.lane.b32.xlu0 %v585, 72
      %v714 = vpop.permute.xlu0 %713
      %715 = vrot.lane.b32.xlu0 %v586, 72
      %v716 = vpop.permute.xlu0 %715
      %717 = vrot.lane.b32.xlu0 %v587, 72
      %v718 = vpop.permute.xlu0 %717
      %vm719 = vcmp.lt.s32.totalorder %v611, 72
      %v720 = vsel %vm719, %v716, %v718
      %v721 = vsel %vm719, %v714, %v716
      %v722 = vsel %vm719, %v712, %v714
      %v723 = vsel %vm719, %v710, %v712
      %v724 = vsel %vm719, %v708, %v710
      %v725 = vsel %vm719, %v706, %v708
      %v726 = vsel %vm719, %v704, %v706
      %v727 = vsel %vm719, %v702, %v704
      %v728 = vsel %vm719, %v700, %v702
      %v729 = vsel %vm719, %v698, %v700
      %v730 = vsel %vm719, %v718, %v698
      %s731 = scalar_lea.vmem %s4, 1
      %v732 = vld [vmem:[%s731] ss:$8 sm:$0xf]
      %v733 = vld [vmem:[%s731] ss:$8 sm:$0xf0]
      %v734 = vor.u32 %v732, %v733
      %s735 = scalar_lea.vmem %s4, 65
      %v736 = vld [vmem:[%s735] ss:$8 sm:$0x7]
      %v739 = vlaneseq
      %v740 = vshrl.u32 %v739, 7
      %v741 = vsub.s32 0, %v740
      %v742 = vrot.slane %v734, %v741
      %v743 = vlaneseq
      %v744 = vshrl.u32 %v743, 7
      %v745 = vsub.s32 1, %v744
      %v746 = vrot.slane %v734, %v745
      %v747 = vlaneseq
      %v748 = vshrl.u32 %v747, 7
      %v749 = vsub.s32 2, %v748
      %v750 = vrot.slane %v734, %v749
      %v751 = vlaneseq
      %v752 = vshrl.u32 %v751, 7
      %v753 = vsub.s32 3, %v752
      %v754 = vrot.slane %v734, %v753
      %v755 = vlaneseq
      %v756 = vshrl.u32 %v755, 7
      %v757 = vsub.s32 4, %v756
      %v758 = vrot.slane %v734, %v757
      %v759 = vlaneseq
      %v760 = vshrl.u32 %v759, 7
      %v761 = vsub.s32 5, %v760
      %v762 = vrot.slane %v734, %v761
      %v763 = vlaneseq
      %v764 = vshrl.u32 %v763, 7
      %v765 = vsub.s32 6, %v764
      %v766 = vrot.slane %v734, %v765
      %v767 = vlaneseq
      %v768 = vshrl.u32 %v767, 7
      %v769 = vsub.s32 7, %v768
      %v770 = vrot.slane %v734, %v769
      %v771 = vlaneseq
      %v772 = vshrl.u32 %v771, 7
      %v773 = vsub.s32 0, %v772
      %v774 = vrot.slane %v736, %v773
      %v775 = vlaneseq
      %v776 = vshrl.u32 %v775, 7
      %v777 = vsub.s32 1, %v776
      %v778 = vrot.slane %v736, %v777
      %v779 = vlaneseq
      %v780 = vshrl.u32 %v779, 7
      %v781 = vsub.s32 2, %v780
      %v782 = vrot.slane %v736, %v781
      %v794 = vmul.f32 %v730, %v742
      %v795 = vmul.f32 %v729, %v746
      %v796 = vmul.f32 %v728, %v750
      %v797 = vmul.f32 %v727, %v754
      %v798 = vmul.f32 %v726, %v758
      %v799 = vmul.f32 %v725, %v762
      %v800 = vmul.f32 %v724, %v766
      %v801 = vmul.f32 %v723, %v770
      %v802 = vmul.f32 %v722, %v774
      %v803 = vmul.f32 %v721, %v778
      %v804 = vmul.f32 %v720, %v782
      %v805 = vadd.f32 %v686, %v794
      %v806 = vadd.f32 %v687, %v795
      %v807 = vadd.f32 %v688, %v796
      %v808 = vadd.f32 %v689, %v797
      %v809 = vadd.f32 %v690, %v798
      %v810 = vadd.f32 %v691, %v799
      %v811 = vadd.f32 %v692, %v800
      %v812 = vadd.f32 %v693, %v801
      %v813 = vadd.f32 %v694, %v802
      %v814 = vadd.f32 %v695, %v803
      %v815 = vadd.f32 %v696, %v804
      %816 = vrot.lane.b32.xlu0 %v577, 68
      %v817 = vpop.permute.xlu0 %816
      %818 = vrot.lane.b32.xlu0 %v578, 68
      %v819 = vpop.permute.xlu0 %818
      %820 = vrot.lane.b32.xlu0 %v579, 68
      %v821 = vpop.permute.xlu0 %820
      %822 = vrot.lane.b32.xlu0 %v580, 68
      %v823 = vpop.permute.xlu0 %822
      %824 = vrot.lane.b32.xlu0 %v581, 68
      %v825 = vpop.permute.xlu0 %824
      %826 = vrot.lane.b32.xlu0 %v582, 68
      %v827 = vpop.permute.xlu0 %826
      %828 = vrot.lane.b32.xlu0 %v583, 68
      %v829 = vpop.permute.xlu0 %828
      %830 = vrot.lane.b32.xlu0 %v584, 68
      %v831 = vpop.permute.xlu0 %830
      %832 = vrot.lane.b32.xlu0 %v585, 68
      %v833 = vpop.permute.xlu0 %832
      %834 = vrot.lane.b32.xlu0 %v586, 68
      %v835 = vpop.permute.xlu0 %834
      %836 = vrot.lane.b32.xlu0 %v587, 68
      %v837 = vpop.permute.xlu0 %836
      %vm838 = vcmp.lt.s32.totalorder %v611, 68
      %v839 = vsel %vm838, %v835, %v837
      %v840 = vsel %vm838, %v833, %v835
      %v841 = vsel %vm838, %v831, %v833
      %v842 = vsel %vm838, %v829, %v831
      %v843 = vsel %vm838, %v827, %v829
      %v844 = vsel %vm838, %v825, %v827
      %v845 = vsel %vm838, %v823, %v825
      %v846 = vsel %vm838, %v821, %v823
      %v847 = vsel %vm838, %v819, %v821
      %v848 = vsel %vm838, %v817, %v819
      %v849 = vsel %vm838, %v837, %v817
      %s850 = scalar_lea.vmem %s4, 2
      %v851 = vld [vmem:[%s850] ss:$8 sm:$0xf]
      %v852 = vld [vmem:[%s850] ss:$8 sm:$0xf0]
      %v853 = vor.u32 %v851, %v852
      %s854 = scalar_lea.vmem %s4, 66
      %v855 = vld [vmem:[%s854] ss:$8 sm:$0x7]
      %v858 = vlaneseq
      %v859 = vshrl.u32 %v858, 7
      %v860 = vsub.s32 0, %v859
      %v861 = vrot.slane %v853, %v860
      %v862 = vlaneseq
      %v863 = vshrl.u32 %v862, 7
      %v864 = vsub.s32 1, %v863
      %v865 = vrot.slane %v853, %v864
      %v866 = vlaneseq
      %v867 = vshrl.u32 %v866, 7
      %v868 = vsub.s32 2, %v867
      %v869 = vrot.slane %v853, %v868
      %v870 = vlaneseq
      %v871 = vshrl.u32 %v870, 7
      %v872 = vsub.s32 3, %v871
      %v873 = vrot.slane %v853, %v872
      %v874 = vlaneseq
      %v875 = vshrl.u32 %v874, 7
      %v876 = vsub.s32 4, %v875
      %v877 = vrot.slane %v853, %v876
      %v878 = vlaneseq
      %v879 = vshrl.u32 %v878, 7
      %v880 = vsub.s32 5, %v879
      %v881 = vrot.slane %v853, %v880
      %v882 = vlaneseq
      %v883 = vshrl.u32 %v882, 7
      %v884 = vsub.s32 6, %v883
      %v885 = vrot.slane %v853, %v884
      %v886 = vlaneseq
      %v887 = vshrl.u32 %v886, 7
      %v888 = vsub.s32 7, %v887
      %v889 = vrot.slane %v853, %v888
      %v890 = vlaneseq
      %v891 = vshrl.u32 %v890, 7
      %v892 = vsub.s32 0, %v891
      %v893 = vrot.slane %v855, %v892
      %v894 = vlaneseq
      %v895 = vshrl.u32 %v894, 7
      %v896 = vsub.s32 1, %v895
      %v897 = vrot.slane %v855, %v896
      %v898 = vlaneseq
      %v899 = vshrl.u32 %v898, 7
      %v900 = vsub.s32 2, %v899
      %v901 = vrot.slane %v855, %v900
      %v913 = vmul.f32 %v849, %v861
      %v914 = vmul.f32 %v848, %v865
      %v915 = vmul.f32 %v847, %v869
      %v916 = vmul.f32 %v846, %v873
      %v917 = vmul.f32 %v845, %v877
      %v918 = vmul.f32 %v844, %v881
      %v919 = vmul.f32 %v843, %v885
      %v920 = vmul.f32 %v842, %v889
      %v921 = vmul.f32 %v841, %v893
      %v922 = vmul.f32 %v840, %v897
      %v923 = vmul.f32 %v839, %v901
      %v924 = vadd.f32 %v805, %v913
      %v925 = vadd.f32 %v806, %v914
      %v926 = vadd.f32 %v807, %v915
      %v927 = vadd.f32 %v808, %v916
      %v928 = vadd.f32 %v809, %v917
      %v929 = vadd.f32 %v810, %v918
      %v930 = vadd.f32 %v811, %v919
      %v931 = vadd.f32 %v812, %v920
      %v932 = vadd.f32 %v813, %v921
      %v933 = vadd.f32 %v814, %v922
      %v934 = vadd.f32 %v815, %v923
      %935 = vrot.lane.b32.xlu0 %v577, 4
      %v936 = vpop.permute.xlu0 %935
      %937 = vrot.lane.b32.xlu0 %v578, 4
      %v938 = vpop.permute.xlu0 %937
      %939 = vrot.lane.b32.xlu0 %v579, 4
      %v940 = vpop.permute.xlu0 %939
      %941 = vrot.lane.b32.xlu0 %v580, 4
      %v942 = vpop.permute.xlu0 %941
      %943 = vrot.lane.b32.xlu0 %v581, 4
      %v944 = vpop.permute.xlu0 %943
      %945 = vrot.lane.b32.xlu0 %v582, 4
      %v946 = vpop.permute.xlu0 %945
      %947 = vrot.lane.b32.xlu0 %v583, 4
      %v948 = vpop.permute.xlu0 %947
      %949 = vrot.lane.b32.xlu0 %v584, 4
      %v950 = vpop.permute.xlu0 %949
      %951 = vrot.lane.b32.xlu0 %v585, 4
      %v952 = vpop.permute.xlu0 %951
      %953 = vrot.lane.b32.xlu0 %v586, 4
      %v954 = vpop.permute.xlu0 %953
      %955 = vrot.lane.b32.xlu0 %v587, 4
      %v956 = vpop.permute.xlu0 %955
      %vm957 = vcmp.lt.s32.totalorder %v611, 4
      %v958 = vsel %vm957, %v954, %v956
      %v959 = vsel %vm957, %v952, %v954
      %v960 = vsel %vm957, %v950, %v952
      %v961 = vsel %vm957, %v948, %v950
      %v962 = vsel %vm957, %v946, %v948
      %v963 = vsel %vm957, %v944, %v946
      %v964 = vsel %vm957, %v942, %v944
      %v965 = vsel %vm957, %v940, %v942
      %v966 = vsel %vm957, %v938, %v940
      %v967 = vsel %vm957, %v936, %v938
      %v968 = vsel %vm957, %v956, %v936
      %s969 = scalar_lea.vmem %s4, 3
      %v970 = vld [vmem:[%s969] ss:$8 sm:$0xf]
      %v971 = vld [vmem:[%s969] ss:$8 sm:$0xf0]
      %v972 = vor.u32 %v970, %v971
      %s973 = scalar_lea.vmem %s4, 67
      %v974 = vld [vmem:[%s973] ss:$8 sm:$0x7]
      %v977 = vlaneseq
      %v978 = vshrl.u32 %v977, 7
      %v979 = vsub.s32 0, %v978
      %v980 = vrot.slane %v972, %v979
      %v981 = vlaneseq
      %v982 = vshrl.u32 %v981, 7
      %v983 = vsub.s32 1, %v982
      %v984 = vrot.slane %v972, %v983
      %v985 = vlaneseq
      %v986 = vshrl.u32 %v985, 7
      %v987 = vsub.s32 2, %v986
      %v988 = vrot.slane %v972, %v987
      %v989 = vlaneseq
      %v990 = vshrl.u32 %v989, 7
      %v991 = vsub.s32 3, %v990
      %v992 = vrot.slane %v972, %v991
      %v993 = vlaneseq
      %v994 = vshrl.u32 %v993, 7
      %v995 = vsub.s32 4, %v994
      %v996 = vrot.slane %v972, %v995
      %v997 = vlaneseq
      %v998 = vshrl.u32 %v997, 7
      %v999 = vsub.s32 5, %v998
      %v1000 = vrot.slane %v972, %v999
      %v1001 = vlaneseq
      %v1002 = vshrl.u32 %v1001, 7
      %v1003 = vsub.s32 6, %v1002
      %v1004 = vrot.slane %v972, %v1003
      %v1005 = vlaneseq
      %v1006 = vshrl.u32 %v1005, 7
      %v1007 = vsub.s32 7, %v1006
      %v1008 = vrot.slane %v972, %v1007
      %v1009 = vlaneseq
      %v1010 = vshrl.u32 %v1009, 7
      %v1011 = vsub.s32 0, %v1010
      %v1012 = vrot.slane %v974, %v1011
      %v1013 = vlaneseq
      %v1014 = vshrl.u32 %v1013, 7
      %v1015 = vsub.s32 1, %v1014
      %v1016 = vrot.slane %v974, %v1015
      %v1017 = vlaneseq
      %v1018 = vshrl.u32 %v1017, 7
      %v1019 = vsub.s32 2, %v1018
      %v1020 = vrot.slane %v974, %v1019
      %v1032 = vmul.f32 %v968, %v980
      %v1033 = vmul.f32 %v967, %v984
      %v1034 = vmul.f32 %v966, %v988
      %v1035 = vmul.f32 %v965, %v992
      %v1036 = vmul.f32 %v964, %v996
      %v1037 = vmul.f32 %v963, %v1000
      %v1038 = vmul.f32 %v962, %v1004
      %v1039 = vmul.f32 %v961, %v1008
      %v1040 = vmul.f32 %v960, %v1012
      %v1041 = vmul.f32 %v959, %v1016
      %v1042 = vmul.f32 %v958, %v1020
      %v1043 = vadd.f32 %v924, %v1032
      %v1044 = vadd.f32 %v925, %v1033
      %v1045 = vadd.f32 %v926, %v1034
      %v1046 = vadd.f32 %v927, %v1035
      %v1047 = vadd.f32 %v928, %v1036
      %v1048 = vadd.f32 %v929, %v1037
      %v1049 = vadd.f32 %v930, %v1038
      %v1050 = vadd.f32 %v931, %v1039
      %v1051 = vadd.f32 %v932, %v1040
      %v1052 = vadd.f32 %v933, %v1041
      %v1053 = vadd.f32 %v934, %v1042
      %s1054 = scalar_lea.vmem %s4, 4
      %v1055 = vld [vmem:[%s1054] ss:$8 sm:$0xf]
      %v1056 = vld [vmem:[%s1054] ss:$8 sm:$0xf0]
      %v1057 = vor.u32 %v1055, %v1056
      %s1058 = scalar_lea.vmem %s4, 68
      %v1059 = vld [vmem:[%s1058] ss:$8 sm:$0x7]
      %v1062 = vlaneseq
      %v1063 = vshrl.u32 %v1062, 7
      %v1064 = vsub.s32 0, %v1063
      %v1065 = vrot.slane %v1057, %v1064
      %v1066 = vlaneseq
      %v1067 = vshrl.u32 %v1066, 7
      %v1068 = vsub.s32 1, %v1067
      %v1069 = vrot.slane %v1057, %v1068
      %v1070 = vlaneseq
      %v1071 = vshrl.u32 %v1070, 7
      %v1072 = vsub.s32 2, %v1071
      %v1073 = vrot.slane %v1057, %v1072
      %v1074 = vlaneseq
      %v1075 = vshrl.u32 %v1074, 7
      %v1076 = vsub.s32 3, %v1075
      %v1077 = vrot.slane %v1057, %v1076
      %v1078 = vlaneseq
      %v1079 = vshrl.u32 %v1078, 7
      %v1080 = vsub.s32 4, %v1079
      %v1081 = vrot.slane %v1057, %v1080
      %v1082 = vlaneseq
      %v1083 = vshrl.u32 %v1082, 7
      %v1084 = vsub.s32 5, %v1083
      %v1085 = vrot.slane %v1057, %v1084
      %v1086 = vlaneseq
      %v1087 = vshrl.u32 %v1086, 7
      %v1088 = vsub.s32 6, %v1087
      %v1089 = vrot.slane %v1057, %v1088
      %v1090 = vlaneseq
      %v1091 = vshrl.u32 %v1090, 7
      %v1092 = vsub.s32 7, %v1091
      %v1093 = vrot.slane %v1057, %v1092
      %v1094 = vlaneseq
      %v1095 = vshrl.u32 %v1094, 7
      %v1096 = vsub.s32 0, %v1095
      %v1097 = vrot.slane %v1059, %v1096
      %v1098 = vlaneseq
      %v1099 = vshrl.u32 %v1098, 7
      %v1100 = vsub.s32 1, %v1099
      %v1101 = vrot.slane %v1059, %v1100
      %v1102 = vlaneseq
      %v1103 = vshrl.u32 %v1102, 7
      %v1104 = vsub.s32 2, %v1103
      %v1105 = vrot.slane %v1059, %v1104
      %v1117 = vmul.f32 %v577, %v1065
      %v1118 = vmul.f32 %v578, %v1069
      %v1119 = vmul.f32 %v579, %v1073
      %v1120 = vmul.f32 %v580, %v1077
      %v1121 = vmul.f32 %v581, %v1081
      %v1122 = vmul.f32 %v582, %v1085
      %v1123 = vmul.f32 %v583, %v1089
      %v1124 = vmul.f32 %v584, %v1093
      %v1125 = vmul.f32 %v585, %v1097
      %v1126 = vmul.f32 %v586, %v1101
      %v1127 = vmul.f32 %v587, %v1105
      %v1128 = vadd.f32 %v1043, %v1117
      %v1129 = vadd.f32 %v1044, %v1118
      %v1130 = vadd.f32 %v1045, %v1119
      %v1131 = vadd.f32 %v1046, %v1120
      %v1132 = vadd.f32 %v1047, %v1121
      %v1133 = vadd.f32 %v1048, %v1122
      %v1134 = vadd.f32 %v1049, %v1123
      %v1135 = vadd.f32 %v1050, %v1124
      %v1136 = vadd.f32 %v1051, %v1125
      %v1137 = vadd.f32 %v1052, %v1126
      %v1138 = vadd.f32 %v1053, %v1127
      %1139 = vrot.lane.b32.xlu0 %v577, 124
      %v1140 = vpop.permute.xlu0 %1139
      %1141 = vrot.lane.b32.xlu0 %v578, 124
      %v1142 = vpop.permute.xlu0 %1141
      %1143 = vrot.lane.b32.xlu0 %v579, 124
      %v1144 = vpop.permute.xlu0 %1143
      %1145 = vrot.lane.b32.xlu0 %v580, 124
      %v1146 = vpop.permute.xlu0 %1145
      %1147 = vrot.lane.b32.xlu0 %v581, 124
      %v1148 = vpop.permute.xlu0 %1147
      %1149 = vrot.lane.b32.xlu0 %v582, 124
      %v1150 = vpop.permute.xlu0 %1149
      %1151 = vrot.lane.b32.xlu0 %v583, 124
      %v1152 = vpop.permute.xlu0 %1151
      %1153 = vrot.lane.b32.xlu0 %v584, 124
      %v1154 = vpop.permute.xlu0 %1153
      %1155 = vrot.lane.b32.xlu0 %v585, 124
      %v1156 = vpop.permute.xlu0 %1155
      %1157 = vrot.lane.b32.xlu0 %v586, 124
      %v1158 = vpop.permute.xlu0 %1157
      %1159 = vrot.lane.b32.xlu0 %v587, 124
      %v1160 = vpop.permute.xlu0 %1159
      %vm1161 = vcmp.lt.s32.totalorder %v611, 124
      %v1162 = vsel %vm1161, %v1158, %v1160
      %v1163 = vsel %vm1161, %v1156, %v1158
      %v1164 = vsel %vm1161, %v1154, %v1156
      %v1165 = vsel %vm1161, %v1152, %v1154
      %v1166 = vsel %vm1161, %v1150, %v1152
      %v1167 = vsel %vm1161, %v1148, %v1150
      %v1168 = vsel %vm1161, %v1146, %v1148
      %v1169 = vsel %vm1161, %v1144, %v1146
      %v1170 = vsel %vm1161, %v1142, %v1144
      %v1171 = vsel %vm1161, %v1140, %v1142
      %v1172 = vsel %vm1161, %v1160, %v1140
      %s1173 = scalar_lea.vmem %s4, 5
      %v1174 = vld [vmem:[%s1173] ss:$8 sm:$0xf]
      %v1175 = vld [vmem:[%s1173] ss:$8 sm:$0xf0]
      %v1176 = vor.u32 %v1174, %v1175
      %s1177 = scalar_lea.vmem %s4, 69
      %v1178 = vld [vmem:[%s1177] ss:$8 sm:$0x7]
      %v1181 = vlaneseq
      %v1182 = vshrl.u32 %v1181, 7
      %v1183 = vsub.s32 0, %v1182
      %v1184 = vrot.slane %v1176, %v1183
      %v1185 = vlaneseq
      %v1186 = vshrl.u32 %v1185, 7
      %v1187 = vsub.s32 1, %v1186
      %v1188 = vrot.slane %v1176, %v1187
      %v1189 = vlaneseq
      %v1190 = vshrl.u32 %v1189, 7
      %v1191 = vsub.s32 2, %v1190
      %v1192 = vrot.slane %v1176, %v1191
      %v1193 = vlaneseq
      %v1194 = vshrl.u32 %v1193, 7
      %v1195 = vsub.s32 3, %v1194
      %v1196 = vrot.slane %v1176, %v1195
      %v1197 = vlaneseq
      %v1198 = vshrl.u32 %v1197, 7
      %v1199 = vsub.s32 4, %v1198
      %v1200 = vrot.slane %v1176, %v1199
      %v1201 = vlaneseq
      %v1202 = vshrl.u32 %v1201, 7
      %v1203 = vsub.s32 5, %v1202
      %v1204 = vrot.slane %v1176, %v1203
      %v1205 = vlaneseq
      %v1206 = vshrl.u32 %v1205, 7
      %v1207 = vsub.s32 6, %v1206
      %v1208 = vrot.slane %v1176, %v1207
      %v1209 = vlaneseq
      %v1210 = vshrl.u32 %v1209, 7
      %v1211 = vsub.s32 7, %v1210
      %v1212 = vrot.slane %v1176, %v1211
      %v1213 = vlaneseq
      %v1214 = vshrl.u32 %v1213, 7
      %v1215 = vsub.s32 0, %v1214
      %v1216 = vrot.slane %v1178, %v1215
      %v1217 = vlaneseq
      %v1218 = vshrl.u32 %v1217, 7
      %v1219 = vsub.s32 1, %v1218
      %v1220 = vrot.slane %v1178, %v1219
      %v1221 = vlaneseq
      %v1222 = vshrl.u32 %v1221, 7
      %v1223 = vsub.s32 2, %v1222
      %v1224 = vrot.slane %v1178, %v1223
      %v1236 = vmul.f32 %v1171, %v1184
      %v1237 = vmul.f32 %v1170, %v1188
      %v1238 = vmul.f32 %v1169, %v1192
      %v1239 = vmul.f32 %v1168, %v1196
      %v1240 = vmul.f32 %v1167, %v1200
      %v1241 = vmul.f32 %v1166, %v1204
      %v1242 = vmul.f32 %v1165, %v1208
      %v1243 = vmul.f32 %v1164, %v1212
      %v1244 = vmul.f32 %v1163, %v1216
      %v1245 = vmul.f32 %v1162, %v1220
      %v1246 = vmul.f32 %v1172, %v1224
      %v1247 = vadd.f32 %v1128, %v1236
      %v1248 = vadd.f32 %v1129, %v1237
      %v1249 = vadd.f32 %v1130, %v1238
      %v1250 = vadd.f32 %v1131, %v1239
      %v1251 = vadd.f32 %v1132, %v1240
      %v1252 = vadd.f32 %v1133, %v1241
      %v1253 = vadd.f32 %v1134, %v1242
      %v1254 = vadd.f32 %v1135, %v1243
      %v1255 = vadd.f32 %v1136, %v1244
      %v1256 = vadd.f32 %v1137, %v1245
      %v1257 = vadd.f32 %v1138, %v1246
      %1258 = vrot.lane.b32.xlu0 %v577, 60
      %v1259 = vpop.permute.xlu0 %1258
      %1260 = vrot.lane.b32.xlu0 %v578, 60
      %v1261 = vpop.permute.xlu0 %1260
      %1262 = vrot.lane.b32.xlu0 %v579, 60
      %v1263 = vpop.permute.xlu0 %1262
      %1264 = vrot.lane.b32.xlu0 %v580, 60
      %v1265 = vpop.permute.xlu0 %1264
      %1266 = vrot.lane.b32.xlu0 %v581, 60
      %v1267 = vpop.permute.xlu0 %1266
      %1268 = vrot.lane.b32.xlu0 %v582, 60
      %v1269 = vpop.permute.xlu0 %1268
      %1270 = vrot.lane.b32.xlu0 %v583, 60
      %v1271 = vpop.permute.xlu0 %1270
      %1272 = vrot.lane.b32.xlu0 %v584, 60
      %v1273 = vpop.permute.xlu0 %1272
      %1274 = vrot.lane.b32.xlu0 %v585, 60
      %v1275 = vpop.permute.xlu0 %1274
      %1276 = vrot.lane.b32.xlu0 %v586, 60
      %v1277 = vpop.permute.xlu0 %1276
      %1278 = vrot.lane.b32.xlu0 %v587, 60
      %v1279 = vpop.permute.xlu0 %1278
      %vm1280 = vcmp.lt.s32.totalorder %v611, 60
      %v1281 = vsel %vm1280, %v1277, %v1279
      %v1282 = vsel %vm1280, %v1275, %v1277
      %v1283 = vsel %vm1280, %v1273, %v1275
      %v1284 = vsel %vm1280, %v1271, %v1273
      %v1285 = vsel %vm1280, %v1269, %v1271
      %v1286 = vsel %vm1280, %v1267, %v1269
      %v1287 = vsel %vm1280, %v1265, %v1267
      %v1288 = vsel %vm1280, %v1263, %v1265
      %v1289 = vsel %vm1280, %v1261, %v1263
      %v1290 = vsel %vm1280, %v1259, %v1261
      %v1291 = vsel %vm1280, %v1279, %v1259
      %s1292 = scalar_lea.vmem %s4, 6
      %v1293 = vld [vmem:[%s1292] ss:$8 sm:$0xf]
      %v1294 = vld [vmem:[%s1292] ss:$8 sm:$0xf0]
      %v1295 = vor.u32 %v1293, %v1294
      %s1296 = scalar_lea.vmem %s4, 70
      %v1297 = vld [vmem:[%s1296] ss:$8 sm:$0x7]
      %v1300 = vlaneseq
      %v1301 = vshrl.u32 %v1300, 7
      %v1302 = vsub.s32 0, %v1301
      %v1303 = vrot.slane %v1295, %v1302
      %v1304 = vlaneseq
      %v1305 = vshrl.u32 %v1304, 7
      %v1306 = vsub.s32 1, %v1305
      %v1307 = vrot.slane %v1295, %v1306
      %v1308 = vlaneseq
      %v1309 = vshrl.u32 %v1308, 7
      %v1310 = vsub.s32 2, %v1309
      %v1311 = vrot.slane %v1295, %v1310
      %v1312 = vlaneseq
      %v1313 = vshrl.u32 %v1312, 7
      %v1314 = vsub.s32 3, %v1313
      %v1315 = vrot.slane %v1295, %v1314
      %v1316 = vlaneseq
      %v1317 = vshrl.u32 %v1316, 7
      %v1318 = vsub.s32 4, %v1317
      %v1319 = vrot.slane %v1295, %v1318
      %v1320 = vlaneseq
      %v1321 = vshrl.u32 %v1320, 7
      %v1322 = vsub.s32 5, %v1321
      %v1323 = vrot.slane %v1295, %v1322
      %v1324 = vlaneseq
      %v1325 = vshrl.u32 %v1324, 7
      %v1326 = vsub.s32 6, %v1325
      %v1327 = vrot.slane %v1295, %v1326
      %v1328 = vlaneseq
      %v1329 = vshrl.u32 %v1328, 7
      %v1330 = vsub.s32 7, %v1329
      %v1331 = vrot.slane %v1295, %v1330
      %v1332 = vlaneseq
      %v1333 = vshrl.u32 %v1332, 7
      %v1334 = vsub.s32 0, %v1333
      %v1335 = vrot.slane %v1297, %v1334
      %v1336 = vlaneseq
      %v1337 = vshrl.u32 %v1336, 7
      %v1338 = vsub.s32 1, %v1337
      %v1339 = vrot.slane %v1297, %v1338
      %v1340 = vlaneseq
      %v1341 = vshrl.u32 %v1340, 7
      %v1342 = vsub.s32 2, %v1341
      %v1343 = vrot.slane %v1297, %v1342
      %v1355 = vmul.f32 %v1290, %v1303
      %v1356 = vmul.f32 %v1289, %v1307
      %v1357 = vmul.f32 %v1288, %v1311
      %v1358 = vmul.f32 %v1287, %v1315
      %v1359 = vmul.f32 %v1286, %v1319
      %v1360 = vmul.f32 %v1285, %v1323
      %v1361 = vmul.f32 %v1284, %v1327
      %v1362 = vmul.f32 %v1283, %v1331
      %v1363 = vmul.f32 %v1282, %v1335
      %v1364 = vmul.f32 %v1281, %v1339
      %v1365 = vmul.f32 %v1291, %v1343
      %v1366 = vadd.f32 %v1247, %v1355
      %v1367 = vadd.f32 %v1248, %v1356
      %v1368 = vadd.f32 %v1249, %v1357
      %v1369 = vadd.f32 %v1250, %v1358
      %v1370 = vadd.f32 %v1251, %v1359
      %v1371 = vadd.f32 %v1252, %v1360
      %v1372 = vadd.f32 %v1253, %v1361
      %v1373 = vadd.f32 %v1254, %v1362
      %v1374 = vadd.f32 %v1255, %v1363
      %v1375 = vadd.f32 %v1256, %v1364
      %v1376 = vadd.f32 %v1257, %v1365
      %1377 = vrot.lane.b32.xlu0 %v577, 56
      %v1378 = vpop.permute.xlu0 %1377
      %1379 = vrot.lane.b32.xlu0 %v578, 56
      %v1380 = vpop.permute.xlu0 %1379
      %1381 = vrot.lane.b32.xlu0 %v579, 56
      %v1382 = vpop.permute.xlu0 %1381
      %1383 = vrot.lane.b32.xlu0 %v580, 56
      %v1384 = vpop.permute.xlu0 %1383
      %1385 = vrot.lane.b32.xlu0 %v581, 56
      %v1386 = vpop.permute.xlu0 %1385
      %1387 = vrot.lane.b32.xlu0 %v582, 56
      %v1388 = vpop.permute.xlu0 %1387
      %1389 = vrot.lane.b32.xlu0 %v583, 56
      %v1390 = vpop.permute.xlu0 %1389
      %1391 = vrot.lane.b32.xlu0 %v584, 56
      %v1392 = vpop.permute.xlu0 %1391
      %1393 = vrot.lane.b32.xlu0 %v585, 56
      %v1394 = vpop.permute.xlu0 %1393
      %1395 = vrot.lane.b32.xlu0 %v586, 56
      %v1396 = vpop.permute.xlu0 %1395
      %1397 = vrot.lane.b32.xlu0 %v587, 56
      %v1398 = vpop.permute.xlu0 %1397
      %vm1399 = vcmp.lt.s32.totalorder %v611, 56
      %v1400 = vsel %vm1399, %v1396, %v1398
      %v1401 = vsel %vm1399, %v1394, %v1396
      %v1402 = vsel %vm1399, %v1392, %v1394
      %v1403 = vsel %vm1399, %v1390, %v1392
      %v1404 = vsel %vm1399, %v1388, %v1390
      %v1405 = vsel %vm1399, %v1386, %v1388
      %v1406 = vsel %vm1399, %v1384, %v1386
      %v1407 = vsel %vm1399, %v1382, %v1384
      %v1408 = vsel %vm1399, %v1380, %v1382
      %v1409 = vsel %vm1399, %v1378, %v1380
      %v1410 = vsel %vm1399, %v1398, %v1378
      %s1411 = scalar_lea.vmem %s4, 7
      %v1412 = vld [vmem:[%s1411] ss:$8 sm:$0xf]
      %v1413 = vld [vmem:[%s1411] ss:$8 sm:$0xf0]
      %v1414 = vor.u32 %v1412, %v1413
      %s1415 = scalar_lea.vmem %s4, 71
      %v1416 = vld [vmem:[%s1415] ss:$8 sm:$0x7]
      %v1419 = vlaneseq
      %v1420 = vshrl.u32 %v1419, 7
      %v1421 = vsub.s32 0, %v1420
      %v1422 = vrot.slane %v1414, %v1421
      %v1423 = vlaneseq
      %v1424 = vshrl.u32 %v1423, 7
      %v1425 = vsub.s32 1, %v1424
      %v1426 = vrot.slane %v1414, %v1425
      %v1427 = vlaneseq
      %v1428 = vshrl.u32 %v1427, 7
      %v1429 = vsub.s32 2, %v1428
      %v1430 = vrot.slane %v1414, %v1429
      %v1431 = vlaneseq
      %v1432 = vshrl.u32 %v1431, 7
      %v1433 = vsub.s32 3, %v1432
      %v1434 = vrot.slane %v1414, %v1433
      %v1435 = vlaneseq
      %v1436 = vshrl.u32 %v1435, 7
      %v1437 = vsub.s32 4, %v1436
      %v1438 = vrot.slane %v1414, %v1437
      %v1439 = vlaneseq
      %v1440 = vshrl.u32 %v1439, 7
      %v1441 = vsub.s32 5, %v1440
      %v1442 = vrot.slane %v1414, %v1441
      %v1443 = vlaneseq
      %v1444 = vshrl.u32 %v1443, 7
      %v1445 = vsub.s32 6, %v1444
      %v1446 = vrot.slane %v1414, %v1445
      %v1447 = vlaneseq
      %v1448 = vshrl.u32 %v1447, 7
      %v1449 = vsub.s32 7, %v1448
      %v1450 = vrot.slane %v1414, %v1449
      %v1451 = vlaneseq
      %v1452 = vshrl.u32 %v1451, 7
      %v1453 = vsub.s32 0, %v1452
      %v1454 = vrot.slane %v1416, %v1453
      %v1455 = vlaneseq
      %v1456 = vshrl.u32 %v1455, 7
      %v1457 = vsub.s32 1, %v1456
      %v1458 = vrot.slane %v1416, %v1457
      %v1459 = vlaneseq
      %v1460 = vshrl.u32 %v1459, 7
      %v1461 = vsub.s32 2, %v1460
      %v1462 = vrot.slane %v1416, %v1461
      %v1474 = vmul.f32 %v1409, %v1422
      %v1475 = vmul.f32 %v1408, %v1426
      %v1476 = vmul.f32 %v1407, %v1430
      %v1477 = vmul.f32 %v1406, %v1434
      %v1478 = vmul.f32 %v1405, %v1438
      %v1479 = vmul.f32 %v1404, %v1442
      %v1480 = vmul.f32 %v1403, %v1446
      %v1481 = vmul.f32 %v1402, %v1450
      %v1482 = vmul.f32 %v1401, %v1454
      %v1483 = vmul.f32 %v1400, %v1458
      %v1484 = vmul.f32 %v1410, %v1462
      %v1485 = vadd.f32 %v1366, %v1474
      %v1486 = vadd.f32 %v1367, %v1475
      %v1487 = vadd.f32 %v1368, %v1476
      %v1488 = vadd.f32 %v1369, %v1477
      %v1489 = vadd.f32 %v1370, %v1478
      %v1490 = vadd.f32 %v1371, %v1479
      %v1491 = vadd.f32 %v1372, %v1480
      %v1492 = vadd.f32 %v1373, %v1481
      %v1493 = vadd.f32 %v1374, %v1482
      %v1494 = vadd.f32 %v1375, %v1483
      %v1495 = vadd.f32 %v1376, %v1484
      %1496 = vrot.lane.b32.xlu0 %v577, 52
      %v1497 = vpop.permute.xlu0 %1496
      %1498 = vrot.lane.b32.xlu0 %v578, 52
      %v1499 = vpop.permute.xlu0 %1498
      %1500 = vrot.lane.b32.xlu0 %v579, 52
      %v1501 = vpop.permute.xlu0 %1500
      %1502 = vrot.lane.b32.xlu0 %v580, 52
      %v1503 = vpop.permute.xlu0 %1502
      %1504 = vrot.lane.b32.xlu0 %v581, 52
      %v1505 = vpop.permute.xlu0 %1504
      %1506 = vrot.lane.b32.xlu0 %v582, 52
      %v1507 = vpop.permute.xlu0 %1506
      %1508 = vrot.lane.b32.xlu0 %v583, 52
      %v1509 = vpop.permute.xlu0 %1508
      %1510 = vrot.lane.b32.xlu0 %v584, 52
      %v1511 = vpop.permute.xlu0 %1510
      %1512 = vrot.lane.b32.xlu0 %v585, 52
      %v1513 = vpop.permute.xlu0 %1512
      %1514 = vrot.lane.b32.xlu0 %v586, 52
      %v1515 = vpop.permute.xlu0 %1514
      %1516 = vrot.lane.b32.xlu0 %v587, 52
      %v1517 = vpop.permute.xlu0 %1516
      %vm1518 = vcmp.lt.s32.totalorder %v611, 52
      %v1519 = vsel %vm1518, %v1515, %v1517
      %v1520 = vsel %vm1518, %v1513, %v1515
      %v1521 = vsel %vm1518, %v1511, %v1513
      %v1522 = vsel %vm1518, %v1509, %v1511
      %v1523 = vsel %vm1518, %v1507, %v1509
      %v1524 = vsel %vm1518, %v1505, %v1507
      %v1525 = vsel %vm1518, %v1503, %v1505
      %v1526 = vsel %vm1518, %v1501, %v1503
      %v1527 = vsel %vm1518, %v1499, %v1501
      %v1528 = vsel %vm1518, %v1497, %v1499
      %v1529 = vsel %vm1518, %v1517, %v1497
      %s1530 = scalar_lea.vmem %s4, 88
      %v1531 = vld [vmem:[%s1530] ss:$8 sm:$0xf]
      %v1532 = vld [vmem:[%s1530] ss:$8 sm:$0xf0]
      %v1533 = vor.u32 %v1531, %v1532
      %s1534 = scalar_lea.vmem %s4, 152
      %v1535 = vld [vmem:[%s1534] ss:$8 sm:$0x7]
      %v1538 = vlaneseq
      %v1539 = vshrl.u32 %v1538, 7
      %v1540 = vsub.s32 0, %v1539
      %v1541 = vrot.slane %v1533, %v1540
      %v1542 = vlaneseq
      %v1543 = vshrl.u32 %v1542, 7
      %v1544 = vsub.s32 1, %v1543
      %v1545 = vrot.slane %v1533, %v1544
      %v1546 = vlaneseq
      %v1547 = vshrl.u32 %v1546, 7
      %v1548 = vsub.s32 2, %v1547
      %v1549 = vrot.slane %v1533, %v1548
      %v1550 = vlaneseq
      %v1551 = vshrl.u32 %v1550, 7
      %v1552 = vsub.s32 3, %v1551
      %v1553 = vrot.slane %v1533, %v1552
      %v1554 = vlaneseq
      %v1555 = vshrl.u32 %v1554, 7
      %v1556 = vsub.s32 4, %v1555
      %v1557 = vrot.slane %v1533, %v1556
      %v1558 = vlaneseq
      %v1559 = vshrl.u32 %v1558, 7
      %v1560 = vsub.s32 5, %v1559
      %v1561 = vrot.slane %v1533, %v1560
      %v1562 = vlaneseq
      %v1563 = vshrl.u32 %v1562, 7
      %v1564 = vsub.s32 6, %v1563
      %v1565 = vrot.slane %v1533, %v1564
      %v1566 = vlaneseq
      %v1567 = vshrl.u32 %v1566, 7
      %v1568 = vsub.s32 7, %v1567
      %v1569 = vrot.slane %v1533, %v1568
      %v1570 = vlaneseq
      %v1571 = vshrl.u32 %v1570, 7
      %v1572 = vsub.s32 0, %v1571
      %v1573 = vrot.slane %v1535, %v1572
      %v1574 = vlaneseq
      %v1575 = vshrl.u32 %v1574, 7
      %v1576 = vsub.s32 1, %v1575
      %v1577 = vrot.slane %v1535, %v1576
      %v1578 = vlaneseq
      %v1579 = vshrl.u32 %v1578, 7
      %v1580 = vsub.s32 2, %v1579
      %v1581 = vrot.slane %v1535, %v1580
      %v1593 = vmul.f32 %v1528, %v1541
      %v1594 = vmul.f32 %v1527, %v1545
      %v1595 = vmul.f32 %v1526, %v1549
      %v1596 = vmul.f32 %v1525, %v1553
      %v1597 = vmul.f32 %v1524, %v1557
      %v1598 = vmul.f32 %v1523, %v1561
      %v1599 = vmul.f32 %v1522, %v1565
      %v1600 = vmul.f32 %v1521, %v1569
      %v1601 = vmul.f32 %v1520, %v1573
      %v1602 = vmul.f32 %v1519, %v1577
      %v1603 = vmul.f32 %v1529, %v1581
      %v1604 = vadd.f32 %v1485, %v1593
      %v1605 = vadd.f32 %v1486, %v1594
      %v1606 = vadd.f32 %v1487, %v1595
      %v1607 = vadd.f32 %v1488, %v1596
      %v1608 = vadd.f32 %v1489, %v1597
      %v1609 = vadd.f32 %v1490, %v1598
      %v1610 = vadd.f32 %v1491, %v1599
      %v1611 = vadd.f32 %v1492, %v1600
      %v1612 = vadd.f32 %v1493, %v1601
      %v1613 = vadd.f32 %v1494, %v1602
      %v1614 = vadd.f32 %v1495, %v1603
      %v1626 = vrot.slane %v1604, 7
      %v1627 = vrot.slane %v1605, 7
      %v1628 = vrot.slane %v1606, 7
      %v1629 = vrot.slane %v1607, 7
      %v1630 = vrot.slane %v1608, 7
      %v1631 = vrot.slane %v1609, 7
      %v1632 = vrot.slane %v1610, 7
      %v1633 = vrot.slane %v1611, 7
      %v1634 = vrot.slane %v1612, 7
      %v1635 = vrot.slane %v1613, 7
      %v1636 = vrot.slane %v1614, 7
      %1648 = vst [vmem:[#allocation2] sm:$0xfe] %v1626
      %1649 = vst [vmem:[#allocation2 + $0x8] sm:$0xfe] %v1627
      %1650 = vst [vmem:[#allocation2 + $0x10] sm:$0xfe] %v1628
      %1651 = vst [vmem:[#allocation2 + $0x18] sm:$0xfe] %v1629
      %1652 = vst [vmem:[#allocation2 + $0x20] sm:$0xfe] %v1630
      %1653 = vst [vmem:[#allocation2 + $0x28] sm:$0xfe] %v1631
      %1654 = vst [vmem:[#allocation2 + $0x30] sm:$0xfe] %v1632
      %1655 = vst [vmem:[#allocation2 + $0x38] sm:$0xfe] %v1633
      %1656 = vst [vmem:[#allocation2 + $0x40] sm:$0xfe] %v1634
      %1657 = vst [vmem:[#allocation2 + $0x48] sm:$0xfe] %v1635
      %1658 = vst [vmem:[#allocation2 + $0x50] sm:$0xfe] %v1636
      %1659 = vst [vmem:[#allocation2 + $0x58] sm:$0x1] %v1626
      %1660 = vst [vmem:[#allocation2 + $0x60] sm:$0x1] %v1627
      %1661 = vst [vmem:[#allocation2 + $0x68] sm:$0x1] %v1628
      %1662 = vst [vmem:[#allocation2 + $0x70] sm:$0x1] %v1629
      %1663 = vst [vmem:[#allocation2 + $0x78] sm:$0x1] %v1630
      %1664 = vst [vmem:[#allocation2 + $0x80] sm:$0x1] %v1631
      %1665 = vst [vmem:[#allocation2 + $0x88] sm:$0x1] %v1632
      %1666 = vst [vmem:[#allocation2 + $0x90] sm:$0x1] %v1633
      %1667 = vst [vmem:[#allocation2 + $0x98] sm:$0x1] %v1634
      %1668 = vst [vmem:[#allocation2 + $0xa0] sm:$0x1] %v1635
      %1669 = vst [vmem:[#allocation2 + $0xa8] sm:$0x1] %v1636
      %v1670 = vld [vmem:[#allocation2] sm:$0xff]
      %v1671 = vld [vmem:[#allocation2 + $0x8] sm:$0xff]
      %v1672 = vld [vmem:[#allocation2 + $0x10] sm:$0xff]
      %v1673 = vld [vmem:[#allocation2 + $0x18] sm:$0xff]
      %v1674 = vld [vmem:[#allocation2 + $0x20] sm:$0xff]
      %v1675 = vld [vmem:[#allocation2 + $0x28] sm:$0xff]
      %v1676 = vld [vmem:[#allocation2 + $0x30] sm:$0xff]
      %v1677 = vld [vmem:[#allocation2 + $0x38] sm:$0xff]
      %v1678 = vld [vmem:[#allocation2 + $0x40] sm:$0xff]
      %v1679 = vld [vmem:[#allocation2 + $0x48] sm:$0xff]
      %v1680 = vld [vmem:[#allocation2 + $0x50] sm:$0xff]
      %v1681 = vld [vmem:[%s5] ss:$4 sm:$0xff]
      %s1682 = scalar_lea.vmem %s5, 32
      %v1683 = vld [vmem:[%s1682] ss:$4 sm:$0x7]
      %v1686 = vlaneseq
      %v1687 = vshrl.u32 %v1686, 7
      %v1688 = vsub.s32 0, %v1687
      %v1689 = vrot.slane %v1681, %v1688
      %v1690 = vlaneseq
      %v1691 = vshrl.u32 %v1690, 7
      %v1692 = vsub.s32 1, %v1691
      %v1693 = vrot.slane %v1681, %v1692
      %v1694 = vlaneseq
      %v1695 = vshrl.u32 %v1694, 7
      %v1696 = vsub.s32 2, %v1695
      %v1697 = vrot.slane %v1681, %v1696
      %v1698 = vlaneseq
      %v1699 = vshrl.u32 %v1698, 7
      %v1700 = vsub.s32 3, %v1699
      %v1701 = vrot.slane %v1681, %v1700
      %v1702 = vlaneseq
      %v1703 = vshrl.u32 %v1702, 7
      %v1704 = vsub.s32 4, %v1703
      %v1705 = vrot.slane %v1681, %v1704
      %v1706 = vlaneseq
      %v1707 = vshrl.u32 %v1706, 7
      %v1708 = vsub.s32 5, %v1707
      %v1709 = vrot.slane %v1681, %v1708
      %v1710 = vlaneseq
      %v1711 = vshrl.u32 %v1710, 7
      %v1712 = vsub.s32 6, %v1711
      %v1713 = vrot.slane %v1681, %v1712
      %v1714 = vlaneseq
      %v1715 = vshrl.u32 %v1714, 7
      %v1716 = vsub.s32 7, %v1715
      %v1717 = vrot.slane %v1681, %v1716
      %v1718 = vlaneseq
      %v1719 = vshrl.u32 %v1718, 7
      %v1720 = vsub.s32 0, %v1719
      %v1721 = vrot.slane %v1683, %v1720
      %v1722 = vlaneseq
      %v1723 = vshrl.u32 %v1722, 7
      %v1724 = vsub.s32 1, %v1723
      %v1725 = vrot.slane %v1683, %v1724
      %v1726 = vlaneseq
      %v1727 = vshrl.u32 %v1726, 7
      %v1728 = vsub.s32 2, %v1727
      %v1729 = vrot.slane %v1683, %v1728
      %v1741 = vmul.f32 %v1670, %v1689
      %v1742 = vmul.f32 %v1671, %v1693
      %v1743 = vmul.f32 %v1672, %v1697
      %v1744 = vmul.f32 %v1673, %v1701
      %v1745 = vmul.f32 %v1674, %v1705
      %v1746 = vmul.f32 %v1675, %v1709
      %v1747 = vmul.f32 %v1676, %v1713
      %v1748 = vmul.f32 %v1677, %v1717
      %v1749 = vmul.f32 %v1678, %v1721
      %v1750 = vmul.f32 %v1679, %v1725
      %v1751 = vmul.f32 %v1680, %v1729
      %v1752 = vld [vmem:[#allocation2] sm:$0xfe]
      %v1753 = vld [vmem:[#allocation2 + $0x8] sm:$0xfe]
      %v1754 = vld [vmem:[#allocation2 + $0x10] sm:$0xfe]
      %v1755 = vld [vmem:[#allocation2 + $0x18] sm:$0xfe]
      %v1756 = vld [vmem:[#allocation2 + $0x20] sm:$0xfe]
      %v1757 = vld [vmem:[#allocation2 + $0x28] sm:$0xfe]
      %v1758 = vld [vmem:[#allocation2 + $0x30] sm:$0xfe]
      %v1759 = vld [vmem:[#allocation2 + $0x38] sm:$0xfe]
      %v1760 = vld [vmem:[#allocation2 + $0x40] sm:$0xfe]
      %v1761 = vld [vmem:[#allocation2 + $0x48] sm:$0xfe]
      %v1762 = vld [vmem:[#allocation2 + $0x50] sm:$0xfe]
      %v1763 = vld [vmem:[#allocation2 + $0x58] sm:$0x1]
      %v1764 = vld [vmem:[#allocation2 + $0x60] sm:$0x1]
      %v1765 = vld [vmem:[#allocation2 + $0x68] sm:$0x1]
      %v1766 = vld [vmem:[#allocation2 + $0x70] sm:$0x1]
      %v1767 = vld [vmem:[#allocation2 + $0x78] sm:$0x1]
      %v1768 = vld [vmem:[#allocation2 + $0x80] sm:$0x1]
      %v1769 = vld [vmem:[#allocation2 + $0x88] sm:$0x1]
      %v1770 = vld [vmem:[#allocation2 + $0x90] sm:$0x1]
      %v1771 = vld [vmem:[#allocation2 + $0x98] sm:$0x1]
      %v1772 = vld [vmem:[#allocation2 + $0xa0] sm:$0x1]
      %v1773 = vld [vmem:[#allocation2 + $0xa8] sm:$0x1]
      %s1774 = scalar_lea.vmem %s5, 1
      %v1775 = vld [vmem:[%s1774] ss:$4 sm:$0xff]
      %s1776 = scalar_lea.vmem %s5, 33
      %v1777 = vld [vmem:[%s1776] ss:$4 sm:$0x7]
      %v1780 = vlaneseq
      %v1781 = vshrl.u32 %v1780, 7
      %v1782 = vsub.s32 0, %v1781
      %v1783 = vrot.slane %v1775, %v1782
      %v1784 = vlaneseq
      %v1785 = vshrl.u32 %v1784, 7
      %v1786 = vsub.s32 1, %v1785
      %v1787 = vrot.slane %v1775, %v1786
      %v1788 = vlaneseq
      %v1789 = vshrl.u32 %v1788, 7
      %v1790 = vsub.s32 2, %v1789
      %v1791 = vrot.slane %v1775, %v1790
      %v1792 = vlaneseq
      %v1793 = vshrl.u32 %v1792, 7
      %v1794 = vsub.s32 3, %v1793
      %v1795 = vrot.slane %v1775, %v1794
      %v1796 = vlaneseq
      %v1797 = vshrl.u32 %v1796, 7
      %v1798 = vsub.s32 4, %v1797
      %v1799 = vrot.slane %v1775, %v1798
      %v1800 = vlaneseq
      %v1801 = vshrl.u32 %v1800, 7
      %v1802 = vsub.s32 5, %v1801
      %v1803 = vrot.slane %v1775, %v1802
      %v1804 = vlaneseq
      %v1805 = vshrl.u32 %v1804, 7
      %v1806 = vsub.s32 6, %v1805
      %v1807 = vrot.slane %v1775, %v1806
      %v1808 = vlaneseq
      %v1809 = vshrl.u32 %v1808, 7
      %v1810 = vsub.s32 7, %v1809
      %v1811 = vrot.slane %v1775, %v1810
      %v1812 = vlaneseq
      %v1813 = vshrl.u32 %v1812, 7
      %v1814 = vsub.s32 0, %v1813
      %v1815 = vrot.slane %v1777, %v1814
      %v1816 = vlaneseq
      %v1817 = vshrl.u32 %v1816, 7
      %v1818 = vsub.s32 1, %v1817
      %v1819 = vrot.slane %v1777, %v1818
      %v1820 = vlaneseq
      %v1821 = vshrl.u32 %v1820, 7
      %v1822 = vsub.s32 2, %v1821
      %v1823 = vrot.slane %v1777, %v1822
      %v1835 = vmul.f32 %v1752, %v1783
      %v1836 = vmul.f32 %v1753, %v1787
      %v1837 = vmul.f32 %v1754, %v1791
      %v1838 = vmul.f32 %v1755, %v1795
      %v1839 = vmul.f32 %v1756, %v1799
      %v1840 = vmul.f32 %v1757, %v1803
      %v1841 = vmul.f32 %v1758, %v1807
      %v1842 = vmul.f32 %v1759, %v1811
      %v1843 = vmul.f32 %v1760, %v1815
      %v1844 = vmul.f32 %v1761, %v1819
      %v1845 = vmul.f32 %v1762, %v1823
      %v1846 = vmul.f32 %v1763, %v1783
      %v1847 = vmul.f32 %v1764, %v1787
      %v1848 = vmul.f32 %v1765, %v1791
      %v1849 = vmul.f32 %v1766, %v1795
      %v1850 = vmul.f32 %v1767, %v1799
      %v1851 = vmul.f32 %v1768, %v1803
      %v1852 = vmul.f32 %v1769, %v1807
      %v1853 = vmul.f32 %v1770, %v1811
      %v1854 = vmul.f32 %v1771, %v1815
      %v1855 = vmul.f32 %v1772, %v1819
      %v1856 = vmul.f32 %v1773, %v1823
      %vm1879 = vcmask 1046528
      %v1880 = vrot.slane %v1835, 1
      %v1881 = vrot.slane %v1846, 1
      %v1882 = vsel %vm1879, %v1880, %v1881
      %v1883 = vrot.slane %v1836, 1
      %v1884 = vrot.slane %v1847, 1
      %v1885 = vsel %vm1879, %v1883, %v1884
      %v1886 = vrot.slane %v1837, 1
      %v1887 = vrot.slane %v1848, 1
      %v1888 = vsel %vm1879, %v1886, %v1887
      %v1889 = vrot.slane %v1838, 1
      %v1890 = vrot.slane %v1849, 1
      %v1891 = vsel %vm1879, %v1889, %v1890
      %v1892 = vrot.slane %v1839, 1
      %v1893 = vrot.slane %v1850, 1
      %v1894 = vsel %vm1879, %v1892, %v1893
      %v1895 = vrot.slane %v1840, 1
      %v1896 = vrot.slane %v1851, 1
      %v1897 = vsel %vm1879, %v1895, %v1896
      %v1898 = vrot.slane %v1841, 1
      %v1899 = vrot.slane %v1852, 1
      %v1900 = vsel %vm1879, %v1898, %v1899
      %v1901 = vrot.slane %v1842, 1
      %v1902 = vrot.slane %v1853, 1
      %v1903 = vsel %vm1879, %v1901, %v1902
      %v1904 = vrot.slane %v1843, 1
      %v1905 = vrot.slane %v1854, 1
      %v1906 = vsel %vm1879, %v1904, %v1905
      %v1907 = vrot.slane %v1844, 1
      %v1908 = vrot.slane %v1855, 1
      %v1909 = vsel %vm1879, %v1907, %v1908
      %v1910 = vrot.slane %v1845, 1
      %v1911 = vrot.slane %v1856, 1
      %v1912 = vsel %vm1879, %v1910, %v1911
      %v1924 = vadd.f32 %v1741, %v1882
      %v1925 = vadd.f32 %v1742, %v1885
      %v1926 = vadd.f32 %v1743, %v1888
      %v1927 = vadd.f32 %v1744, %v1891
      %v1928 = vadd.f32 %v1745, %v1894
      %v1929 = vadd.f32 %v1746, %v1897
      %v1930 = vadd.f32 %v1747, %v1900
      %v1931 = vadd.f32 %v1748, %v1903
      %v1932 = vadd.f32 %v1749, %v1906
      %v1933 = vadd.f32 %v1750, %v1909
      %v1934 = vadd.f32 %v1751, %v1912
      %v1935 = vld [vmem:[#allocation2] sm:$0xfc]
      %v1936 = vld [vmem:[#allocation2 + $0x8] sm:$0xfc]
      %v1937 = vld [vmem:[#allocation2 + $0x10] sm:$0xfc]
      %v1938 = vld [vmem:[#allocation2 + $0x18] sm:$0xfc]
      %v1939 = vld [vmem:[#allocation2 + $0x20] sm:$0xfc]
      %v1940 = vld [vmem:[#allocation2 + $0x28] sm:$0xfc]
      %v1941 = vld [vmem:[#allocation2 + $0x30] sm:$0xfc]
      %v1942 = vld [vmem:[#allocation2 + $0x38] sm:$0xfc]
      %v1943 = vld [vmem:[#allocation2 + $0x40] sm:$0xfc]
      %v1944 = vld [vmem:[#allocation2 + $0x48] sm:$0xfc]
      %v1945 = vld [vmem:[#allocation2 + $0x50] sm:$0xfc]
      %v1946 = vld [vmem:[#allocation2 + $0x58] sm:$0x3]
      %v1947 = vld [vmem:[#allocation2 + $0x60] sm:$0x3]
      %v1948 = vld [vmem:[#allocation2 + $0x68] sm:$0x3]
      %v1949 = vld [vmem:[#allocation2 + $0x70] sm:$0x3]
      %v1950 = vld [vmem:[#allocation2 + $0x78] sm:$0x3]
      %v1951 = vld [vmem:[#allocation2 + $0x80] sm:$0x3]
      %v1952 = vld [vmem:[#allocation2 + $0x88] sm:$0x3]
      %v1953 = vld [vmem:[#allocation2 + $0x90] sm:$0x3]
      %v1954 = vld [vmem:[#allocation2 + $0x98] sm:$0x3]
      %v1955 = vld [vmem:[#allocation2 + $0xa0] sm:$0x3]
      %v1956 = vld [vmem:[#allocation2 + $0xa8] sm:$0x3]
      %s1957 = scalar_lea.vmem %s5, 2
      %v1958 = vld [vmem:[%s1957] ss:$4 sm:$0xff]
      %s1959 = scalar_lea.vmem %s5, 34
      %v1960 = vld [vmem:[%s1959] ss:$4 sm:$0x7]
      %v1963 = vlaneseq
      %v1964 = vshrl.u32 %v1963, 7
      %v1965 = vsub.s32 0, %v1964
      %v1966 = vrot.slane %v1958, %v1965
      %v1967 = vlaneseq
      %v1968 = vshrl.u32 %v1967, 7
      %v1969 = vsub.s32 1, %v1968
      %v1970 = vrot.slane %v1958, %v1969
      %v1971 = vlaneseq
      %v1972 = vshrl.u32 %v1971, 7
      %v1973 = vsub.s32 2, %v1972
      %v1974 = vrot.slane %v1958, %v1973
      %v1975 = vlaneseq
      %v1976 = vshrl.u32 %v1975, 7
      %v1977 = vsub.s32 3, %v1976
      %v1978 = vrot.slane %v1958, %v1977
      %v1979 = vlaneseq
      %v1980 = vshrl.u32 %v1979, 7
      %v1981 = vsub.s32 4, %v1980
      %v1982 = vrot.slane %v1958, %v1981
      %v1983 = vlaneseq
      %v1984 = vshrl.u32 %v1983, 7
      %v1985 = vsub.s32 5, %v1984
      %v1986 = vrot.slane %v1958, %v1985
      %v1987 = vlaneseq
      %v1988 = vshrl.u32 %v1987, 7
      %v1989 = vsub.s32 6, %v1988
      %v1990 = vrot.slane %v1958, %v1989
      %v1991 = vlaneseq
      %v1992 = vshrl.u32 %v1991, 7
      %v1993 = vsub.s32 7, %v1992
      %v1994 = vrot.slane %v1958, %v1993
      %v1995 = vlaneseq
      %v1996 = vshrl.u32 %v1995, 7
      %v1997 = vsub.s32 0, %v1996
      %v1998 = vrot.slane %v1960, %v1997
      %v1999 = vlaneseq
      %v2000 = vshrl.u32 %v1999, 7
      %v2001 = vsub.s32 1, %v2000
      %v2002 = vrot.slane %v1960, %v2001
      %v2003 = vlaneseq
      %v2004 = vshrl.u32 %v2003, 7
      %v2005 = vsub.s32 2, %v2004
      %v2006 = vrot.slane %v1960, %v2005
      %v2018 = vmul.f32 %v1935, %v1966
      %v2019 = vmul.f32 %v1936, %v1970
      %v2020 = vmul.f32 %v1937, %v1974
      %v2021 = vmul.f32 %v1938, %v1978
      %v2022 = vmul.f32 %v1939, %v1982
      %v2023 = vmul.f32 %v1940, %v1986
      %v2024 = vmul.f32 %v1941, %v1990
      %v2025 = vmul.f32 %v1942, %v1994
      %v2026 = vmul.f32 %v1943, %v1998
      %v2027 = vmul.f32 %v1944, %v2002
      %v2028 = vmul.f32 %v1945, %v2006
      %v2029 = vmul.f32 %v1946, %v1966
      %v2030 = vmul.f32 %v1947, %v1970
      %v2031 = vmul.f32 %v1948, %v1974
      %v2032 = vmul.f32 %v1949, %v1978
      %v2033 = vmul.f32 %v1950, %v1982
      %v2034 = vmul.f32 %v1951, %v1986
      %v2035 = vmul.f32 %v1952, %v1990
      %v2036 = vmul.f32 %v1953, %v1994
      %v2037 = vmul.f32 %v1954, %v1998
      %v2038 = vmul.f32 %v1955, %v2002
      %v2039 = vmul.f32 %v1956, %v2006
      %vm2062 = vcmask 1045504
      %v2063 = vrot.slane %v2018, 2
      %v2064 = vrot.slane %v2029, 2
      %v2065 = vsel %vm2062, %v2063, %v2064
      %v2066 = vrot.slane %v2019, 2
      %v2067 = vrot.slane %v2030, 2
      %v2068 = vsel %vm2062, %v2066, %v2067
      %v2069 = vrot.slane %v2020, 2
      %v2070 = vrot.slane %v2031, 2
      %v2071 = vsel %vm2062, %v2069, %v2070
      %v2072 = vrot.slane %v2021, 2
      %v2073 = vrot.slane %v2032, 2
      %v2074 = vsel %vm2062, %v2072, %v2073
      %v2075 = vrot.slane %v2022, 2
      %v2076 = vrot.slane %v2033, 2
      %v2077 = vsel %vm2062, %v2075, %v2076
      %v2078 = vrot.slane %v2023, 2
      %v2079 = vrot.slane %v2034, 2
      %v2080 = vsel %vm2062, %v2078, %v2079
      %v2081 = vrot.slane %v2024, 2
      %v2082 = vrot.slane %v2035, 2
      %v2083 = vsel %vm2062, %v2081, %v2082
      %v2084 = vrot.slane %v2025, 2
      %v2085 = vrot.slane %v2036, 2
      %v2086 = vsel %vm2062, %v2084, %v2085
      %v2087 = vrot.slane %v2026, 2
      %v2088 = vrot.slane %v2037, 2
      %v2089 = vsel %vm2062, %v2087, %v2088
      %v2090 = vrot.slane %v2027, 2
      %v2091 = vrot.slane %v2038, 2
      %v2092 = vsel %vm2062, %v2090, %v2091
      %v2093 = vrot.slane %v2028, 2
      %v2094 = vrot.slane %v2039, 2
      %v2095 = vsel %vm2062, %v2093, %v2094
      %v2107 = vadd.f32 %v1924, %v2065
      %v2108 = vadd.f32 %v1925, %v2068
      %v2109 = vadd.f32 %v1926, %v2071
      %v2110 = vadd.f32 %v1927, %v2074
      %v2111 = vadd.f32 %v1928, %v2077
      %v2112 = vadd.f32 %v1929, %v2080
      %v2113 = vadd.f32 %v1930, %v2083
      %v2114 = vadd.f32 %v1931, %v2086
      %v2115 = vadd.f32 %v1932, %v2089
      %v2116 = vadd.f32 %v1933, %v2092
      %v2117 = vadd.f32 %v1934, %v2095
      %s2118 = scalar_lea.vmem %s6, 3
      %v2119 = vld [vmem:[%s2118] ss:$8 sm:$0xf]
      %v2120 = vld [vmem:[%s2118] ss:$8 sm:$0xf0]
      %v2121 = vor.u32 %v2119, %v2120
      %s2122 = scalar_lea.vmem %s6, 67
      %v2123 = vld [vmem:[%s2122] ss:$8 sm:$0x7]
      %v2126 = vlaneseq
      %v2127 = vshrl.u32 %v2126, 7
      %v2128 = vsub.s32 0, %v2127
      %v2129 = vrot.slane %v2121, %v2128
      %v2130 = vlaneseq
      %v2131 = vshrl.u32 %v2130, 7
      %v2132 = vsub.s32 1, %v2131
      %v2133 = vrot.slane %v2121, %v2132
      %v2134 = vlaneseq
      %v2135 = vshrl.u32 %v2134, 7
      %v2136 = vsub.s32 2, %v2135
      %v2137 = vrot.slane %v2121, %v2136
      %v2138 = vlaneseq
      %v2139 = vshrl.u32 %v2138, 7
      %v2140 = vsub.s32 3, %v2139
      %v2141 = vrot.slane %v2121, %v2140
      %v2142 = vlaneseq
      %v2143 = vshrl.u32 %v2142, 7
      %v2144 = vsub.s32 4, %v2143
      %v2145 = vrot.slane %v2121, %v2144
      %v2146 = vlaneseq
      %v2147 = vshrl.u32 %v2146, 7
      %v2148 = vsub.s32 5, %v2147
      %v2149 = vrot.slane %v2121, %v2148
      %v2150 = vlaneseq
      %v2151 = vshrl.u32 %v2150, 7
      %v2152 = vsub.s32 6, %v2151
      %v2153 = vrot.slane %v2121, %v2152
      %v2154 = vlaneseq
      %v2155 = vshrl.u32 %v2154, 7
      %v2156 = vsub.s32 7, %v2155
      %v2157 = vrot.slane %v2121, %v2156
      %v2158 = vlaneseq
      %v2159 = vshrl.u32 %v2158, 7
      %v2160 = vsub.s32 0, %v2159
      %v2161 = vrot.slane %v2123, %v2160
      %v2162 = vlaneseq
      %v2163 = vshrl.u32 %v2162, 7
      %v2164 = vsub.s32 1, %v2163
      %v2165 = vrot.slane %v2123, %v2164
      %v2166 = vlaneseq
      %v2167 = vshrl.u32 %v2166, 7
      %v2168 = vsub.s32 2, %v2167
      %v2169 = vrot.slane %v2123, %v2168
      %v2181 = vmul.f32 %v2107, %v2129
      %v2182 = vmul.f32 %v2108, %v2133
      %v2183 = vmul.f32 %v2109, %v2137
      %v2184 = vmul.f32 %v2110, %v2141
      %v2185 = vmul.f32 %v2111, %v2145
      %v2186 = vmul.f32 %v2112, %v2149
      %v2187 = vmul.f32 %v2113, %v2153
      %v2188 = vmul.f32 %v2114, %v2157
      %v2189 = vmul.f32 %v2115, %v2161
      %v2190 = vmul.f32 %v2116, %v2165
      %v2191 = vmul.f32 %v2117, %v2169
      %2192 = vrot.lane.b32.xlu0 %v2107, 1
      %v2193 = vpop.permute.xlu0 %2192
      %2194 = vrot.lane.b32.xlu0 %v2108, 1
      %v2195 = vpop.permute.xlu0 %2194
      %2196 = vrot.lane.b32.xlu0 %v2109, 1
      %v2197 = vpop.permute.xlu0 %2196
      %2198 = vrot.lane.b32.xlu0 %v2110, 1
      %v2199 = vpop.permute.xlu0 %2198
      %2200 = vrot.lane.b32.xlu0 %v2111, 1
      %v2201 = vpop.permute.xlu0 %2200
      %2202 = vrot.lane.b32.xlu0 %v2112, 1
      %v2203 = vpop.permute.xlu0 %2202
      %2204 = vrot.lane.b32.xlu0 %v2113, 1
      %v2205 = vpop.permute.xlu0 %2204
      %2206 = vrot.lane.b32.xlu0 %v2114, 1
      %v2207 = vpop.permute.xlu0 %2206
      %2208 = vrot.lane.b32.xlu0 %v2115, 1
      %v2209 = vpop.permute.xlu0 %2208
      %2210 = vrot.lane.b32.xlu0 %v2116, 1
      %v2211 = vpop.permute.xlu0 %2210
      %2212 = vrot.lane.b32.xlu0 %v2117, 1
      %v2213 = vpop.permute.xlu0 %2212
      %vm2214 = vcmp.lt.s32.totalorder %v611, 1
      %v2215 = vsel %vm2214, %v2211, %v2213
      %v2216 = vsel %vm2214, %v2209, %v2211
      %v2217 = vsel %vm2214, %v2207, %v2209
      %v2218 = vsel %vm2214, %v2205, %v2207
      %v2219 = vsel %vm2214, %v2203, %v2205
      %v2220 = vsel %vm2214, %v2201, %v2203
      %v2221 = vsel %vm2214, %v2199, %v2201
      %v2222 = vsel %vm2214, %v2197, %v2199
      %v2223 = vsel %vm2214, %v2195, %v2197
      %v2224 = vsel %vm2214, %v2193, %v2195
      %v2225 = vsel %vm2214, %v2213, %v2193
      %s2226 = scalar_lea.vmem %s6, 4
      %v2227 = vld [vmem:[%s2226] ss:$8 sm:$0xf]
      %v2228 = vld [vmem:[%s2226] ss:$8 sm:$0xf0]
      %v2229 = vor.u32 %v2227, %v2228
      %s2230 = scalar_lea.vmem %s6, 68
      %v2231 = vld [vmem:[%s2230] ss:$8 sm:$0x7]
      %v2234 = vlaneseq
      %v2235 = vshrl.u32 %v2234, 7
      %v2236 = vsub.s32 0, %v2235
      %v2237 = vrot.slane %v2229, %v2236
      %v2238 = vlaneseq
      %v2239 = vshrl.u32 %v2238, 7
      %v2240 = vsub.s32 1, %v2239
      %v2241 = vrot.slane %v2229, %v2240
      %v2242 = vlaneseq
      %v2243 = vshrl.u32 %v2242, 7
      %v2244 = vsub.s32 2, %v2243
      %v2245 = vrot.slane %v2229, %v2244
      %v2246 = vlaneseq
      %v2247 = vshrl.u32 %v2246, 7
      %v2248 = vsub.s32 3, %v2247
      %v2249 = vrot.slane %v2229, %v2248
      %v2250 = vlaneseq
      %v2251 = vshrl.u32 %v2250, 7
      %v2252 = vsub.s32 4, %v2251
      %v2253 = vrot.slane %v2229, %v2252
      %v2254 = vlaneseq
      %v2255 = vshrl.u32 %v2254, 7
      %v2256 = vsub.s32 5, %v2255
      %v2257 = vrot.slane %v2229, %v2256
      %v2258 = vlaneseq
      %v2259 = vshrl.u32 %v2258, 7
      %v2260 = vsub.s32 6, %v2259
      %v2261 = vrot.slane %v2229, %v2260
      %v2262 = vlaneseq
      %v2263 = vshrl.u32 %v2262, 7
      %v2264 = vsub.s32 7, %v2263
      %v2265 = vrot.slane %v2229, %v2264
      %v2266 = vlaneseq
      %v2267 = vshrl.u32 %v2266, 7
      %v2268 = vsub.s32 0, %v2267
      %v2269 = vrot.slane %v2231, %v2268
      %v2270 = vlaneseq
      %v2271 = vshrl.u32 %v2270, 7
      %v2272 = vsub.s32 1, %v2271
      %v2273 = vrot.slane %v2231, %v2272
      %v2274 = vlaneseq
      %v2275 = vshrl.u32 %v2274, 7
      %v2276 = vsub.s32 2, %v2275
      %v2277 = vrot.slane %v2231, %v2276
      %v2289 = vmul.f32 %v2225, %v2237
      %v2290 = vmul.f32 %v2224, %v2241
      %v2291 = vmul.f32 %v2223, %v2245
      %v2292 = vmul.f32 %v2222, %v2249
      %v2293 = vmul.f32 %v2221, %v2253
      %v2294 = vmul.f32 %v2220, %v2257
      %v2295 = vmul.f32 %v2219, %v2261
      %v2296 = vmul.f32 %v2218, %v2265
      %v2297 = vmul.f32 %v2217, %v2269
      %v2298 = vmul.f32 %v2216, %v2273
      %v2299 = vmul.f32 %v2215, %v2277
      %v2300 = vadd.f32 %v2181, %v2289
      %v2301 = vadd.f32 %v2182, %v2290
      %v2302 = vadd.f32 %v2183, %v2291
      %v2303 = vadd.f32 %v2184, %v2292
      %v2304 = vadd.f32 %v2185, %v2293
      %v2305 = vadd.f32 %v2186, %v2294
      %v2306 = vadd.f32 %v2187, %v2295
      %v2307 = vadd.f32 %v2188, %v2296
      %v2308 = vadd.f32 %v2189, %v2297
      %v2309 = vadd.f32 %v2190, %v2298
      %v2310 = vadd.f32 %v2191, %v2299
      %2311 = vrot.lane.b32.xlu0 %v2107, 127
      %v2312 = vpop.permute.xlu0 %2311
      %2313 = vrot.lane.b32.xlu0 %v2108, 127
      %v2314 = vpop.permute.xlu0 %2313
      %2315 = vrot.lane.b32.xlu0 %v2109, 127
      %v2316 = vpop.permute.xlu0 %2315
      %2317 = vrot.lane.b32.xlu0 %v2110, 127
      %v2318 = vpop.permute.xlu0 %2317
      %2319 = vrot.lane.b32.xlu0 %v2111, 127
      %v2320 = vpop.permute.xlu0 %2319
      %2321 = vrot.lane.b32.xlu0 %v2112, 127
      %v2322 = vpop.permute.xlu0 %2321
      %2323 = vrot.lane.b32.xlu0 %v2113, 127
      %v2324 = vpop.permute.xlu0 %2323
      %2325 = vrot.lane.b32.xlu0 %v2114, 127
      %v2326 = vpop.permute.xlu0 %2325
      %2327 = vrot.lane.b32.xlu0 %v2115, 127
      %v2328 = vpop.permute.xlu0 %2327
      %2329 = vrot.lane.b32.xlu0 %v2116, 127
      %v2330 = vpop.permute.xlu0 %2329
      %2331 = vrot.lane.b32.xlu0 %v2117, 127
      %v2332 = vpop.permute.xlu0 %2331
      %vm2333 = vcmp.lt.s32.totalorder %v611, 127
      %v2334 = vsel %vm2333, %v2330, %v2332
      %v2335 = vsel %vm2333, %v2328, %v2330
      %v2336 = vsel %vm2333, %v2326, %v2328
      %v2337 = vsel %vm2333, %v2324, %v2326
      %v2338 = vsel %vm2333, %v2322, %v2324
      %v2339 = vsel %vm2333, %v2320, %v2322
      %v2340 = vsel %vm2333, %v2318, %v2320
      %v2341 = vsel %vm2333, %v2316, %v2318
      %v2342 = vsel %vm2333, %v2314, %v2316
      %v2343 = vsel %vm2333, %v2312, %v2314
      %v2344 = vsel %vm2333, %v2332, %v2312
      %s2345 = scalar_lea.vmem %s6, 2
      %v2346 = vld [vmem:[%s2345] ss:$8 sm:$0xf]
      %v2347 = vld [vmem:[%s2345] ss:$8 sm:$0xf0]
      %v2348 = vor.u32 %v2346, %v2347
      %s2349 = scalar_lea.vmem %s6, 66
      %v2350 = vld [vmem:[%s2349] ss:$8 sm:$0x7]
      %v2353 = vlaneseq
      %v2354 = vshrl.u32 %v2353, 7
      %v2355 = vsub.s32 0, %v2354
      %v2356 = vrot.slane %v2348, %v2355
      %v2357 = vlaneseq
      %v2358 = vshrl.u32 %v2357, 7
      %v2359 = vsub.s32 1, %v2358
      %v2360 = vrot.slane %v2348, %v2359
      %v2361 = vlaneseq
      %v2362 = vshrl.u32 %v2361, 7
      %v2363 = vsub.s32 2, %v2362
      %v2364 = vrot.slane %v2348, %v2363
      %v2365 = vlaneseq
      %v2366 = vshrl.u32 %v2365, 7
      %v2367 = vsub.s32 3, %v2366
      %v2368 = vrot.slane %v2348, %v2367
      %v2369 = vlaneseq
      %v2370 = vshrl.u32 %v2369, 7
      %v2371 = vsub.s32 4, %v2370
      %v2372 = vrot.slane %v2348, %v2371
      %v2373 = vlaneseq
      %v2374 = vshrl.u32 %v2373, 7
      %v2375 = vsub.s32 5, %v2374
      %v2376 = vrot.slane %v2348, %v2375
      %v2377 = vlaneseq
      %v2378 = vshrl.u32 %v2377, 7
      %v2379 = vsub.s32 6, %v2378
      %v2380 = vrot.slane %v2348, %v2379
      %v2381 = vlaneseq
      %v2382 = vshrl.u32 %v2381, 7
      %v2383 = vsub.s32 7, %v2382
      %v2384 = vrot.slane %v2348, %v2383
      %v2385 = vlaneseq
      %v2386 = vshrl.u32 %v2385, 7
      %v2387 = vsub.s32 0, %v2386
      %v2388 = vrot.slane %v2350, %v2387
      %v2389 = vlaneseq
      %v2390 = vshrl.u32 %v2389, 7
      %v2391 = vsub.s32 1, %v2390
      %v2392 = vrot.slane %v2350, %v2391
      %v2393 = vlaneseq
      %v2394 = vshrl.u32 %v2393, 7
      %v2395 = vsub.s32 2, %v2394
      %v2396 = vrot.slane %v2350, %v2395
      %v2408 = vmul.f32 %v2343, %v2356
      %v2409 = vmul.f32 %v2342, %v2360
      %v2410 = vmul.f32 %v2341, %v2364
      %v2411 = vmul.f32 %v2340, %v2368
      %v2412 = vmul.f32 %v2339, %v2372
      %v2413 = vmul.f32 %v2338, %v2376
      %v2414 = vmul.f32 %v2337, %v2380
      %v2415 = vmul.f32 %v2336, %v2384
      %v2416 = vmul.f32 %v2335, %v2388
      %v2417 = vmul.f32 %v2334, %v2392
      %v2418 = vmul.f32 %v2344, %v2396
      %v2419 = vadd.f32 %v2300, %v2408
      %v2420 = vadd.f32 %v2301, %v2409
      %v2421 = vadd.f32 %v2302, %v2410
      %v2422 = vadd.f32 %v2303, %v2411
      %v2423 = vadd.f32 %v2304, %v2412
      %v2424 = vadd.f32 %v2305, %v2413
      %v2425 = vadd.f32 %v2306, %v2414
      %v2426 = vadd.f32 %v2307, %v2415
      %v2427 = vadd.f32 %v2308, %v2416
      %v2428 = vadd.f32 %v2309, %v2417
      %v2429 = vadd.f32 %v2310, %v2418
      %2430 = vrot.lane.b32.xlu0 %v2107, 2
      %v2431 = vpop.permute.xlu0 %2430
      %2432 = vrot.lane.b32.xlu0 %v2108, 2
      %v2433 = vpop.permute.xlu0 %2432
      %2434 = vrot.lane.b32.xlu0 %v2109, 2
      %v2435 = vpop.permute.xlu0 %2434
      %2436 = vrot.lane.b32.xlu0 %v2110, 2
      %v2437 = vpop.permute.xlu0 %2436
      %2438 = vrot.lane.b32.xlu0 %v2111, 2
      %v2439 = vpop.permute.xlu0 %2438
      %2440 = vrot.lane.b32.xlu0 %v2112, 2
      %v2441 = vpop.permute.xlu0 %2440
      %2442 = vrot.lane.b32.xlu0 %v2113, 2
      %v2443 = vpop.permute.xlu0 %2442
      %2444 = vrot.lane.b32.xlu0 %v2114, 2
      %v2445 = vpop.permute.xlu0 %2444
      %2446 = vrot.lane.b32.xlu0 %v2115, 2
      %v2447 = vpop.permute.xlu0 %2446
      %2448 = vrot.lane.b32.xlu0 %v2116, 2
      %v2449 = vpop.permute.xlu0 %2448
      %2450 = vrot.lane.b32.xlu0 %v2117, 2
      %v2451 = vpop.permute.xlu0 %2450
      %vm2452 = vcmp.lt.s32.totalorder %v611, 2
      %v2453 = vsel %vm2452, %v2449, %v2451
      %v2454 = vsel %vm2452, %v2447, %v2449
      %v2455 = vsel %vm2452, %v2445, %v2447
      %v2456 = vsel %vm2452, %v2443, %v2445
      %v2457 = vsel %vm2452, %v2441, %v2443
      %v2458 = vsel %vm2452, %v2439, %v2441
      %v2459 = vsel %vm2452, %v2437, %v2439
      %v2460 = vsel %vm2452, %v2435, %v2437
      %v2461 = vsel %vm2452, %v2433, %v2435
      %v2462 = vsel %vm2452, %v2431, %v2433
      %v2463 = vsel %vm2452, %v2451, %v2431
      %s2464 = scalar_lea.vmem %s6, 5
      %v2465 = vld [vmem:[%s2464] ss:$8 sm:$0xf]
      %v2466 = vld [vmem:[%s2464] ss:$8 sm:$0xf0]
      %v2467 = vor.u32 %v2465, %v2466
      %s2468 = scalar_lea.vmem %s6, 69
      %v2469 = vld [vmem:[%s2468] ss:$8 sm:$0x7]
      %v2472 = vlaneseq
      %v2473 = vshrl.u32 %v2472, 7
      %v2474 = vsub.s32 0, %v2473
      %v2475 = vrot.slane %v2467, %v2474
      %v2476 = vlaneseq
      %v2477 = vshrl.u32 %v2476, 7
      %v2478 = vsub.s32 1, %v2477
      %v2479 = vrot.slane %v2467, %v2478
      %v2480 = vlaneseq
      %v2481 = vshrl.u32 %v2480, 7
      %v2482 = vsub.s32 2, %v2481
      %v2483 = vrot.slane %v2467, %v2482
      %v2484 = vlaneseq
      %v2485 = vshrl.u32 %v2484, 7
      %v2486 = vsub.s32 3, %v2485
      %v2487 = vrot.slane %v2467, %v2486
      %v2488 = vlaneseq
      %v2489 = vshrl.u32 %v2488, 7
      %v2490 = vsub.s32 4, %v2489
      %v2491 = vrot.slane %v2467, %v2490
      %v2492 = vlaneseq
      %v2493 = vshrl.u32 %v2492, 7
      %v2494 = vsub.s32 5, %v2493
      %v2495 = vrot.slane %v2467, %v2494
      %v2496 = vlaneseq
      %v2497 = vshrl.u32 %v2496, 7
      %v2498 = vsub.s32 6, %v2497
      %v2499 = vrot.slane %v2467, %v2498
      %v2500 = vlaneseq
      %v2501 = vshrl.u32 %v2500, 7
      %v2502 = vsub.s32 7, %v2501
      %v2503 = vrot.slane %v2467, %v2502
      %v2504 = vlaneseq
      %v2505 = vshrl.u32 %v2504, 7
      %v2506 = vsub.s32 0, %v2505
      %v2507 = vrot.slane %v2469, %v2506
      %v2508 = vlaneseq
      %v2509 = vshrl.u32 %v2508, 7
      %v2510 = vsub.s32 1, %v2509
      %v2511 = vrot.slane %v2469, %v2510
      %v2512 = vlaneseq
      %v2513 = vshrl.u32 %v2512, 7
      %v2514 = vsub.s32 2, %v2513
      %v2515 = vrot.slane %v2469, %v2514
      %v2527 = vmul.f32 %v2463, %v2475
      %v2528 = vmul.f32 %v2462, %v2479
      %v2529 = vmul.f32 %v2461, %v2483
      %v2530 = vmul.f32 %v2460, %v2487
      %v2531 = vmul.f32 %v2459, %v2491
      %v2532 = vmul.f32 %v2458, %v2495
      %v2533 = vmul.f32 %v2457, %v2499
      %v2534 = vmul.f32 %v2456, %v2503
      %v2535 = vmul.f32 %v2455, %v2507
      %v2536 = vmul.f32 %v2454, %v2511
      %v2537 = vmul.f32 %v2453, %v2515
      %v2538 = vadd.f32 %v2419, %v2527
      %v2539 = vadd.f32 %v2420, %v2528
      %v2540 = vadd.f32 %v2421, %v2529
      %v2541 = vadd.f32 %v2422, %v2530
      %v2542 = vadd.f32 %v2423, %v2531
      %v2543 = vadd.f32 %v2424, %v2532
      %v2544 = vadd.f32 %v2425, %v2533
      %v2545 = vadd.f32 %v2426, %v2534
      %v2546 = vadd.f32 %v2427, %v2535
      %v2547 = vadd.f32 %v2428, %v2536
      %v2548 = vadd.f32 %v2429, %v2537
      %2549 = vrot.lane.b32.xlu0 %v2107, 126
      %v2550 = vpop.permute.xlu0 %2549
      %2551 = vrot.lane.b32.xlu0 %v2108, 126
      %v2552 = vpop.permute.xlu0 %2551
      %2553 = vrot.lane.b32.xlu0 %v2109, 126
      %v2554 = vpop.permute.xlu0 %2553
      %2555 = vrot.lane.b32.xlu0 %v2110, 126
      %v2556 = vpop.permute.xlu0 %2555
      %2557 = vrot.lane.b32.xlu0 %v2111, 126
      %v2558 = vpop.permute.xlu0 %2557
      %2559 = vrot.lane.b32.xlu0 %v2112, 126
      %v2560 = vpop.permute.xlu0 %2559
      %2561 = vrot.lane.b32.xlu0 %v2113, 126
      %v2562 = vpop.permute.xlu0 %2561
      %2563 = vrot.lane.b32.xlu0 %v2114, 126
      %v2564 = vpop.permute.xlu0 %2563
      %2565 = vrot.lane.b32.xlu0 %v2115, 126
      %v2566 = vpop.permute.xlu0 %2565
      %2567 = vrot.lane.b32.xlu0 %v2116, 126
      %v2568 = vpop.permute.xlu0 %2567
      %2569 = vrot.lane.b32.xlu0 %v2117, 126
      %v2570 = vpop.permute.xlu0 %2569
      %vm2571 = vcmp.lt.s32.totalorder %v611, 126
      %v2572 = vsel %vm2571, %v2568, %v2570
      %v2573 = vsel %vm2571, %v2566, %v2568
      %v2574 = vsel %vm2571, %v2564, %v2566
      %v2575 = vsel %vm2571, %v2562, %v2564
      %v2576 = vsel %vm2571, %v2560, %v2562
      %v2577 = vsel %vm2571, %v2558, %v2560
      %v2578 = vsel %vm2571, %v2556, %v2558
      %v2579 = vsel %vm2571, %v2554, %v2556
      %v2580 = vsel %vm2571, %v2552, %v2554
      %v2581 = vsel %vm2571, %v2550, %v2552
      %v2582 = vsel %vm2571, %v2570, %v2550
      %s2583 = scalar_lea.vmem %s6, 1
      %v2584 = vld [vmem:[%s2583] ss:$8 sm:$0xf]
      %v2585 = vld [vmem:[%s2583] ss:$8 sm:$0xf0]
      %v2586 = vor.u32 %v2584, %v2585
      %s2587 = scalar_lea.vmem %s6, 65
      %v2588 = vld [vmem:[%s2587] ss:$8 sm:$0x7]
      %v2591 = vlaneseq
      %v2592 = vshrl.u32 %v2591, 7
      %v2593 = vsub.s32 0, %v2592
      %v2594 = vrot.slane %v2586, %v2593
      %v2595 = vlaneseq
      %v2596 = vshrl.u32 %v2595, 7
      %v2597 = vsub.s32 1, %v2596
      %v2598 = vrot.slane %v2586, %v2597
      %v2599 = vlaneseq
      %v2600 = vshrl.u32 %v2599, 7
      %v2601 = vsub.s32 2, %v2600
      %v2602 = vrot.slane %v2586, %v2601
      %v2603 = vlaneseq
      %v2604 = vshrl.u32 %v2603, 7
      %v2605 = vsub.s32 3, %v2604
      %v2606 = vrot.slane %v2586, %v2605
      %v2607 = vlaneseq
      %v2608 = vshrl.u32 %v2607, 7
      %v2609 = vsub.s32 4, %v2608
      %v2610 = vrot.slane %v2586, %v2609
      %v2611 = vlaneseq
      %v2612 = vshrl.u32 %v2611, 7
      %v2613 = vsub.s32 5, %v2612
      %v2614 = vrot.slane %v2586, %v2613
      %v2615 = vlaneseq
      %v2616 = vshrl.u32 %v2615, 7
      %v2617 = vsub.s32 6, %v2616
      %v2618 = vrot.slane %v2586, %v2617
      %v2619 = vlaneseq
      %v2620 = vshrl.u32 %v2619, 7
      %v2621 = vsub.s32 7, %v2620
      %v2622 = vrot.slane %v2586, %v2621
      %v2623 = vlaneseq
      %v2624 = vshrl.u32 %v2623, 7
      %v2625 = vsub.s32 0, %v2624
      %v2626 = vrot.slane %v2588, %v2625
      %v2627 = vlaneseq
      %v2628 = vshrl.u32 %v2627, 7
      %v2629 = vsub.s32 1, %v2628
      %v2630 = vrot.slane %v2588, %v2629
      %v2631 = vlaneseq
      %v2632 = vshrl.u32 %v2631, 7
      %v2633 = vsub.s32 2, %v2632
      %v2634 = vrot.slane %v2588, %v2633
      %v2646 = vmul.f32 %v2581, %v2594
      %v2647 = vmul.f32 %v2580, %v2598
      %v2648 = vmul.f32 %v2579, %v2602
      %v2649 = vmul.f32 %v2578, %v2606
      %v2650 = vmul.f32 %v2577, %v2610
      %v2651 = vmul.f32 %v2576, %v2614
      %v2652 = vmul.f32 %v2575, %v2618
      %v2653 = vmul.f32 %v2574, %v2622
      %v2654 = vmul.f32 %v2573, %v2626
      %v2655 = vmul.f32 %v2572, %v2630
      %v2656 = vmul.f32 %v2582, %v2634
      %v2657 = vadd.f32 %v2538, %v2646
      %v2658 = vadd.f32 %v2539, %v2647
      %v2659 = vadd.f32 %v2540, %v2648
      %v2660 = vadd.f32 %v2541, %v2649
      %v2661 = vadd.f32 %v2542, %v2650
      %v2662 = vadd.f32 %v2543, %v2651
      %v2663 = vadd.f32 %v2544, %v2652
      %v2664 = vadd.f32 %v2545, %v2653
      %v2665 = vadd.f32 %v2546, %v2654
      %v2666 = vadd.f32 %v2547, %v2655
      %v2667 = vadd.f32 %v2548, %v2656
      %2668 = vrot.lane.b32.xlu0 %v2107, 3
      %v2669 = vpop.permute.xlu0 %2668
      %2670 = vrot.lane.b32.xlu0 %v2108, 3
      %v2671 = vpop.permute.xlu0 %2670
      %2672 = vrot.lane.b32.xlu0 %v2109, 3
      %v2673 = vpop.permute.xlu0 %2672
      %2674 = vrot.lane.b32.xlu0 %v2110, 3
      %v2675 = vpop.permute.xlu0 %2674
      %2676 = vrot.lane.b32.xlu0 %v2111, 3
      %v2677 = vpop.permute.xlu0 %2676
      %2678 = vrot.lane.b32.xlu0 %v2112, 3
      %v2679 = vpop.permute.xlu0 %2678
      %2680 = vrot.lane.b32.xlu0 %v2113, 3
      %v2681 = vpop.permute.xlu0 %2680
      %2682 = vrot.lane.b32.xlu0 %v2114, 3
      %v2683 = vpop.permute.xlu0 %2682
      %2684 = vrot.lane.b32.xlu0 %v2115, 3
      %v2685 = vpop.permute.xlu0 %2684
      %2686 = vrot.lane.b32.xlu0 %v2116, 3
      %v2687 = vpop.permute.xlu0 %2686
      %2688 = vrot.lane.b32.xlu0 %v2117, 3
      %v2689 = vpop.permute.xlu0 %2688
      %vm2690 = vcmp.lt.s32.totalorder %v611, 3
      %v2691 = vsel %vm2690, %v2687, %v2689
      %v2692 = vsel %vm2690, %v2685, %v2687
      %v2693 = vsel %vm2690, %v2683, %v2685
      %v2694 = vsel %vm2690, %v2681, %v2683
      %v2695 = vsel %vm2690, %v2679, %v2681
      %v2696 = vsel %vm2690, %v2677, %v2679
      %v2697 = vsel %vm2690, %v2675, %v2677
      %v2698 = vsel %vm2690, %v2673, %v2675
      %v2699 = vsel %vm2690, %v2671, %v2673
      %v2700 = vsel %vm2690, %v2669, %v2671
      %v2701 = vsel %vm2690, %v2689, %v2669
      %s2702 = scalar_lea.vmem %s6, 6
      %v2703 = vld [vmem:[%s2702] ss:$8 sm:$0xf]
      %v2704 = vld [vmem:[%s2702] ss:$8 sm:$0xf0]
      %v2705 = vor.u32 %v2703, %v2704
      %s2706 = scalar_lea.vmem %s6, 70
      %v2707 = vld [vmem:[%s2706] ss:$8 sm:$0x7]
      %v2710 = vlaneseq
      %v2711 = vshrl.u32 %v2710, 7
      %v2712 = vsub.s32 0, %v2711
      %v2713 = vrot.slane %v2705, %v2712
      %v2714 = vlaneseq
      %v2715 = vshrl.u32 %v2714, 7
      %v2716 = vsub.s32 1, %v2715
      %v2717 = vrot.slane %v2705, %v2716
      %v2718 = vlaneseq
      %v2719 = vshrl.u32 %v2718, 7
      %v2720 = vsub.s32 2, %v2719
      %v2721 = vrot.slane %v2705, %v2720
      %v2722 = vlaneseq
      %v2723 = vshrl.u32 %v2722, 7
      %v2724 = vsub.s32 3, %v2723
      %v2725 = vrot.slane %v2705, %v2724
      %v2726 = vlaneseq
      %v2727 = vshrl.u32 %v2726, 7
      %v2728 = vsub.s32 4, %v2727
      %v2729 = vrot.slane %v2705, %v2728
      %v2730 = vlaneseq
      %v2731 = vshrl.u32 %v2730, 7
      %v2732 = vsub.s32 5, %v2731
      %v2733 = vrot.slane %v2705, %v2732
      %v2734 = vlaneseq
      %v2735 = vshrl.u32 %v2734, 7
      %v2736 = vsub.s32 6, %v2735
      %v2737 = vrot.slane %v2705, %v2736
      %v2738 = vlaneseq
      %v2739 = vshrl.u32 %v2738, 7
      %v2740 = vsub.s32 7, %v2739
      %v2741 = vrot.slane %v2705, %v2740
      %v2742 = vlaneseq
      %v2743 = vshrl.u32 %v2742, 7
      %v2744 = vsub.s32 0, %v2743
      %v2745 = vrot.slane %v2707, %v2744
      %v2746 = vlaneseq
      %v2747 = vshrl.u32 %v2746, 7
      %v2748 = vsub.s32 1, %v2747
      %v2749 = vrot.slane %v2707, %v2748
      %v2750 = vlaneseq
      %v2751 = vshrl.u32 %v2750, 7
      %v2752 = vsub.s32 2, %v2751
      %v2753 = vrot.slane %v2707, %v2752
      %v2765 = vmul.f32 %v2701, %v2713
      %v2766 = vmul.f32 %v2700, %v2717
      %v2767 = vmul.f32 %v2699, %v2721
      %v2768 = vmul.f32 %v2698, %v2725
      %v2769 = vmul.f32 %v2697, %v2729
      %v2770 = vmul.f32 %v2696, %v2733
      %v2771 = vmul.f32 %v2695, %v2737
      %v2772 = vmul.f32 %v2694, %v2741
      %v2773 = vmul.f32 %v2693, %v2745
      %v2774 = vmul.f32 %v2692, %v2749
      %v2775 = vmul.f32 %v2691, %v2753
      %v2776 = vadd.f32 %v2657, %v2765
      %v2777 = vadd.f32 %v2658, %v2766
      %v2778 = vadd.f32 %v2659, %v2767
      %v2779 = vadd.f32 %v2660, %v2768
      %v2780 = vadd.f32 %v2661, %v2769
      %v2781 = vadd.f32 %v2662, %v2770
      %v2782 = vadd.f32 %v2663, %v2771
      %v2783 = vadd.f32 %v2664, %v2772
      %v2784 = vadd.f32 %v2665, %v2773
      %v2785 = vadd.f32 %v2666, %v2774
      %v2786 = vadd.f32 %v2667, %v2775
      %2787 = vrot.lane.b32.xlu0 %v2107, 125
      %v2788 = vpop.permute.xlu0 %2787
      %2789 = vrot.lane.b32.xlu0 %v2108, 125
      %v2790 = vpop.permute.xlu0 %2789
      %2791 = vrot.lane.b32.xlu0 %v2109, 125
      %v2792 = vpop.permute.xlu0 %2791
      %2793 = vrot.lane.b32.xlu0 %v2110, 125
      %v2794 = vpop.permute.xlu0 %2793
      %2795 = vrot.lane.b32.xlu0 %v2111, 125
      %v2796 = vpop.permute.xlu0 %2795
      %2797 = vrot.lane.b32.xlu0 %v2112, 125
      %v2798 = vpop.permute.xlu0 %2797
      %2799 = vrot.lane.b32.xlu0 %v2113, 125
      %v2800 = vpop.permute.xlu0 %2799
      %2801 = vrot.lane.b32.xlu0 %v2114, 125
      %v2802 = vpop.permute.xlu0 %2801
      %2803 = vrot.lane.b32.xlu0 %v2115, 125
      %v2804 = vpop.permute.xlu0 %2803
      %2805 = vrot.lane.b32.xlu0 %v2116, 125
      %v2806 = vpop.permute.xlu0 %2805
      %2807 = vrot.lane.b32.xlu0 %v2117, 125
      %v2808 = vpop.permute.xlu0 %2807
      %vm2809 = vcmp.lt.s32.totalorder %v611, 125
      %v2810 = vsel %vm2809, %v2806, %v2808
      %v2811 = vsel %vm2809, %v2804, %v2806
      %v2812 = vsel %vm2809, %v2802, %v2804
      %v2813 = vsel %vm2809, %v2800, %v2802
      %v2814 = vsel %vm2809, %v2798, %v2800
      %v2815 = vsel %vm2809, %v2796, %v2798
      %v2816 = vsel %vm2809, %v2794, %v2796
      %v2817 = vsel %vm2809, %v2792, %v2794
      %v2818 = vsel %vm2809, %v2790, %v2792
      %v2819 = vsel %vm2809, %v2788, %v2790
      %v2820 = vsel %vm2809, %v2808, %v2788
      %v2821 = vld [vmem:[%s6] ss:$8 sm:$0xf]
      %v2822 = vld [vmem:[%s6] ss:$8 sm:$0xf0]
      %v2823 = vor.u32 %v2821, %v2822
      %s2824 = scalar_lea.vmem %s6, 64
      %v2825 = vld [vmem:[%s2824] ss:$8 sm:$0x7]
      %v2828 = vlaneseq
      %v2829 = vshrl.u32 %v2828, 7
      %v2830 = vsub.s32 0, %v2829
      %v2831 = vrot.slane %v2823, %v2830
      %v2832 = vlaneseq
      %v2833 = vshrl.u32 %v2832, 7
      %v2834 = vsub.s32 1, %v2833
      %v2835 = vrot.slane %v2823, %v2834
      %v2836 = vlaneseq
      %v2837 = vshrl.u32 %v2836, 7
      %v2838 = vsub.s32 2, %v2837
      %v2839 = vrot.slane %v2823, %v2838
      %v2840 = vlaneseq
      %v2841 = vshrl.u32 %v2840, 7
      %v2842 = vsub.s32 3, %v2841
      %v2843 = vrot.slane %v2823, %v2842
      %v2844 = vlaneseq
      %v2845 = vshrl.u32 %v2844, 7
      %v2846 = vsub.s32 4, %v2845
      %v2847 = vrot.slane %v2823, %v2846
      %v2848 = vlaneseq
      %v2849 = vshrl.u32 %v2848, 7
      %v2850 = vsub.s32 5, %v2849
      %v2851 = vrot.slane %v2823, %v2850
      %v2852 = vlaneseq
      %v2853 = vshrl.u32 %v2852, 7
      %v2854 = vsub.s32 6, %v2853
      %v2855 = vrot.slane %v2823, %v2854
      %v2856 = vlaneseq
      %v2857 = vshrl.u32 %v2856, 7
      %v2858 = vsub.s32 7, %v2857
      %v2859 = vrot.slane %v2823, %v2858
      %v2860 = vlaneseq
      %v2861 = vshrl.u32 %v2860, 7
      %v2862 = vsub.s32 0, %v2861
      %v2863 = vrot.slane %v2825, %v2862
      %v2864 = vlaneseq
      %v2865 = vshrl.u32 %v2864, 7
      %v2866 = vsub.s32 1, %v2865
      %v2867 = vrot.slane %v2825, %v2866
      %v2868 = vlaneseq
      %v2869 = vshrl.u32 %v2868, 7
      %v2870 = vsub.s32 2, %v2869
      %v2871 = vrot.slane %v2825, %v2870
      %v2883 = vmul.f32 %v2819, %v2831
      %v2884 = vmul.f32 %v2818, %v2835
      %v2885 = vmul.f32 %v2817, %v2839
      %v2886 = vmul.f32 %v2816, %v2843
      %v2887 = vmul.f32 %v2815, %v2847
      %v2888 = vmul.f32 %v2814, %v2851
      %v2889 = vmul.f32 %v2813, %v2855
      %v2890 = vmul.f32 %v2812, %v2859
      %v2891 = vmul.f32 %v2811, %v2863
      %v2892 = vmul.f32 %v2810, %v2867
      %v2893 = vmul.f32 %v2820, %v2871
      %v2894 = vadd.f32 %v2776, %v2883
      %v2895 = vadd.f32 %v2777, %v2884
      %v2896 = vadd.f32 %v2778, %v2885
      %v2897 = vadd.f32 %v2779, %v2886
      %v2898 = vadd.f32 %v2780, %v2887
      %v2899 = vadd.f32 %v2781, %v2888
      %v2900 = vadd.f32 %v2782, %v2889
      %v2901 = vadd.f32 %v2783, %v2890
      %v2902 = vadd.f32 %v2784, %v2891
      %v2903 = vadd.f32 %v2785, %v2892
      %v2904 = vadd.f32 %v2786, %v2893
      %2905 = vst [vmem:[%s313] sm:$0xff] %v2894
      %2906 = vst [vmem:[%s313 + $0x8] sm:$0xff] %v2895
      %2907 = vst [vmem:[%s313 + $0x10] sm:$0xff] %v2896
      %2908 = vst [vmem:[%s313 + $0x18] sm:$0xff] %v2897
      %2909 = vst [vmem:[%s313 + $0x20] sm:$0xff] %v2898
      %2910 = vst [vmem:[%s313 + $0x28] sm:$0xff] %v2899
      %2911 = vst [vmem:[%s313 + $0x30] sm:$0xff] %v2900
      %2912 = vst [vmem:[%s313 + $0x38] sm:$0xff] %v2901
      %2913 = vst [vmem:[%s313 + $0x40] sm:$0xff] %v2902
      %2914 = vst [vmem:[%s313 + $0x48] sm:$0xff] %v2903
      %2915 = vst [vmem:[%s313 + $0x50] sm:$0xff] %v2904
      %v2916 = vld [vmem:[%s3] sm:$0xff]
      %v2917 = vld [vmem:[%s3 + $0x8] sm:$0x7]
      %v2920 = vlaneseq
      %v2921 = vshrl.u32 %v2920, 7
      %v2922 = vsub.s32 0, %v2921
      %v2923 = vrot.slane %v2916, %v2922
      %v2924 = vlaneseq
      %v2925 = vshrl.u32 %v2924, 7
      %v2926 = vsub.s32 1, %v2925
      %v2927 = vrot.slane %v2916, %v2926
      %v2928 = vlaneseq
      %v2929 = vshrl.u32 %v2928, 7
      %v2930 = vsub.s32 2, %v2929
      %v2931 = vrot.slane %v2916, %v2930
      %v2932 = vlaneseq
      %v2933 = vshrl.u32 %v2932, 7
      %v2934 = vsub.s32 3, %v2933
      %v2935 = vrot.slane %v2916, %v2934
      %v2936 = vlaneseq
      %v2937 = vshrl.u32 %v2936, 7
      %v2938 = vsub.s32 4, %v2937
      %v2939 = vrot.slane %v2916, %v2938
      %v2940 = vlaneseq
      %v2941 = vshrl.u32 %v2940, 7
      %v2942 = vsub.s32 5, %v2941
      %v2943 = vrot.slane %v2916, %v2942
      %v2944 = vlaneseq
      %v2945 = vshrl.u32 %v2944, 7
      %v2946 = vsub.s32 6, %v2945
      %v2947 = vrot.slane %v2916, %v2946
      %v2948 = vlaneseq
      %v2949 = vshrl.u32 %v2948, 7
      %v2950 = vsub.s32 7, %v2949
      %v2951 = vrot.slane %v2916, %v2950
      %v2952 = vlaneseq
      %v2953 = vshrl.u32 %v2952, 7
      %v2954 = vsub.s32 0, %v2953
      %v2955 = vrot.slane %v2917, %v2954
      %v2956 = vlaneseq
      %v2957 = vshrl.u32 %v2956, 7
      %v2958 = vsub.s32 1, %v2957
      %v2959 = vrot.slane %v2917, %v2958
      %v2960 = vlaneseq
      %v2961 = vshrl.u32 %v2960, 7
      %v2962 = vsub.s32 2, %v2961
      %v2963 = vrot.slane %v2917, %v2962
      %v2975 = vmul.f32 %v2894, %v2923
      %v2976 = vmul.f32 %v2895, %v2927
      %v2977 = vmul.f32 %v2896, %v2931
      %v2978 = vmul.f32 %v2897, %v2935
      %v2979 = vmul.f32 %v2898, %v2939
      %v2980 = vmul.f32 %v2899, %v2943
      %v2981 = vmul.f32 %v2900, %v2947
      %v2982 = vmul.f32 %v2901, %v2951
      %v2983 = vmul.f32 %v2902, %v2955
      %v2984 = vmul.f32 %v2903, %v2959
      %v2985 = vmul.f32 %v2904, %v2963
      %v2986 = vrot.slane %v2975, 4
      %v2987 = vadd.f32 %v2975, %v2986
      %v2988 = vrot.slane %v2987, 2
      %v2989 = vadd.f32 %v2987, %v2988
      %v2990 = vrot.slane %v2989, 1
      %v2991 = vadd.f32 %v2989, %v2990
      %v2992 = vrot.slane %v2976, 4
      %v2993 = vadd.f32 %v2976, %v2992
      %v2994 = vrot.slane %v2993, 2
      %v2995 = vadd.f32 %v2993, %v2994
      %v2996 = vrot.slane %v2995, 1
      %v2997 = vadd.f32 %v2995, %v2996
      %v2998 = vrot.slane %v2977, 4
      %v2999 = vadd.f32 %v2977, %v2998
      %v3000 = vrot.slane %v2999, 2
      %v3001 = vadd.f32 %v2999, %v3000
      %v3002 = vrot.slane %v3001, 1
      %v3003 = vadd.f32 %v3001, %v3002
      %v3004 = vrot.slane %v2978, 4
      %v3005 = vadd.f32 %v2978, %v3004
      %v3006 = vrot.slane %v3005, 2
      %v3007 = vadd.f32 %v3005, %v3006
      %v3008 = vrot.slane %v3007, 1
      %v3009 = vadd.f32 %v3007, %v3008
      %v3010 = vrot.slane %v2979, 4
      %v3011 = vadd.f32 %v2979, %v3010
      %v3012 = vrot.slane %v3011, 2
      %v3013 = vadd.f32 %v3011, %v3012
      %v3014 = vrot.slane %v3013, 1
      %v3015 = vadd.f32 %v3013, %v3014
      %v3016 = vrot.slane %v2980, 4
      %v3017 = vadd.f32 %v2980, %v3016
      %v3018 = vrot.slane %v3017, 2
      %v3019 = vadd.f32 %v3017, %v3018
      %v3020 = vrot.slane %v3019, 1
      %v3021 = vadd.f32 %v3019, %v3020
      %v3022 = vrot.slane %v2981, 4
      %v3023 = vadd.f32 %v2981, %v3022
      %v3024 = vrot.slane %v3023, 2
      %v3025 = vadd.f32 %v3023, %v3024
      %v3026 = vrot.slane %v3025, 1
      %v3027 = vadd.f32 %v3025, %v3026
      %v3028 = vrot.slane %v2982, 4
      %v3029 = vadd.f32 %v2982, %v3028
      %v3030 = vrot.slane %v3029, 2
      %v3031 = vadd.f32 %v3029, %v3030
      %v3032 = vrot.slane %v3031, 1
      %v3033 = vadd.f32 %v3031, %v3032
      %v3034 = vrot.slane %v2983, 4
      %v3035 = vadd.f32 %v2983, %v3034
      %v3036 = vrot.slane %v3035, 2
      %v3037 = vadd.f32 %v3035, %v3036
      %v3038 = vrot.slane %v3037, 1
      %v3039 = vadd.f32 %v3037, %v3038
      %v3040 = vrot.slane %v2984, 4
      %v3041 = vadd.f32 %v2984, %v3040
      %v3042 = vrot.slane %v3041, 2
      %v3043 = vadd.f32 %v3041, %v3042
      %v3044 = vrot.slane %v3043, 1
      %v3045 = vadd.f32 %v3043, %v3044
      %v3046 = vrot.slane %v2985, 4
      %v3047 = vadd.f32 %v2985, %v3046
      %v3048 = vrot.slane %v3047, 2
      %v3049 = vadd.f32 %v3047, %v3048
      %v3050 = vrot.slane %v3049, 1
      %v3051 = vadd.f32 %v3049, %v3050
      %v3052 = vadd.f32 %v2991, 0.0
      %v3053 = vadd.f32 %v2997, 0.0
      %v3054 = vadd.f32 %v3003, 0.0
      %v3055 = vadd.f32 %v3009, 0.0
      %v3056 = vadd.f32 %v3015, 0.0
      %v3057 = vadd.f32 %v3021, 0.0
      %v3058 = vadd.f32 %v3027, 0.0
      %v3059 = vadd.f32 %v3033, 0.0
      %v3060 = vadd.f32 %v3039, 0.0
      %v3061 = vadd.f32 %v3045, 0.0
      %v3062 = vadd.f32 %v3051, 0.0
      %v3063 = vmul.f32 %v2894, %v2975
      %v3064 = vmul.f32 %v2895, %v2976
      %v3065 = vmul.f32 %v2896, %v2977
      %v3066 = vmul.f32 %v2897, %v2978
      %v3067 = vmul.f32 %v2898, %v2979
      %v3068 = vmul.f32 %v2899, %v2980
      %v3069 = vmul.f32 %v2900, %v2981
      %v3070 = vmul.f32 %v2901, %v2982
      %v3071 = vmul.f32 %v2902, %v2983
      %v3072 = vmul.f32 %v2903, %v2984
      %v3073 = vmul.f32 %v2904, %v2985
      %v3074 = vrot.slane %v3063, 4
      %v3075 = vadd.f32 %v3063, %v3074
      %v3076 = vrot.slane %v3075, 2
      %v3077 = vadd.f32 %v3075, %v3076
      %v3078 = vrot.slane %v3077, 1
      %v3079 = vadd.f32 %v3077, %v3078
      %v3080 = vrot.slane %v3064, 4
      %v3081 = vadd.f32 %v3064, %v3080
      %v3082 = vrot.slane %v3081, 2
      %v3083 = vadd.f32 %v3081, %v3082
      %v3084 = vrot.slane %v3083, 1
      %v3085 = vadd.f32 %v3083, %v3084
      %v3086 = vrot.slane %v3065, 4
      %v3087 = vadd.f32 %v3065, %v3086
      %v3088 = vrot.slane %v3087, 2
      %v3089 = vadd.f32 %v3087, %v3088
      %v3090 = vrot.slane %v3089, 1
      %v3091 = vadd.f32 %v3089, %v3090
      %v3092 = vrot.slane %v3066, 4
      %v3093 = vadd.f32 %v3066, %v3092
      %v3094 = vrot.slane %v3093, 2
      %v3095 = vadd.f32 %v3093, %v3094
      %v3096 = vrot.slane %v3095, 1
      %v3097 = vadd.f32 %v3095, %v3096
      %v3098 = vrot.slane %v3067, 4
      %v3099 = vadd.f32 %v3067, %v3098
      %v3100 = vrot.slane %v3099, 2
      %v3101 = vadd.f32 %v3099, %v3100
      %v3102 = vrot.slane %v3101, 1
      %v3103 = vadd.f32 %v3101, %v3102
      %v3104 = vrot.slane %v3068, 4
      %v3105 = vadd.f32 %v3068, %v3104
      %v3106 = vrot.slane %v3105, 2
      %v3107 = vadd.f32 %v3105, %v3106
      %v3108 = vrot.slane %v3107, 1
      %v3109 = vadd.f32 %v3107, %v3108
      %v3110 = vrot.slane %v3069, 4
      %v3111 = vadd.f32 %v3069, %v3110
      %v3112 = vrot.slane %v3111, 2
      %v3113 = vadd.f32 %v3111, %v3112
      %v3114 = vrot.slane %v3113, 1
      %v3115 = vadd.f32 %v3113, %v3114
      %v3116 = vrot.slane %v3070, 4
      %v3117 = vadd.f32 %v3070, %v3116
      %v3118 = vrot.slane %v3117, 2
      %v3119 = vadd.f32 %v3117, %v3118
      %v3120 = vrot.slane %v3119, 1
      %v3121 = vadd.f32 %v3119, %v3120
      %v3122 = vrot.slane %v3071, 4
      %v3123 = vadd.f32 %v3071, %v3122
      %v3124 = vrot.slane %v3123, 2
      %v3125 = vadd.f32 %v3123, %v3124
      %v3126 = vrot.slane %v3125, 1
      %v3127 = vadd.f32 %v3125, %v3126
      %v3128 = vrot.slane %v3072, 4
      %v3129 = vadd.f32 %v3072, %v3128
      %v3130 = vrot.slane %v3129, 2
      %v3131 = vadd.f32 %v3129, %v3130
      %v3132 = vrot.slane %v3131, 1
      %v3133 = vadd.f32 %v3131, %v3132
      %v3134 = vrot.slane %v3073, 4
      %v3135 = vadd.f32 %v3073, %v3134
      %v3136 = vrot.slane %v3135, 2
      %v3137 = vadd.f32 %v3135, %v3136
      %v3138 = vrot.slane %v3137, 1
      %v3139 = vadd.f32 %v3137, %v3138
      %v3140 = vadd.f32 %v3079, 0.0
      %v3141 = vadd.f32 %v3085, 0.0
      %v3142 = vadd.f32 %v3091, 0.0
      %v3143 = vadd.f32 %v3097, 0.0
      %v3144 = vadd.f32 %v3103, 0.0
      %v3145 = vadd.f32 %v3109, 0.0
      %v3146 = vadd.f32 %v3115, 0.0
      %v3147 = vadd.f32 %v3121, 0.0
      %v3148 = vadd.f32 %v3127, 0.0
      %v3149 = vadd.f32 %v3133, 0.0
      %v3150 = vadd.f32 %v3139, 0.0
      %vm3151 = vcmask 1040384
      %v3152 = vsel %vm3151, %v3052, %v3140
      %v3153 = vsel %vm3151, %v3053, %v3141
      %v3154 = vsel %vm3151, %v3054, %v3142
      %v3155 = vsel %vm3151, %v3055, %v3143
      %v3156 = vsel %vm3151, %v3056, %v3144
      %v3157 = vsel %vm3151, %v3057, %v3145
      %v3158 = vsel %vm3151, %v3058, %v3146
      %v3159 = vsel %vm3151, %v3059, %v3147
      %v3160 = vsel %vm3151, %v3060, %v3148
      %v3161 = vsel %vm3151, %v3061, %v3149
      %v3162 = vsel %vm3151, %v3062, %v3150
      %v3174 = vcombine.low %v3152, %v3153
      %v3175 = vcombine.low %v3154, %v3155
      %v3177 = vunpack.c.l.s4 1983009808
      %v3178 = vunpack.c.0.s8 %v3177
      %v3179 = vlaneseq
      %v3180 = vshrl.u32 %v3179, 7
      %v3181 = vsub.s32 %v3178, %v3180
      %v3182 = vrot.slane %v3174, %v3181
      %v3184 = vunpack.c.l.s4 1983009808
      %v3185 = vunpack.c.0.s8 %v3184
      %v3186 = vlaneseq
      %v3187 = vshrl.u32 %v3186, 7
      %v3188 = vsub.s32 %v3185, %v3187
      %v3189 = vrot.slane %v3175, %v3188
      %v3190 = vcombine.low %v3182, %v3189
      %v3191 = vcombine.low %v3156, %v3157
      %v3192 = vcombine.low %v3158, %v3159
      %v3194 = vunpack.c.l.s4 1983009808
      %v3195 = vunpack.c.0.s8 %v3194
      %v3196 = vlaneseq
      %v3197 = vshrl.u32 %v3196, 7
      %v3198 = vsub.s32 %v3195, %v3197
      %v3199 = vrot.slane %v3191, %v3198
      %v3201 = vunpack.c.l.s4 1983009808
      %v3202 = vunpack.c.0.s8 %v3201
      %v3203 = vlaneseq
      %v3204 = vshrl.u32 %v3203, 7
      %v3205 = vsub.s32 %v3202, %v3204
      %v3206 = vrot.slane %v3192, %v3205
      %v3207 = vcombine.low %v3199, %v3206
      %v3208 = vcombine.low %v3160, %v3161
      %v3210 = vunpack.c.l.s4 1983009808
      %v3211 = vunpack.c.0.s8 %v3210
      %v3212 = vlaneseq
      %v3213 = vshrl.u32 %v3212, 7
      %v3214 = vsub.s32 %v3211, %v3213
      %v3215 = vrot.slane %v3208, %v3214
      %v3217 = vunpack.c.l.s4 1983009808
      %v3218 = vunpack.c.0.s8 %v3217
      %v3219 = vlaneseq
      %v3220 = vshrl.u32 %v3219, 7
      %v3221 = vsub.s32 %v3218, %v3220
      %v3222 = vrot.slane %v3162, %v3221
      %v3223 = vcombine.low %v3215, %v3222
      %3227 = vst [vmem:[%s318] sm:$0xff] %v3190
      %3228 = vst [vmem:[%s318 + $0x8] sm:$0xff] %v3207
      %3229 = vst [vmem:[%s318 + $0x10] sm:$0x3f] %v3223
      %p3230 = scmp.lt.s32.totalorder %s20, 1
      %s3231 = scalar_select %p3230, %s20, 1
      %s3232 = smul.addr %s3231, 11
      %s3233 = smul.addr %s3232, 8
      %s3234 = scalar_lea.vmem %s7, %s3233
      %p3235 = scmp.lt.s32.totalorder %s20, 1
      %s3236 = scalar_select %p3235, %s20, 1
      %s3237 = smul.addr %s3236, 11
      %s3238 = smul.addr %s3237, 2
      %s3239 = scalar_lea.vmem %s8, %s3238
      // Predicated region
      $region49: #{leaky_sep_conv_forward.2} parent=47 // pred_check
        %p3240 = pneg %p190
      $region50: #{leaky_sep_conv_forward.2} parent=47 // pred_check_branch
        %3242 = sbr.rel (%p3240) target = $region52
      $region51: #{leaky_sep_conv_forward.2} parent=47 // pred_region
        _
      $region52: #{leaky_sep_conv_forward.2} parent=47 // pred_fallthru
        _
      // Predicated region
      $region53: #{leaky_sep_conv_forward.2} parent=47 // pred_check
        %p3243 = pneg %p216
      $region54: #{leaky_sep_conv_forward.2} parent=47 // pred_check_branch
        %3245 = sbr.rel (%p3243) target = $region56
      $region55: #{leaky_sep_conv_forward.2} parent=47 // pred_region
        _
      $region56: #{leaky_sep_conv_forward.2} parent=47 // pred_fallthru
        _
    $region48: #{leaky_sep_conv_forward.2} parent=5 // pred_fallthru
      _
    %p3246 = scmp.le.s32.totalorder 2, %s15
    // Predicated region
    $region57: #{leaky_sep_conv_forward.2} parent=5 // pred_check
      %p3247 = pneg %p3246
    $region58: #{leaky_sep_conv_forward.2} parent=5 // pred_check_branch
      %3249 = sbr.rel (%p3247) target = $region60
    $region59: #{leaky_sep_conv_forward.2} parent=5 // pred_region
      %s3250 = ssub.s32 %s15, 2
      // Predicated region
      $region61: #{leaky_sep_conv_forward.2} parent=59 // pred_check
        %p3251 = pneg %p196
      $region62: #{leaky_sep_conv_forward.2} parent=59 // pred_check_branch
        %3253 = sbr.rel (%p3251) target = $region64
      $region63: #{leaky_sep_conv_forward.2} parent=59 // pred_region
        %p3254 = scmp.lt.s32.totalorder %s21, 1
        %s3255 = scalar_select %p3254, %s21, 1
        %s3256 = smul.addr %s3255, 11
        %s3257 = smul.addr %s3256, 8
        %s3258 = scalar_lea.vmem %s7, %s3257
      $region64: #{leaky_sep_conv_forward.2} parent=59 // pred_fallthru
        _
      // Predicated region
      $region65: #{leaky_sep_conv_forward.2} parent=59 // pred_check
        %p3259 = pneg %p222
      $region66: #{leaky_sep_conv_forward.2} parent=59 // pred_check_branch
        %3261 = sbr.rel (%p3259) target = $region68
      $region67: #{leaky_sep_conv_forward.2} parent=59 // pred_region
        %p3262 = scmp.lt.s32.totalorder %s21, 1
        %s3263 = scalar_select %p3262, %s21, 1
        %s3264 = smul.addr %s3263, 11
        %s3265 = smul.addr %s3264, 2
        %s3266 = scalar_lea.vmem %s8, %s3265
      $region68: #{leaky_sep_conv_forward.2} parent=59 // pred_fallthru
        _
    $region60: #{leaky_sep_conv_forward.2} parent=5 // pred_fallthru
      _
  $region6: #{leaky_sep_conv_forward.2} parent=0 // loop_footer
    %s19 = sadd.s32 1, %s15
  $region7: #{leaky_sep_conv_forward.2} parent=0 // loop_footer_branch
    %14 = sbr.rel target = $region3
  $region8: #{leaky_sep_conv_forward.2} parent=0 // loop_exit
    _

</llo_original>
